<compile_context>
chip_gen: v7x
topology: tpu7x:2x2x1
jax: 0.10.0
libtpu: 0.0.40
codegen_flags: <defaults>
</compile_context>

<pallas_src>
import functools

import jax
import jax.numpy as jnp
from jax.experimental import pallas as pl
from jax.experimental.pallas import tpu as pltpu

EPS = 1e-5


def _vmem():
    return pl.BlockSpec(memory_space=pltpu.MemorySpace.VMEM)


# ---------------------------------------------------------------------------
# In-kernel helpers (traced inline inside the fused kernel)
# ---------------------------------------------------------------------------
def _stage_padded(pad_ref, act, ho):
    """Stage activation rows into an h-zero-padded bf16 VMEM slab.

    Only the two padding rows are zeroed (not the whole slab)."""
    zrow = jnp.zeros((1, pad_ref.shape[1]), pad_ref.dtype)
    pad_ref[0:1, :] = zrow
    pad_ref[ho + 1:ho + 2, :] = zrow
    pad_ref[1:1 + ho, :] = act.astype(pad_ref.dtype)


def _conv_bn_relu(pad_ref, wb_ref, g_ref, bt_ref, r_ref, rt_ref, ho, n_cnt):
    """3x3 conv (3 banded MXU matmuls -> one f32 acc) -> training BN -> ReLU.

    Lanes are packed (n, wo, c); the w-taps / w zero-padding / batch
    block-diagonal structure are all folded into the banded weights, so each
    row tap dh is one matmul over a contiguous slice of the padded slab."""
    acc = None
    for dh in range(3):                                   # static row taps
        part = jnp.dot(pad_ref[dh:dh + ho, :], wb_ref[dh],
                       preferred_element_type=jnp.float32)
        acc = part if acc is None else acc + part         # (Ho, N*Wo*Co), f32

    # BatchNorm2d (batch stats over N,H,W; biased variance).
    # Stack [sum, sum of squares] -> one (2,L)@(L,C) matmul -> mean / E[x^2].
    s = jnp.concatenate([jnp.sum(acc, axis=0, keepdims=True),
                         jnp.sum(acc * acc, axis=0, keepdims=True)], axis=0)
    stats = jnp.dot(s, r_ref[...], preferred_element_type=jnp.float32,
                    precision=jax.lax.Precision.HIGHEST) * (1.0 / n_cnt)
    mean = stats[0:1, :]                                  # (1, C)
    # E[x^2]-mean^2: possible cancellation for large-mean activations;
    # acceptable at the validation tolerance used here.
    var = stats[1:2, :] - mean * mean
    scale = g_ref[...] * jax.lax.rsqrt(var + EPS)         # (1, C)
    shift = bt_ref[...] - mean * scale                    # (1, C)
    coef = jnp.dot(jnp.concatenate([scale, shift], axis=0), rt_ref[...],
                   preferred_element_type=jnp.float32,
                   precision=jax.lax.Precision.HIGHEST)   # (2, L) tiled back
    return jnp.maximum(acc * coef[0:1, :] + coef[1:2, :], 0.0)   # FMA + ReLU


# ---------------------------------------------------------------------------
# Fused kernel: maxpool -> conv1+BN+ReLU -> conv2+BN+ReLU, all VMEM resident.
# ---------------------------------------------------------------------------
def _down_kernel(xp_ref,
                 wb1_ref, g1_ref, bt1_ref, r1_ref, r1t_ref,
                 wb2_ref, g2_ref, bt2_ref, r2_ref, r2t_ref,
                 o_ref, pad1_ref, pad2_ref,
                 *, ho, n_cnt):
    # MaxPool2d(2): elementwise max of the four pool-corner slabs (VPU).
    pooled = jnp.maximum(
        jnp.maximum(xp_ref[0, 0, :, :], xp_ref[0, 1, :, :]),
        jnp.maximum(xp_ref[1, 0, :, :], xp_ref[1, 1, :, :]))   # (Ho, N*Wo*Cin)

    _stage_padded(pad1_ref, pooled, ho)
    y1 = _conv_bn_relu(pad1_ref, wb1_ref, g1_ref, bt1_ref, r1_ref, r1t_ref,
                       ho, n_cnt)

    _stage_padded(pad2_ref, y1, ho)
    y2 = _conv_bn_relu(pad2_ref, wb2_ref, g2_ref, bt2_ref, r2_ref, r2t_ref,
                       ho, n_cnt)

    o_ref[...] = y2                                            # (Ho, N*Wo*Cout)


# ---------------------------------------------------------------------------
# Wrapper-side parameter packing (tiny, one-time transforms in plain JAX)
# ---------------------------------------------------------------------------
def _banded_weights(w_hwio, n_img, wo_dim):
    """(3,3,Ci,Co) HWIO weights -> (3, N*Wo*Ci, N*Wo*Co) bf16 banded weights.

    big[dh, (n,wi,ci), (m,wo,co)] = [n==m] * w[dh, wi-wo+1, ci, co] when
    |wi-wo| <= 1 else 0; the w-taps, w zero-padding and the batch
    block-diagonal are all implicit in the band."""
    k, _, ci, co = w_hwio.shape
    wi = jnp.arange(wo_dim)[:, None]
    wo = jnp.arange(wo_dim)[None, :]
    dw = wi - wo + 1
    valid = (dw >= 0) & (dw < k)
    blocks = w_hwio[:, jnp.clip(dw, 0, k - 1), :, :]           # (3, Wi, Wo, Ci, Co)
    blocks = jnp.where(valid[None, :, :, None, None], blocks, 0.0)
    blocks = jnp.transpose(blocks, (0, 1, 3, 2, 4))            # (3, Wi, Ci, Wo, Co)
    band = blocks.reshape(k, wo_dim * ci, wo_dim * co)
    eye_n = jnp.eye(n_img, dtype=band.dtype)                   # block-diag over N
    big = jnp.einsum("nm,kij->knimj", eye_n, band)
    big = big.reshape(k, n_img * wo_dim * ci, n_img * wo_dim * co)
    return big.astype(jnp.bfloat16)


def _channel_mats(groups, c):
    """R ((groups*c), c): per-channel lane-group reduction; R^T tiles back."""
    r = jnp.tile(jnp.eye(c, dtype=jnp.float32), (groups, 1))
    return r, r.T


def down_forward(x_nchw, params):
    n, cin, h, w = x_nchw.shape
    ho, wo = h // 2, w // 2
    cmid = params["w1"].shape[-1]
    cout = params["w2"].shape[-1]

    # Single XLA layout pass: NCHW -> (2, 2, Ho, N*Wo*Cin).  Leading (2,2) are
    # the four 2x2-pool corners; the lane dim packs (n, wo, cin) so conv
    # outputs are lane-dense (N*Wo*C = 128 at test shapes).  bf16 cast is
    # exact through the max-pool and matches the MXU's bf16 pass.
    x6 = x_nchw.reshape(n, cin, ho, 2, wo, 2)
    xp = jnp.transpose(x6, (3, 5, 2, 0, 4, 1)).reshape(2, 2, ho, n * wo * cin)
    xp = xp.astype(jnp.bfloat16)

    wb1 = _banded_weights(params["w1"], n, wo)
    wb2 = _banded_weights(params["w2"], n, wo)
    g1 = params["g1"].reshape(1, cmid).astype(jnp.float32)
    bt1 = params["beta1"].reshape(1, cmid).astype(jnp.float32)
    g2 = params["g2"].reshape(1, cout).astype(jnp.float32)
    bt2 = params["beta2"].reshape(1, cout).astype(jnp.float32)
    r1, r1t = _channel_mats(n * wo, cmid)
    r2, r2t = _channel_mats(n * wo, cout)
    # Note: conv biases b1/b2 are intentionally NOT passed -- a per-channel
    # bias before training-mode BatchNorm cancels exactly.

    kernel = functools.partial(_down_kernel, ho=ho, n_cnt=float(n * ho * wo))
    out2d = pl.pallas_call(
        kernel,
        out_shape=jax.ShapeDtypeStruct((ho, n * wo * cout), jnp.float32),
        in_specs=[_vmem()] * 11,
        out_specs=_vmem(),
        scratch_shapes=[pltpu.VMEM((ho + 2, n * wo * cin), jnp.bfloat16),
                        pltpu.VMEM((ho + 2, n * wo * cmid), jnp.bfloat16)],
        # Headroom for whole-block VMEM residency (tiny here; re-derive for
        # the v7x 64 MiB budget on the scaled/tiled path).
        compiler_params=pltpu.CompilerParams(vmem_limit_bytes=32 * 1024 * 1024),
    )(xp, wb1, g1, bt1, r1, r1t, wb2, g2, bt2, r2, r2t)

    out = out2d.reshape(ho, n, wo, cout)
    return jnp.transpose(out, (1, 3, 0, 2))                    # back to NCHW


# ---------------------------------------------------------------------------
# Pure-JAX reference (correctness check only; includes conv bias to verify
# that dropping it before training-mode BN is exact).
# ---------------------------------------------------------------------------
def _reference(x_nchw, p):
    x = jnp.transpose(x_nchw, (0, 2, 3, 1))
    n, h, w, c = x.shape
    x = x.reshape(n, h // 2, 2, w // 2, 2, c).max(axis=(2, 4))

    def block(x, wgt, b, g, bt):
        y = jax.lax.conv_general_dilated(
            x, wgt, (1, 1), "SAME",
            dimension_numbers=("NHWC", "HWIO", "NHWC"),
            precision=jax.lax.Precision.HIGHEST) + b
        mu = y.mean(axis=(0, 1, 2), keepdims=True)
        var = ((y - mu) ** 2).mean(axis=(0, 1, 2), keepdims=True)
        return jnp.maximum((y - mu) * jax.lax.rsqrt(var + EPS) * g + bt, 0.0)

    x = block(x, p["w1"], p["b1"], p["g1"], p["beta1"])
    x = block(x, p["w2"], p["b2"], p["g2"], p["beta2"])
    return jnp.transpose(x, (0, 3, 1, 2))


# ---------------------------------------------------------------------------
if __name__ == "__main__":
    n, cin, h, w = 2, 4, 16, 16        # Down(in_channels=4, out_channels=8)
    cout = 8

    key = jax.random.PRNGKey(0)
    kx, k1, k2, k3, k4 = jax.random.split(key, 5)
    x = jax.random.normal(kx, (n, cin, h, w), jnp.float32)

    params = {
        # conv weights in HWIO; BN gamma/beta at PyTorch defaults (1, 0).
        "w1": jax.random.normal(k1, (3, 3, cin, cout), jnp.float32) * 0.1,
        "b1": jax.random.normal(k2, (cout,), jnp.float32) * 0.1,
        "g1": jnp.ones((cout,), jnp.float32),
        "beta1": jnp.zeros((cout,), jnp.float32),
        "w2": jax.random.normal(k3, (3, 3, cout, cout), jnp.float32) * 0.1,
        "b2": jax.random.normal(k4, (cout,), jnp.float32) * 0.1,
        "g2": jnp.ones((cout,), jnp.float32),
        "beta2": jnp.zeros((cout,), jnp.float32),
    }

    out = jax.jit(down_forward)(x, params)
    out = jax.block_until_ready(out)
    assert out.shape == (n, cout, h // 2, w // 2), out.shape

    ref = _reference(x, params)
    err = float(jnp.max(jnp.abs(out - ref)))
    # Conv matmuls run at default (bf16-pass) MXU precision, so compare
    # against the f32 HIGHEST-precision reference with a looser tolerance.
    assert jnp.allclose(out, ref, atol=3e-2, rtol=3e-2), f"max abs err {err}"

    print("KERNEL_OK")
</pallas_src>

<mosaic_0001>
module attributes {stable_mosaic.version = 11 : i64} {
  func.func @_down_kernel(%arg0: memref<2x2x8x64xbf16, #tpu.memory_space<vmem>>, %arg1: memref<3x64x128xbf16, #tpu.memory_space<vmem>>, %arg2: memref<1x8xf32, #tpu.memory_space<vmem>>, %arg3: memref<1x8xf32, #tpu.memory_space<vmem>>, %arg4: memref<128x8xf32, #tpu.memory_space<vmem>>, %arg5: memref<8x128xf32, #tpu.memory_space<vmem>>, %arg6: memref<3x128x128xbf16, #tpu.memory_space<vmem>>, %arg7: memref<1x8xf32, #tpu.memory_space<vmem>>, %arg8: memref<1x8xf32, #tpu.memory_space<vmem>>, %arg9: memref<128x8xf32, #tpu.memory_space<vmem>>, %arg10: memref<8x128xf32, #tpu.memory_space<vmem>>, %arg11: memref<8x128xf32, #tpu.memory_space<vmem>>, %arg12: memref<10x64xbf16, #tpu.memory_space<vmem>>, %arg13: memref<10x128xbf16, #tpu.memory_space<vmem>>) attributes {dimension_semantics = [], scalar_prefetch = 0 : i64, scratch_operands = 2 : i64, tpu.core_type = #tpu.core_type<tc>} {
    %c0 = arith.constant 0 : index
    %c0_0 = arith.constant 0 : index
    %c0_1 = arith.constant 0 : index
    %c0_2 = arith.constant 0 : index
    %0 = vector.load %arg0[%c0, %c0_0, %c0_1, %c0_2] : memref<2x2x8x64xbf16, #tpu.memory_space<vmem>>, vector<1x1x8x64xbf16>
    %1 = vector.shape_cast %0 : vector<1x1x8x64xbf16> to vector<8x64xbf16>
    %c0_3 = arith.constant 0 : index
    %c1 = arith.constant 1 : index
    %c0_4 = arith.constant 0 : index
    %c0_5 = arith.constant 0 : index
    %2 = vector.load %arg0[%c0_3, %c1, %c0_4, %c0_5] : memref<2x2x8x64xbf16, #tpu.memory_space<vmem>>, vector<1x1x8x64xbf16>
    %3 = vector.shape_cast %2 : vector<1x1x8x64xbf16> to vector<8x64xbf16>
    %4 = arith.maximumf %1, %3 : vector<8x64xbf16>
    %c1_6 = arith.constant 1 : index
    %c0_7 = arith.constant 0 : index
    %c0_8 = arith.constant 0 : index
    %c0_9 = arith.constant 0 : index
    %5 = vector.load %arg0[%c1_6, %c0_7, %c0_8, %c0_9] : memref<2x2x8x64xbf16, #tpu.memory_space<vmem>>, vector<1x1x8x64xbf16>
    %6 = vector.shape_cast %5 : vector<1x1x8x64xbf16> to vector<8x64xbf16>
    %c1_10 = arith.constant 1 : index
    %c1_11 = arith.constant 1 : index
    %c0_12 = arith.constant 0 : index
    %c0_13 = arith.constant 0 : index
    %7 = vector.load %arg0[%c1_10, %c1_11, %c0_12, %c0_13] : memref<2x2x8x64xbf16, #tpu.memory_space<vmem>>, vector<1x1x8x64xbf16>
    %8 = vector.shape_cast %7 : vector<1x1x8x64xbf16> to vector<8x64xbf16>
    %9 = arith.maximumf %6, %8 : vector<8x64xbf16>
    %10 = arith.maximumf %4, %9 : vector<8x64xbf16>
    %cst = arith.constant 0.000000e+00 : bf16
    %11 = vector.broadcast %cst : bf16 to vector<1x64xbf16>
    %c0_14 = arith.constant 0 : index
    %c0_15 = arith.constant 0 : index
    %12 = vector.load %arg12[%c0_14, %c0_15] : memref<10x64xbf16, #tpu.memory_space<vmem>>, vector<1x64xbf16>
    tpu.vector_store %arg12[%c0_14, %c0_15], %11 {strides = array<i32>} : memref<10x64xbf16, #tpu.memory_space<vmem>>, vector<1x64xbf16>,
    %c9 = arith.constant 9 : index
    %c0_16 = arith.constant 0 : index
    %13 = vector.load %arg12[%c9, %c0_16] : memref<10x64xbf16, #tpu.memory_space<vmem>>, vector<1x64xbf16>
    tpu.vector_store %arg12[%c9, %c0_16], %11 {strides = array<i32>} : memref<10x64xbf16, #tpu.memory_space<vmem>>, vector<1x64xbf16>,
    %c1_17 = arith.constant 1 : index
    %c0_18 = arith.constant 0 : index
    %14 = vector.load %arg12[%c1_17, %c0_18] : memref<10x64xbf16, #tpu.memory_space<vmem>>, vector<8x64xbf16>
    tpu.vector_store %arg12[%c1_17, %c0_18], %10 {strides = array<i32>} : memref<10x64xbf16, #tpu.memory_space<vmem>>, vector<8x64xbf16>,
    %c0_19 = arith.constant 0 : index
    %c0_20 = arith.constant 0 : index
    %15 = vector.load %arg12[%c0_19, %c0_20] : memref<10x64xbf16, #tpu.memory_space<vmem>>, vector<8x64xbf16>
    %c0_21 = arith.constant 0 : index
    %c0_22 = arith.constant 0 : index
    %c0_23 = arith.constant 0 : index
    %16 = vector.load %arg1[%c0_21, %c0_22, %c0_23] : memref<3x64x128xbf16, #tpu.memory_space<vmem>>, vector<1x64x128xbf16>
    %17 = vector.shape_cast %16 : vector<1x64x128xbf16> to vector<64x128xbf16>
    %cst_24 = arith.constant dense<0.000000e+00> : vector<8x128xf32>
    %18 = tpu.matmul %15, %17, %cst_24 {dimension_numbers = #tpu.dot_dimension_numbers<[1], [0], [0], [1], [0, 0, 1, 1], [], []>} : vector<8x64xbf16>, vector<64x128xbf16>, vector<8x128xf32> -> vector<8x128xf32>
    %c1_25 = arith.constant 1 : index
    %c0_26 = arith.constant 0 : index
    %19 = vector.load %arg12[%c1_25, %c0_26] : memref<10x64xbf16, #tpu.memory_space<vmem>>, vector<8x64xbf16>
    %c1_27 = arith.constant 1 : index
    %c0_28 = arith.constant 0 : index
    %c0_29 = arith.constant 0 : index
    %20 = vector.load %arg1[%c1_27, %c0_28, %c0_29] : memref<3x64x128xbf16, #tpu.memory_space<vmem>>, vector<1x64x128xbf16>
    %21 = vector.shape_cast %20 : vector<1x64x128xbf16> to vector<64x128xbf16>
    %cst_30 = arith.constant dense<0.000000e+00> : vector<8x128xf32>
    %22 = tpu.matmul %19, %21, %cst_30 {dimension_numbers = #tpu.dot_dimension_numbers<[1], [0], [0], [1], [0, 0, 1, 1], [], []>} : vector<8x64xbf16>, vector<64x128xbf16>, vector<8x128xf32> -> vector<8x128xf32>
    %23 = arith.addf %18, %22 : vector<8x128xf32>
    %c2 = arith.constant 2 : index
    %c0_31 = arith.constant 0 : index
    %24 = vector.load %arg12[%c2, %c0_31] : memref<10x64xbf16, #tpu.memory_space<vmem>>, vector<8x64xbf16>
    %c2_32 = arith.constant 2 : index
    %c0_33 = arith.constant 0 : index
    %c0_34 = arith.constant 0 : index
    %25 = vector.load %arg1[%c2_32, %c0_33, %c0_34] : memref<3x64x128xbf16, #tpu.memory_space<vmem>>, vector<1x64x128xbf16>
    %26 = vector.shape_cast %25 : vector<1x64x128xbf16> to vector<64x128xbf16>
    %cst_35 = arith.constant dense<0.000000e+00> : vector<8x128xf32>
    %27 = tpu.matmul %24, %26, %cst_35 {dimension_numbers = #tpu.dot_dimension_numbers<[1], [0], [0], [1], [0, 0, 1, 1], [], []>} : vector<8x64xbf16>, vector<64x128xbf16>, vector<8x128xf32> -> vector<8x128xf32>
    %28 = arith.addf %23, %27 : vector<8x128xf32>
    %cst_36 = arith.constant dense<0.000000e+00> : vector<128xf32>
    %29 = vector.multi_reduction <add>, %28, %cst_36 [0] : vector<8x128xf32> to vector<128xf32>
    %30 = vector.shape_cast %29 : vector<128xf32> to vector<1x128xf32>
    %31 = arith.mulf %28, %28 : vector<8x128xf32>
    %cst_37 = arith.constant dense<0.000000e+00> : vector<128xf32>
    %32 = vector.multi_reduction <add>, %31, %cst_37 [0] : vector<8x128xf32> to vector<128xf32>
    %33 = vector.shape_cast %32 : vector<128xf32> to vector<1x128xf32>
    %34 = tpu.concatenate %30, %33 in 0 : vector<1x128xf32>, vector<1x128xf32> -> vector<2x128xf32>
    %c0_38 = arith.constant 0 : index
    %c0_39 = arith.constant 0 : index
    %35 = vector.load %arg4[%c0_38, %c0_39] : memref<128x8xf32, #tpu.memory_space<vmem>>, vector<128x8xf32>
    %cst_40 = arith.constant dense<0.000000e+00> : vector<2x8xf32>
    %36 = tpu.matmul %34, %35, %cst_40 {dimension_numbers = #tpu.dot_dimension_numbers<[1], [0], [0], [1], [0, 0, 1, 1], [], []>, precision = #tpu.contract_precision<fp32>} : vector<2x128xf32>, vector<128x8xf32>, vector<2x8xf32> -> vector<2x8xf32>
    %cst_41 = arith.constant 7.812500e-03 : f32
    %37 = vector.broadcast %cst_41 : f32 to vector<2x8xf32>
    %38 = arith.mulf %36, %37 : vector<2x8xf32>
    %39 = vector.extract_strided_slice %38 {offsets = [0, 0], sizes = [1, 8], strides = [1, 1]} : vector<2x8xf32> to vector<1x8xf32>
    %40 = vector.extract_strided_slice %38 {offsets = [1, 0], sizes = [1, 8], strides = [1, 1]} : vector<2x8xf32> to vector<1x8xf32>
    %41 = arith.mulf %39, %39 : vector<1x8xf32>
    %42 = arith.subf %40, %41 : vector<1x8xf32>
    %c0_42 = arith.constant 0 : index
    %c0_43 = arith.constant 0 : index
    %43 = vector.load %arg2[%c0_42, %c0_43] : memref<1x8xf32, #tpu.memory_space<vmem>>, vector<1x8xf32>
    %cst_44 = arith.constant 9.99999974E-6 : f32
    %44 = vector.broadcast %cst_44 : f32 to vector<1x8xf32>
    %45 = arith.addf %42, %44 : vector<1x8xf32>
    %46 = math.rsqrt %45 : vector<1x8xf32>
    %47 = arith.mulf %43, %46 : vector<1x8xf32>
    %c0_45 = arith.constant 0 : index
    %c0_46 = arith.constant 0 : index
    %48 = vector.load %arg3[%c0_45, %c0_46] : memref<1x8xf32, #tpu.memory_space<vmem>>, vector<1x8xf32>
    %49 = arith.mulf %39, %47 : vector<1x8xf32>
    %50 = arith.subf %48, %49 : vector<1x8xf32>
    %51 = tpu.concatenate %47, %50 in 0 : vector<1x8xf32>, vector<1x8xf32> -> vector<2x8xf32>
    %c0_47 = arith.constant 0 : index
    %c0_48 = arith.constant 0 : index
    %52 = vector.load %arg5[%c0_47, %c0_48] : memref<8x128xf32, #tpu.memory_space<vmem>>, vector<8x128xf32>
    %cst_49 = arith.constant dense<0.000000e+00> : vector<2x128xf32>
    %53 = tpu.matmul %51, %52, %cst_49 {dimension_numbers = #tpu.dot_dimension_numbers<[1], [0], [0], [1], [0, 0, 1, 1], [], []>, precision = #tpu.contract_precision<fp32>} : vector<2x8xf32>, vector<8x128xf32>, vector<2x128xf32> -> vector<2x128xf32>
    %54 = vector.extract_strided_slice %53 {offsets = [0, 0], sizes = [1, 128], strides = [1, 1]} : vector<2x128xf32> to vector<1x128xf32>
    %55 = vector.broadcast %54 : vector<1x128xf32> to vector<8x128xf32>
    %56 = arith.mulf %28, %55 : vector<8x128xf32>
    %57 = vector.extract_strided_slice %53 {offsets = [1, 0], sizes = [1, 128], strides = [1, 1]} : vector<2x128xf32> to vector<1x128xf32>
    %58 = vector.broadcast %57 : vector<1x128xf32> to vector<8x128xf32>
    %59 = arith.addf %56, %58 : vector<8x128xf32>
    %cst_50 = arith.constant 0.000000e+00 : f32
    %60 = vector.broadcast %cst_50 : f32 to vector<8x128xf32>
    %61 = arith.maximumf %59, %60 : vector<8x128xf32>
    %cst_51 = arith.constant 0.000000e+00 : bf16
    %62 = vector.broadcast %cst_51 : bf16 to vector<1x128xbf16>
    %c0_52 = arith.constant 0 : index
    %c0_53 = arith.constant 0 : index
    %63 = vector.load %arg13[%c0_52, %c0_53] : memref<10x128xbf16, #tpu.memory_space<vmem>>, vector<1x128xbf16>
    tpu.vector_store %arg13[%c0_52, %c0_53], %62 {strides = array<i32>} : memref<10x128xbf16, #tpu.memory_space<vmem>>, vector<1x128xbf16>,
    %c9_54 = arith.constant 9 : index
    %c0_55 = arith.constant 0 : index
    %64 = vector.load %arg13[%c9_54, %c0_55] : memref<10x128xbf16, #tpu.memory_space<vmem>>, vector<1x128xbf16>
    tpu.vector_store %arg13[%c9_54, %c0_55], %62 {strides = array<i32>} : memref<10x128xbf16, #tpu.memory_space<vmem>>, vector<1x128xbf16>,
    %65 = arith.truncf %61 : vector<8x128xf32> to vector<8x128xbf16>
    %c1_56 = arith.constant 1 : index
    %c0_57 = arith.constant 0 : index
    %66 = vector.load %arg13[%c1_56, %c0_57] : memref<10x128xbf16, #tpu.memory_space<vmem>>, vector<8x128xbf16>
    tpu.vector_store %arg13[%c1_56, %c0_57], %65 {strides = array<i32>} : memref<10x128xbf16, #tpu.memory_space<vmem>>, vector<8x128xbf16>,
    %c0_58 = arith.constant 0 : index
    %c0_59 = arith.constant 0 : index
    %67 = vector.load %arg13[%c0_58, %c0_59] : memref<10x128xbf16, #tpu.memory_space<vmem>>, vector<8x128xbf16>
    %c0_60 = arith.constant 0 : index
    %c0_61 = arith.constant 0 : index
    %c0_62 = arith.constant 0 : index
    %68 = vector.load %arg6[%c0_60, %c0_61, %c0_62] : memref<3x128x128xbf16, #tpu.memory_space<vmem>>, vector<1x128x128xbf16>
    %69 = vector.shape_cast %68 : vector<1x128x128xbf16> to vector<128x128xbf16>
    %cst_63 = arith.constant dense<0.000000e+00> : vector<8x128xf32>
    %70 = tpu.matmul %67, %69, %cst_63 {dimension_numbers = #tpu.dot_dimension_numbers<[1], [0], [0], [1], [0, 0, 1, 1], [], []>} : vector<8x128xbf16>, vector<128x128xbf16>, vector<8x128xf32> -> vector<8x128xf32>
    %c1_64 = arith.constant 1 : index
    %c0_65 = arith.constant 0 : index
    %71 = vector.load %arg13[%c1_64, %c0_65] : memref<10x128xbf16, #tpu.memory_space<vmem>>, vector<8x128xbf16>
    %c1_66 = arith.constant 1 : index
    %c0_67 = arith.constant 0 : index
    %c0_68 = arith.constant 0 : index
    %72 = vector.load %arg6[%c1_66, %c0_67, %c0_68] : memref<3x128x128xbf16, #tpu.memory_space<vmem>>, vector<1x128x128xbf16>
    %73 = vector.shape_cast %72 : vector<1x128x128xbf16> to vector<128x128xbf16>
    %cst_69 = arith.constant dense<0.000000e+00> : vector<8x128xf32>
    %74 = tpu.matmul %71, %73, %cst_69 {dimension_numbers = #tpu.dot_dimension_numbers<[1], [0], [0], [1], [0, 0, 1, 1], [], []>} : vector<8x128xbf16>, vector<128x128xbf16>, vector<8x128xf32> -> vector<8x128xf32>
    %75 = arith.addf %70, %74 : vector<8x128xf32>
    %c2_70 = arith.constant 2 : index
    %c0_71 = arith.constant 0 : index
    %76 = vector.load %arg13[%c2_70, %c0_71] : memref<10x128xbf16, #tpu.memory_space<vmem>>, vector<8x128xbf16>
    %c2_72 = arith.constant 2 : index
    %c0_73 = arith.constant 0 : index
    %c0_74 = arith.constant 0 : index
    %77 = vector.load %arg6[%c2_72, %c0_73, %c0_74] : memref<3x128x128xbf16, #tpu.memory_space<vmem>>, vector<1x128x128xbf16>
    %78 = vector.shape_cast %77 : vector<1x128x128xbf16> to vector<128x128xbf16>
    %cst_75 = arith.constant dense<0.000000e+00> : vector<8x128xf32>
    %79 = tpu.matmul %76, %78, %cst_75 {dimension_numbers = #tpu.dot_dimension_numbers<[1], [0], [0], [1], [0, 0, 1, 1], [], []>} : vector<8x128xbf16>, vector<128x128xbf16>, vector<8x128xf32> -> vector<8x128xf32>
    %80 = arith.addf %75, %79 : vector<8x128xf32>
    %cst_76 = arith.constant dense<0.000000e+00> : vector<128xf32>
    %81 = vector.multi_reduction <add>, %80, %cst_76 [0] : vector<8x128xf32> to vector<128xf32>
    %82 = vector.shape_cast %81 : vector<128xf32> to vector<1x128xf32>
    %83 = arith.mulf %80, %80 : vector<8x128xf32>
    %cst_77 = arith.constant dense<0.000000e+00> : vector<128xf32>
    %84 = vector.multi_reduction <add>, %83, %cst_77 [0] : vector<8x128xf32> to vector<128xf32>
    %85 = vector.shape_cast %84 : vector<128xf32> to vector<1x128xf32>
    %86 = tpu.concatenate %82, %85 in 0 : vector<1x128xf32>, vector<1x128xf32> -> vector<2x128xf32>
    %c0_78 = arith.constant 0 : index
    %c0_79 = arith.constant 0 : index
    %87 = vector.load %arg9[%c0_78, %c0_79] : memref<128x8xf32, #tpu.memory_space<vmem>>, vector<128x8xf32>
    %cst_80 = arith.constant dense<0.000000e+00> : vector<2x8xf32>
    %88 = tpu.matmul %86, %87, %cst_80 {dimension_numbers = #tpu.dot_dimension_numbers<[1], [0], [0], [1], [0, 0, 1, 1], [], []>, precision = #tpu.contract_precision<fp32>} : vector<2x128xf32>, vector<128x8xf32>, vector<2x8xf32> -> vector<2x8xf32>
    %cst_81 = arith.constant 7.812500e-03 : f32
    %89 = vector.broadcast %cst_81 : f32 to vector<2x8xf32>
    %90 = arith.mulf %88, %89 : vector<2x8xf32>
    %91 = vector.extract_strided_slice %90 {offsets = [0, 0], sizes = [1, 8], strides = [1, 1]} : vector<2x8xf32> to vector<1x8xf32>
    %92 = vector.extract_strided_slice %90 {offsets = [1, 0], sizes = [1, 8], strides = [1, 1]} : vector<2x8xf32> to vector<1x8xf32>
    %93 = arith.mulf %91, %91 : vector<1x8xf32>
    %94 = arith.subf %92, %93 : vector<1x8xf32>
    %c0_82 = arith.constant 0 : index
    %c0_83 = arith.constant 0 : index
    %95 = vector.load %arg7[%c0_82, %c0_83] : memref<1x8xf32, #tpu.memory_space<vmem>>, vector<1x8xf32>
    %cst_84 = arith.constant 9.99999974E-6 : f32
    %96 = vector.broadcast %cst_84 : f32 to vector<1x8xf32>
    %97 = arith.addf %94, %96 : vector<1x8xf32>
    %98 = math.rsqrt %97 : vector<1x8xf32>
    %99 = arith.mulf %95, %98 : vector<1x8xf32>
    %c0_85 = arith.constant 0 : index
    %c0_86 = arith.constant 0 : index
    %100 = vector.load %arg8[%c0_85, %c0_86] : memref<1x8xf32, #tpu.memory_space<vmem>>, vector<1x8xf32>
    %101 = arith.mulf %91, %99 : vector<1x8xf32>
    %102 = arith.subf %100, %101 : vector<1x8xf32>
    %103 = tpu.concatenate %99, %102 in 0 : vector<1x8xf32>, vector<1x8xf32> -> vector<2x8xf32>
    %c0_87 = arith.constant 0 : index
    %c0_88 = arith.constant 0 : index
    %104 = vector.load %arg10[%c0_87, %c0_88] : memref<8x128xf32, #tpu.memory_space<vmem>>, vector<8x128xf32>
    %cst_89 = arith.constant dense<0.000000e+00> : vector<2x128xf32>
    %105 = tpu.matmul %103, %104, %cst_89 {dimension_numbers = #tpu.dot_dimension_numbers<[1], [0], [0], [1], [0, 0, 1, 1], [], []>, precision = #tpu.contract_precision<fp32>} : vector<2x8xf32>, vector<8x128xf32>, vector<2x128xf32> -> vector<2x128xf32>
    %106 = vector.extract_strided_slice %105 {offsets = [0, 0], sizes = [1, 128], strides = [1, 1]} : vector<2x128xf32> to vector<1x128xf32>
    %107 = vector.broadcast %106 : vector<1x128xf32> to vector<8x128xf32>
    %108 = arith.mulf %80, %107 : vector<8x128xf32>
    %109 = vector.extract_strided_slice %105 {offsets = [1, 0], sizes = [1, 128], strides = [1, 1]} : vector<2x128xf32> to vector<1x128xf32>
    %110 = vector.broadcast %109 : vector<1x128xf32> to vector<8x128xf32>
    %111 = arith.addf %108, %110 : vector<8x128xf32>
    %cst_90 = arith.constant 0.000000e+00 : f32
    %112 = vector.broadcast %cst_90 : f32 to vector<8x128xf32>
    %113 = arith.maximumf %111, %112 : vector<8x128xf32>
    %c0_91 = arith.constant 0 : index
    %c0_92 = arith.constant 0 : index
    %114 = vector.load %arg11[%c0_91, %c0_92] : memref<8x128xf32, #tpu.memory_space<vmem>>, vector<8x128xf32>
    tpu.vector_store %arg11[%c0_91, %c0_92], %113 {strides = array<i32>} : memref<8x128xf32, #tpu.memory_space<vmem>>, vector<8x128xf32>,
    return
  }
}

</mosaic_0001>

<llo_original>
// kernel: tile.14
$region0: #{tile.14}
  %s0 = inlined_call_operand.vmem [shape: f32[16,8,8], index: 0, kind: input, shape index: {}]
  %s1 = inlined_call_operand.vmem [shape: f32[128,8], index: 1, kind: output, shape index: {}]
  %s2 = smov 3
  %v3 = vld [vmem:[%s0] ss:$16 sm:%s2]
  %s4 = smov 12
  %v5 = vld [vmem:[%s0] ss:$16 sm:%s4]
  %vm6 = vcmask 1043458
  %v7 = vsel %vm6, %v5, %v3
  %s8 = smov 48
  %v9 = vld [vmem:[%s0] ss:$16 sm:%s8]
  %vm10 = vcmask 1045508
  %v11 = vsel %vm10, %v9, %v7
  %s12 = smov 192
  %v13 = vld [vmem:[%s0] ss:$16 sm:%s12]
  %vm14 = vcmask 1047558
  %v15 = vsel %vm14, %v13, %v11
  %vm16 = vcmask 64512
  %17 = vst.msk [vmem:[%s1] sm:$0xff] %vm16, %v15
  %s18 = scalar_lea.vmem %s0, 15
  %s19 = smov 3
  %v20 = vld [vmem:[%s18] ss:$16 sm:%s19]
  %s21 = scalar_lea.vmem %s0, 15
  %s22 = smov 12
  %v23 = vld [vmem:[%s21] ss:$16 sm:%s22]
  %vm24 = vcmask 1043458
  %v25 = vsel %vm24, %v23, %v20
  %s26 = scalar_lea.vmem %s0, 15
  %s27 = smov 48
  %v28 = vld [vmem:[%s26] ss:$16 sm:%s27]
  %vm29 = vcmask 1045508
  %v30 = vsel %vm29, %v28, %v25
  %s31 = scalar_lea.vmem %s0, 15
  %s32 = smov 192
  %v33 = vld [vmem:[%s31] ss:$16 sm:%s32]
  %vm34 = vcmask 1047558
  %v35 = vsel %vm34, %v33, %v30
  %36 = vrot.lane.b32.xlu0 %v35, 120
  %v37 = vpop.permute.xlu0 %36
  %vm38 = vcmask 1048512
  %39 = vst.msk [vmem:[%s1] sm:$0xff] %vm38, %v37
  %s40 = scalar_lea.vmem %s0, 14
  %s41 = smov 3
  %v42 = vld [vmem:[%s40] ss:$16 sm:%s41]
  %s43 = scalar_lea.vmem %s0, 14
  %s44 = smov 12
  %v45 = vld [vmem:[%s43] ss:$16 sm:%s44]
  %vm46 = vcmask 1043458
  %v47 = vsel %vm46, %v45, %v42
  %s48 = scalar_lea.vmem %s0, 14
  %s49 = smov 48
  %v50 = vld [vmem:[%s48] ss:$16 sm:%s49]
  %vm51 = vcmask 1045508
  %v52 = vsel %vm51, %v50, %v47
  %s53 = scalar_lea.vmem %s0, 14
  %s54 = smov 192
  %v55 = vld [vmem:[%s53] ss:$16 sm:%s54]
  %vm56 = vcmask 1047558
  %v57 = vsel %vm56, %v55, %v52
  %58 = vrot.lane.b32.xlu0 %v57, 112
  %v59 = vpop.permute.xlu0 %58
  %vm60 = vcmask 982912
  %61 = vst.msk [vmem:[%s1] sm:$0xff] %vm60, %v59
  %s62 = scalar_lea.vmem %s0, 13
  %s63 = smov 3
  %v64 = vld [vmem:[%s62] ss:$16 sm:%s63]
  %s65 = scalar_lea.vmem %s0, 13
  %s66 = smov 12
  %v67 = vld [vmem:[%s65] ss:$16 sm:%s66]
  %vm68 = vcmask 1043458
  %v69 = vsel %vm68, %v67, %v64
  %s70 = scalar_lea.vmem %s0, 13
  %s71 = smov 48
  %v72 = vld [vmem:[%s70] ss:$16 sm:%s71]
  %vm73 = vcmask 1045508
  %v74 = vsel %vm73, %v72, %v69
  %s75 = scalar_lea.vmem %s0, 13
  %s76 = smov 192
  %v77 = vld [vmem:[%s75] ss:$16 sm:%s76]
  %vm78 = vcmask 1047558
  %v79 = vsel %vm78, %v77, %v74
  %80 = vrot.lane.b32.xlu0 %v79, 104
  %v81 = vpop.permute.xlu0 %80
  %vm82 = vcmask 917312
  %83 = vst.msk [vmem:[%s1] sm:$0xff] %vm82, %v81
  %s84 = scalar_lea.vmem %s0, 12
  %s85 = smov 3
  %v86 = vld [vmem:[%s84] ss:$16 sm:%s85]
  %s87 = scalar_lea.vmem %s0, 12
  %s88 = smov 12
  %v89 = vld [vmem:[%s87] ss:$16 sm:%s88]
  %vm90 = vcmask 1043458
  %v91 = vsel %vm90, %v89, %v86
  %s92 = scalar_lea.vmem %s0, 12
  %s93 = smov 48
  %v94 = vld [vmem:[%s92] ss:$16 sm:%s93]
  %vm95 = vcmask 1045508
  %v96 = vsel %vm95, %v94, %v91
  %s97 = scalar_lea.vmem %s0, 12
  %s98 = smov 192
  %v99 = vld [vmem:[%s97] ss:$16 sm:%s98]
  %vm100 = vcmask 1047558
  %v101 = vsel %vm100, %v99, %v96
  %102 = vrot.lane.b32.xlu0 %v101, 96
  %v103 = vpop.permute.xlu0 %102
  %vm104 = vcmask 851712
  %105 = vst.msk [vmem:[%s1] sm:$0xff] %vm104, %v103
  %s106 = scalar_lea.vmem %s0, 11
  %s107 = smov 3
  %v108 = vld [vmem:[%s106] ss:$16 sm:%s107]
  %s109 = scalar_lea.vmem %s0, 11
  %s110 = smov 12
  %v111 = vld [vmem:[%s109] ss:$16 sm:%s110]
  %vm112 = vcmask 1043458
  %v113 = vsel %vm112, %v111, %v108
  %s114 = scalar_lea.vmem %s0, 11
  %s115 = smov 48
  %v116 = vld [vmem:[%s114] ss:$16 sm:%s115]
  %vm117 = vcmask 1045508
  %v118 = vsel %vm117, %v116, %v113
  %s119 = scalar_lea.vmem %s0, 11
  %s120 = smov 192
  %v121 = vld [vmem:[%s119] ss:$16 sm:%s120]
  %vm122 = vcmask 1047558
  %v123 = vsel %vm122, %v121, %v118
  %124 = vrot.lane.b32.xlu0 %v123, 88
  %v125 = vpop.permute.xlu0 %124
  %vm126 = vcmask 786112
  %127 = vst.msk [vmem:[%s1] sm:$0xff] %vm126, %v125
  %s128 = scalar_lea.vmem %s0, 10
  %s129 = smov 3
  %v130 = vld [vmem:[%s128] ss:$16 sm:%s129]
  %s131 = scalar_lea.vmem %s0, 10
  %s132 = smov 12
  %v133 = vld [vmem:[%s131] ss:$16 sm:%s132]
  %vm134 = vcmask 1043458
  %v135 = vsel %vm134, %v133, %v130
  %s136 = scalar_lea.vmem %s0, 10
  %s137 = smov 48
  %v138 = vld [vmem:[%s136] ss:$16 sm:%s137]
  %vm139 = vcmask 1045508
  %v140 = vsel %vm139, %v138, %v135
  %s141 = scalar_lea.vmem %s0, 10
  %s142 = smov 192
  %v143 = vld [vmem:[%s141] ss:$16 sm:%s142]
  %vm144 = vcmask 1047558
  %v145 = vsel %vm144, %v143, %v140
  %146 = vrot.lane.b32.xlu0 %v145, 80
  %v147 = vpop.permute.xlu0 %146
  %vm148 = vcmask 720512
  %149 = vst.msk [vmem:[%s1] sm:$0xff] %vm148, %v147
  %s150 = scalar_lea.vmem %s0, 9
  %s151 = smov 3
  %v152 = vld [vmem:[%s150] ss:$16 sm:%s151]
  %s153 = scalar_lea.vmem %s0, 9
  %s154 = smov 12
  %v155 = vld [vmem:[%s153] ss:$16 sm:%s154]
  %vm156 = vcmask 1043458
  %v157 = vsel %vm156, %v155, %v152
  %s158 = scalar_lea.vmem %s0, 9
  %s159 = smov 48
  %v160 = vld [vmem:[%s158] ss:$16 sm:%s159]
  %vm161 = vcmask 1045508
  %v162 = vsel %vm161, %v160, %v157
  %s163 = scalar_lea.vmem %s0, 9
  %s164 = smov 192
  %v165 = vld [vmem:[%s163] ss:$16 sm:%s164]
  %vm166 = vcmask 1047558
  %v167 = vsel %vm166, %v165, %v162
  %168 = vrot.lane.b32.xlu0 %v167, 72
  %v169 = vpop.permute.xlu0 %168
  %vm170 = vcmask 654912
  %171 = vst.msk [vmem:[%s1] sm:$0xff] %vm170, %v169
  %s172 = scalar_lea.vmem %s0, 8
  %s173 = smov 3
  %v174 = vld [vmem:[%s172] ss:$16 sm:%s173]
  %s175 = scalar_lea.vmem %s0, 8
  %s176 = smov 12
  %v177 = vld [vmem:[%s175] ss:$16 sm:%s176]
  %vm178 = vcmask 1043458
  %v179 = vsel %vm178, %v177, %v174
  %s180 = scalar_lea.vmem %s0, 8
  %s181 = smov 48
  %v182 = vld [vmem:[%s180] ss:$16 sm:%s181]
  %vm183 = vcmask 1045508
  %v184 = vsel %vm183, %v182, %v179
  %s185 = scalar_lea.vmem %s0, 8
  %s186 = smov 192
  %v187 = vld [vmem:[%s185] ss:$16 sm:%s186]
  %vm188 = vcmask 1047558
  %v189 = vsel %vm188, %v187, %v184
  %190 = vrot.lane.b32.xlu0 %v189, 64
  %v191 = vpop.permute.xlu0 %190
  %vm192 = vcmask 589312
  %193 = vst.msk [vmem:[%s1] sm:$0xff] %vm192, %v191
  %s194 = scalar_lea.vmem %s0, 7
  %s195 = smov 3
  %v196 = vld [vmem:[%s194] ss:$16 sm:%s195]
  %s197 = scalar_lea.vmem %s0, 7
  %s198 = smov 12
  %v199 = vld [vmem:[%s197] ss:$16 sm:%s198]
  %vm200 = vcmask 1043458
  %v201 = vsel %vm200, %v199, %v196
  %s202 = scalar_lea.vmem %s0, 7
  %s203 = smov 48
  %v204 = vld [vmem:[%s202] ss:$16 sm:%s203]
  %vm205 = vcmask 1045508
  %v206 = vsel %vm205, %v204, %v201
  %s207 = scalar_lea.vmem %s0, 7
  %s208 = smov 192
  %v209 = vld [vmem:[%s207] ss:$16 sm:%s208]
  %vm210 = vcmask 1047558
  %v211 = vsel %vm210, %v209, %v206
  %212 = vrot.lane.b32.xlu0 %v211, 56
  %v213 = vpop.permute.xlu0 %212
  %vm214 = vcmask 523712
  %215 = vst.msk [vmem:[%s1] sm:$0xff] %vm214, %v213
  %s216 = scalar_lea.vmem %s0, 6
  %s217 = smov 3
  %v218 = vld [vmem:[%s216] ss:$16 sm:%s217]
  %s219 = scalar_lea.vmem %s0, 6
  %s220 = smov 12
  %v221 = vld [vmem:[%s219] ss:$16 sm:%s220]
  %vm222 = vcmask 1043458
  %v223 = vsel %vm222, %v221, %v218
  %s224 = scalar_lea.vmem %s0, 6
  %s225 = smov 48
  %v226 = vld [vmem:[%s224] ss:$16 sm:%s225]
  %vm227 = vcmask 1045508
  %v228 = vsel %vm227, %v226, %v223
  %s229 = scalar_lea.vmem %s0, 6
  %s230 = smov 192
  %v231 = vld [vmem:[%s229] ss:$16 sm:%s230]
  %vm232 = vcmask 1047558
  %v233 = vsel %vm232, %v231, %v228
  %234 = vrot.lane.b32.xlu0 %v233, 48
  %v235 = vpop.permute.xlu0 %234
  %vm236 = vcmask 458112
  %237 = vst.msk [vmem:[%s1] sm:$0xff] %vm236, %v235
  %s238 = scalar_lea.vmem %s0, 5
  %s239 = smov 3
  %v240 = vld [vmem:[%s238] ss:$16 sm:%s239]
  %s241 = scalar_lea.vmem %s0, 5
  %s242 = smov 12
  %v243 = vld [vmem:[%s241] ss:$16 sm:%s242]
  %vm244 = vcmask 1043458
  %v245 = vsel %vm244, %v243, %v240
  %s246 = scalar_lea.vmem %s0, 5
  %s247 = smov 48
  %v248 = vld [vmem:[%s246] ss:$16 sm:%s247]
  %vm249 = vcmask 1045508
  %v250 = vsel %vm249, %v248, %v245
  %s251 = scalar_lea.vmem %s0, 5
  %s252 = smov 192
  %v253 = vld [vmem:[%s251] ss:$16 sm:%s252]
  %vm254 = vcmask 1047558
  %v255 = vsel %vm254, %v253, %v250
  %256 = vrot.lane.b32.xlu0 %v255, 40
  %v257 = vpop.permute.xlu0 %256
  %vm258 = vcmask 392512
  %259 = vst.msk [vmem:[%s1] sm:$0xff] %vm258, %v257
  %s260 = scalar_lea.vmem %s0, 4
  %s261 = smov 3
  %v262 = vld [vmem:[%s260] ss:$16 sm:%s261]
  %s263 = scalar_lea.vmem %s0, 4
  %s264 = smov 12
  %v265 = vld [vmem:[%s263] ss:$16 sm:%s264]
  %vm266 = vcmask 1043458
  %v267 = vsel %vm266, %v265, %v262
  %s268 = scalar_lea.vmem %s0, 4
  %s269 = smov 48
  %v270 = vld [vmem:[%s268] ss:$16 sm:%s269]
  %vm271 = vcmask 1045508
  %v272 = vsel %vm271, %v270, %v267
  %s273 = scalar_lea.vmem %s0, 4
  %s274 = smov 192
  %v275 = vld [vmem:[%s273] ss:$16 sm:%s274]
  %vm276 = vcmask 1047558
  %v277 = vsel %vm276, %v275, %v272
  %278 = vrot.lane.b32.xlu0 %v277, 32
  %v279 = vpop.permute.xlu0 %278
  %vm280 = vcmask 326912
  %281 = vst.msk [vmem:[%s1] sm:$0xff] %vm280, %v279
  %s282 = scalar_lea.vmem %s0, 3
  %s283 = smov 3
  %v284 = vld [vmem:[%s282] ss:$16 sm:%s283]
  %s285 = scalar_lea.vmem %s0, 3
  %s286 = smov 12
  %v287 = vld [vmem:[%s285] ss:$16 sm:%s286]
  %vm288 = vcmask 1043458
  %v289 = vsel %vm288, %v287, %v284
  %s290 = scalar_lea.vmem %s0, 3
  %s291 = smov 48
  %v292 = vld [vmem:[%s290] ss:$16 sm:%s291]
  %vm293 = vcmask 1045508
  %v294 = vsel %vm293, %v292, %v289
  %s295 = scalar_lea.vmem %s0, 3
  %s296 = smov 192
  %v297 = vld [vmem:[%s295] ss:$16 sm:%s296]
  %vm298 = vcmask 1047558
  %v299 = vsel %vm298, %v297, %v294
  %300 = vrot.lane.b32.xlu0 %v299, 24
  %v301 = vpop.permute.xlu0 %300
  %vm302 = vcmask 261312
  %303 = vst.msk [vmem:[%s1] sm:$0xff] %vm302, %v301
  %s304 = scalar_lea.vmem %s0, 2
  %s305 = smov 3
  %v306 = vld [vmem:[%s304] ss:$16 sm:%s305]
  %s307 = scalar_lea.vmem %s0, 2
  %s308 = smov 12
  %v309 = vld [vmem:[%s307] ss:$16 sm:%s308]
  %vm310 = vcmask 1043458
  %v311 = vsel %vm310, %v309, %v306
  %s312 = scalar_lea.vmem %s0, 2
  %s313 = smov 48
  %v314 = vld [vmem:[%s312] ss:$16 sm:%s313]
  %vm315 = vcmask 1045508
  %v316 = vsel %vm315, %v314, %v311
  %s317 = scalar_lea.vmem %s0, 2
  %s318 = smov 192
  %v319 = vld [vmem:[%s317] ss:$16 sm:%s318]
  %vm320 = vcmask 1047558
  %v321 = vsel %vm320, %v319, %v316
  %322 = vrot.lane.b32.xlu0 %v321, 16
  %v323 = vpop.permute.xlu0 %322
  %vm324 = vcmask 195712
  %325 = vst.msk [vmem:[%s1] sm:$0xff] %vm324, %v323
  %s326 = scalar_lea.vmem %s0, 1
  %s327 = smov 3
  %v328 = vld [vmem:[%s326] ss:$16 sm:%s327]
  %s329 = scalar_lea.vmem %s0, 1
  %s330 = smov 12
  %v331 = vld [vmem:[%s329] ss:$16 sm:%s330]
  %vm332 = vcmask 1043458
  %v333 = vsel %vm332, %v331, %v328
  %s334 = scalar_lea.vmem %s0, 1
  %s335 = smov 48
  %v336 = vld [vmem:[%s334] ss:$16 sm:%s335]
  %vm337 = vcmask 1045508
  %v338 = vsel %vm337, %v336, %v333
  %s339 = scalar_lea.vmem %s0, 1
  %s340 = smov 192
  %v341 = vld [vmem:[%s339] ss:$16 sm:%s340]
  %vm342 = vcmask 1047558
  %v343 = vsel %vm342, %v341, %v338
  %344 = vrot.lane.b32.xlu0 %v343, 8
  %v345 = vpop.permute.xlu0 %344
  %vm346 = vcmask 130112
  %347 = vst.msk [vmem:[%s1] sm:$0xff] %vm346, %v345

// kernel: down_forward.1
$region0: #{down_forward.1}
  #allocation0 [shape = 'u32[]', space=smem, size = 0x4, offset = 0x4, fixed_abs, tag = 'smem constant byte address 0x4 - core index']
  #allocation1 [shape = 'u32[144,128]{1,0:T(1,128)}', space=vmem, size = 0x12000, scoped, tag = 'internal scratch']
  #allocation2 [shape = 'bf16[10,64]{1,0:T(8,128)(2,1)}', space=vmem, size = 0x1000, scoped, tag = 'scratch operand']
  #allocation3 [shape = 'bf16[10,128]{1,0:T(8,128)(2,1)}', space=vmem, size = 0x1000, scoped, tag = 'scratch operand']
  %s0 = inlined_call_operand.vmem [shape: bf16[2,2,8,64], index: 0, kind: input, shape index: {}]
  %s1 = inlined_call_operand.vmem [shape: bf16[3,64,128], index: 1, kind: input, shape index: {}]
  %s2 = inlined_call_operand.vmem [shape: f32[1,8], index: 2, kind: input, shape index: {}]
  %s3 = inlined_call_operand.vmem [shape: f32[1,8], index: 3, kind: input, shape index: {}]
  %s4 = inlined_call_operand.vmem [shape: f32[128,8], index: 4, kind: input, shape index: {}, may-alias: {4,9}]
  %s5 = inlined_call_operand.vmem [shape: f32[8,128], index: 5, kind: input, shape index: {}, may-alias: {5,10}]
  %s6 = inlined_call_operand.vmem [shape: bf16[3,128,128], index: 6, kind: input, shape index: {}]
  %s7 = inlined_call_operand.vmem [shape: f32[1,8], index: 7, kind: input, shape index: {}]
  %s8 = inlined_call_operand.vmem [shape: f32[1,8], index: 8, kind: input, shape index: {}]
  %s9 = inlined_call_operand.vmem [shape: f32[128,8], index: 9, kind: input, shape index: {}, may-alias: {4,9}]
  %s10 = inlined_call_operand.vmem [shape: f32[8,128], index: 10, kind: input, shape index: {}, may-alias: {5,10}]
  %s11 = inlined_call_operand.vmem [shape: f32[8,128], index: 11, kind: output, shape index: {}]
  %s12 = sld [smem:[#allocation0]]
  $region54: #{down_forward.1} parent=0
    _
  %s14 = ssub.s32 1, %s12
  %s15 = scalar_select 0, %s14, %s12
  // Predicated region
  $region2: #{down_forward.1} parent=0 // pred_check
    _
  $region3: #{down_forward.1} parent=0 // pred_check_branch
    %17 = sbr.rel (0) target = $region5
  $region4: #{down_forward.1} parent=0 // pred_region
    _
  $region5: #{down_forward.1} parent=0 // pred_fallthru
    _
  // Predicated region
  $region6: #{down_forward.1} parent=0 // pred_check
    _
  $region7: #{down_forward.1} parent=0 // pred_check_branch
    %19 = sbr.rel (0) target = $region9
  $region8: #{down_forward.1} parent=0 // pred_region
    _
  $region9: #{down_forward.1} parent=0 // pred_fallthru
    _
  // Predicated region
  $region10: #{down_forward.1} parent=0 // pred_check
    _
  $region11: #{down_forward.1} parent=0 // pred_check_branch
    %21 = sbr.rel (0) target = $region13
  $region12: #{down_forward.1} parent=0 // pred_region
    _
  $region13: #{down_forward.1} parent=0 // pred_fallthru
    _
  // Predicated region
  $region14: #{down_forward.1} parent=0 // pred_check
    _
  $region15: #{down_forward.1} parent=0 // pred_check_branch
    %23 = sbr.rel (0) target = $region17
  $region16: #{down_forward.1} parent=0 // pred_region
    _
  $region17: #{down_forward.1} parent=0 // pred_fallthru
    _
  // Predicated region
  $region18: #{down_forward.1} parent=0 // pred_check
    _
  $region19: #{down_forward.1} parent=0 // pred_check_branch
    %25 = sbr.rel (0) target = $region21
  $region20: #{down_forward.1} parent=0 // pred_region
    _
  $region21: #{down_forward.1} parent=0 // pred_fallthru
    _
  // Predicated region
  $region22: #{down_forward.1} parent=0 // pred_check
    _
  $region23: #{down_forward.1} parent=0 // pred_check_branch
    %27 = sbr.rel (0) target = $region25
  $region24: #{down_forward.1} parent=0 // pred_region
    _
  $region25: #{down_forward.1} parent=0 // pred_fallthru
    _
  // Predicated region
  $region26: #{down_forward.1} parent=0 // pred_check
    _
  $region27: #{down_forward.1} parent=0 // pred_check_branch
    %29 = sbr.rel (0) target = $region29
  $region28: #{down_forward.1} parent=0 // pred_region
    _
  $region29: #{down_forward.1} parent=0 // pred_fallthru
    _
  // Predicated region
  $region30: #{down_forward.1} parent=0 // pred_check
    _
  $region31: #{down_forward.1} parent=0 // pred_check_branch
    %31 = sbr.rel (0) target = $region33
  $region32: #{down_forward.1} parent=0 // pred_region
    _
  $region33: #{down_forward.1} parent=0 // pred_fallthru
    _
  // Predicated region
  $region34: #{down_forward.1} parent=0 // pred_check
    _
  $region35: #{down_forward.1} parent=0 // pred_check_branch
    %33 = sbr.rel (0) target = $region37
  $region36: #{down_forward.1} parent=0 // pred_region
    _
  $region37: #{down_forward.1} parent=0 // pred_fallthru
    _
  // Predicated region
  $region38: #{down_forward.1} parent=0 // pred_check
    _
  $region39: #{down_forward.1} parent=0 // pred_check_branch
    %35 = sbr.rel (0) target = $region41
  $region40: #{down_forward.1} parent=0 // pred_region
    _
  $region41: #{down_forward.1} parent=0 // pred_fallthru
    _
  // Predicated region
  $region42: #{down_forward.1} parent=0 // pred_check
    _
  $region43: #{down_forward.1} parent=0 // pred_check_branch
    %37 = sbr.rel (0) target = $region45
  $region44: #{down_forward.1} parent=0 // pred_region
    _
  $region45: #{down_forward.1} parent=0 // pred_fallthru
    _
  %v39 = vld [vmem:[%s0] sm:$0xf]
  %s40 = scalar_lea.vmem %s0, 4
  %v41 = vld [vmem:[%s40] sm:$0xf]
  %v42 = vmax.bf16 %v39, %v41
  %s43 = scalar_lea.vmem %s0, 8
  %v44 = vld [vmem:[%s43] sm:$0xf]
  %s45 = scalar_lea.vmem %s0, 12
  %v46 = vld [vmem:[%s45] sm:$0xf]
  %v47 = vmax.bf16 %v44, %v46
  %v48 = vmax.bf16 %v42, %v47
  %vm49 = vcmask 516096
  %vm50 = vsmask.f32 256
  %vm51 = vmand %vm49, %vm50
  %v52 = vld [vmem:[#allocation2] sm:$0x1]
  %v53 = vsel %vm51, 0, %v52
  %54 = vst [vmem:[#allocation2] sm:$0x1] %v53
  %vm55 = vsmask.f32 7938
  %vm56 = vmand %vm49, %vm55
  %v57 = vld [vmem:[#allocation2 + $0x4] sm:$0x1]
  %v58 = vsel %vm56, 0, %v57
  %59 = vst [vmem:[#allocation2 + $0x4] sm:$0x1] %v58
  %v61 = vshrl.u32 %v48, 16
  %v63 = vrot.slane %v61, 7
  %v64 = vshll.u32 %v48, 16
  %v66 = vor.u32 %v63, %v64
  %v67 = vrot.slane %v63, 4
  %vm70 = vcmask 519168
  %vm71 = vmand %vm70, %vm55
  %v72 = vld [vmem:[#allocation2] sm:$0xf]
  %v73 = vsel %vm71, %v66, %v72
  %74 = vst [vmem:[#allocation2] sm:$0xf] %v73
  %v75 = vld [vmem:[#allocation2 + $0x4] sm:$0x1]
  %v76 = vsel %vm51, %v67, %v75
  %77 = vst [vmem:[#allocation2 + $0x4] sm:$0x1] %v76
  %v78 = vld [vmem:[#allocation2] sm:$0xf]
  %v79 = vld [vmem:[%s1] sm:$0xf]
  %v80 = vld [vmem:[%s1 + $0x4] sm:$0xf]
  %v81 = vld [vmem:[%s1 + $0x8] sm:$0xf]
  %v82 = vld [vmem:[%s1 + $0xc] sm:$0xf]
  %v83 = vld [vmem:[%s1 + $0x10] sm:$0xf]
  %v84 = vld [vmem:[%s1 + $0x14] sm:$0xf]
  %v85 = vld [vmem:[%s1 + $0x18] sm:$0xf]
  %v86 = vld [vmem:[%s1 + $0x1c] sm:$0xf]
  %v87 = vld [vmem:[#allocation2 + $0x4] sm:$0x1]
  %s88 = scalar_lea.vmem %s1, 32
  %v89 = vld [vmem:[%s88] sm:$0xf]
  %v90 = vld [vmem:[%s88 + $0x4] sm:$0xf]
  %v91 = vld [vmem:[%s88 + $0x8] sm:$0xf]
  %v92 = vld [vmem:[%s88 + $0xc] sm:$0xf]
  %v93 = vld [vmem:[%s88 + $0x10] sm:$0xf]
  %v94 = vld [vmem:[%s88 + $0x14] sm:$0xf]
  %v95 = vld [vmem:[%s88 + $0x18] sm:$0xf]
  %v96 = vld [vmem:[%s88 + $0x1c] sm:$0xf]
  %v99 = vunpack.c.l.b16 %v78
  %v100 = vunpack.c.l.b16 %v87
  %v101 = vpack.c.b16 %v100, %v99
  %v103 = vshrl.u32 %v101, 16
  %v105 = vshll.u32 %v101, 16
  %v107 = vrot.slane %v105, 1
  %v108 = vor.u32 %v103, %v107
  %v117 = vunpack.c.l.b16 %v89
  %v118 = vunpack.c.l.b16 %v90
  %v119 = vunpack.c.l.b16 %v91
  %v120 = vunpack.c.l.b16 %v92
  %v121 = vunpack.c.l.b16 %v93
  %v122 = vunpack.c.l.b16 %v94
  %v123 = vunpack.c.l.b16 %v95
  %v124 = vunpack.c.l.b16 %v96
  %v125 = vpack.c.b16 %v118, %v117
  %v126 = vpack.c.b16 %v120, %v119
  %v127 = vpack.c.b16 %v122, %v121
  %v128 = vpack.c.b16 %v124, %v123
  %vm133 = vcmask 523264
  %v135 = vsel %vm133, %v108, 0
  %137 = vmatprep.subr.bf16.mxu0 0
  %138 = vmatpush1.bf16.msra.mxu0 %v125
  %139 = vmatprep.subr.bf16.mxu0 0
  %140 = vmatpush1.bf16.msra.mxu0 %v126
  %141 = vmatprep.subr.bf16.mxu0 0
  %142 = vmatpush1.bf16.msra.mxu0 %v127
  %143 = vmatprep.subr.bf16.mxu0 0
  %144 = vmatpush1.bf16.msra.mxu0 %v128
  %145 = vmatprep.subr.bf16.mxu0 0
  %146 = vmatpush1.bf16.msra.mxu0 0
  %147 = vmatprep.subr.bf16.mxu0 0
  %148 = vmatpush1.bf16.msra.mxu0 0
  %149 = vmatprep.subr.bf16.mxu0 0
  %150 = vmatpush1.bf16.msra.mxu0 0
  %151 = vmatprep.subr.bf16.mxu0 0
  %152 = vmatpush1.bf16.msra.mxu0 0
  %153 = vmatprep.subr.bf16.mxu0 0
  %154 = vmatpush1.bf16.msra.mxu0 0
  %155 = vmatprep.subr.bf16.mxu0 0
  %156 = vmatpush1.bf16.msra.mxu0 0
  %157 = vmatprep.subr.bf16.mxu0 0
  %158 = vmatpush1.bf16.msra.mxu0 0
  %159 = vmatprep.subr.bf16.mxu0 0
  %160 = vmatpush1.bf16.msra.mxu0 0
  %161 = vmatprep.subr.bf16.mxu0 0
  %162 = vmatpush1.bf16.msra.mxu0 0
  %163 = vmatprep.subr.bf16.mxu0 0
  %164 = vmatpush1.bf16.msra.mxu0 0
  %165 = vmatprep.subr.bf16.mxu0 0
  %166 = vmatpush1.bf16.msra.mxu0 0
  %167 = vmatprep.subr.bf16.mxu0 0
  %168 = vmatpush1.bf16.msra.mxu0 0
  %169 = vmatprep.mubr.bf16.mxu0 0
  %170 = vmatmul.mubr.bf16.gmra.mrb[0].mxu0 %v135
  %v171 = vpop.f32.mrb[0].mxu0
  %v172 = vadd.f32 0.0, %v171
  %v173 = vpop.f32.mrb[0].mxu0
  %v174 = vpop.f32.mrb[0].mxu0
  %v175 = vpop.f32.mrb[0].mxu0
  %176 = vdwg.mxu0
  %v185 = vunpack.c.l.b16 %v79
  %v186 = vunpack.c.l.b16 %v80
  %v187 = vunpack.c.l.b16 %v81
  %v188 = vunpack.c.l.b16 %v82
  %v189 = vunpack.c.l.b16 %v83
  %v190 = vunpack.c.l.b16 %v84
  %v191 = vunpack.c.l.b16 %v85
  %v192 = vunpack.c.l.b16 %v86
  %v193 = vpack.c.b16 %v186, %v185
  %v194 = vpack.c.b16 %v188, %v187
  %v195 = vpack.c.b16 %v190, %v189
  %v196 = vpack.c.b16 %v192, %v191
  %v202 = vsel %vm133, %v78, 0
  %204 = vmatprep.subr.bf16.mxu0 0
  %205 = vmatpush1.bf16.msra.mxu0 %v193
  %206 = vmatprep.subr.bf16.mxu0 0
  %207 = vmatpush1.bf16.msra.mxu0 %v194
  %208 = vmatprep.subr.bf16.mxu0 0
  %209 = vmatpush1.bf16.msra.mxu0 %v195
  %210 = vmatprep.subr.bf16.mxu0 0
  %211 = vmatpush1.bf16.msra.mxu0 %v196
  %212 = vmatprep.subr.bf16.mxu0 0
  %213 = vmatpush1.bf16.msra.mxu0 0
  %214 = vmatprep.subr.bf16.mxu0 0
  %215 = vmatpush1.bf16.msra.mxu0 0
  %216 = vmatprep.subr.bf16.mxu0 0
  %217 = vmatpush1.bf16.msra.mxu0 0
  %218 = vmatprep.subr.bf16.mxu0 0
  %219 = vmatpush1.bf16.msra.mxu0 0
  %220 = vmatprep.subr.bf16.mxu0 0
  %221 = vmatpush1.bf16.msra.mxu0 0
  %222 = vmatprep.subr.bf16.mxu0 0
  %223 = vmatpush1.bf16.msra.mxu0 0
  %224 = vmatprep.subr.bf16.mxu0 0
  %225 = vmatpush1.bf16.msra.mxu0 0
  %226 = vmatprep.subr.bf16.mxu0 0
  %227 = vmatpush1.bf16.msra.mxu0 0
  %228 = vmatprep.subr.bf16.mxu0 0
  %229 = vmatpush1.bf16.msra.mxu0 0
  %230 = vmatprep.subr.bf16.mxu0 0
  %231 = vmatpush1.bf16.msra.mxu0 0
  %232 = vmatprep.subr.bf16.mxu0 0
  %233 = vmatpush1.bf16.msra.mxu0 0
  %234 = vmatprep.subr.bf16.mxu0 0
  %235 = vmatpush1.bf16.msra.mxu0 0
  %236 = vmatprep.mubr.bf16.mxu0 0
  %237 = vmatmul.mubr.bf16.gmra.mrb[0].mxu0 %v202
  %v238 = vpop.f32.mrb[0].mxu0
  %v239 = vadd.f32 %v172, %v238
  %v240 = vpop.f32.mrb[0].mxu0
  %v241 = vpop.f32.mrb[0].mxu0
  %v242 = vpop.f32.mrb[0].mxu0
  %243 = vdwg.mxu0
  %v244 = vld [vmem:[#allocation2] sm:$0xe]
  %s245 = scalar_lea.vmem %s1, 64
  %v246 = vld [vmem:[%s245] sm:$0xf]
  %v247 = vld [vmem:[%s245 + $0x4] sm:$0xf]
  %v248 = vld [vmem:[%s245 + $0x8] sm:$0xf]
  %v249 = vld [vmem:[%s245 + $0xc] sm:$0xf]
  %v250 = vld [vmem:[%s245 + $0x10] sm:$0xf]
  %v251 = vld [vmem:[%s245 + $0x14] sm:$0xf]
  %v252 = vld [vmem:[%s245 + $0x18] sm:$0xf]
  %v253 = vld [vmem:[%s245 + $0x1c] sm:$0xf]
  %v255 = vunpack.c.l.b16 %v244
  %v256 = vpack.c.b16 %v100, %v255
  %v257 = vrot.slane %v256, 1
  %v266 = vunpack.c.l.b16 %v246
  %v267 = vunpack.c.l.b16 %v247
  %v268 = vunpack.c.l.b16 %v248
  %v269 = vunpack.c.l.b16 %v249
  %v270 = vunpack.c.l.b16 %v250
  %v271 = vunpack.c.l.b16 %v251
  %v272 = vunpack.c.l.b16 %v252
  %v273 = vunpack.c.l.b16 %v253
  %v274 = vpack.c.b16 %v267, %v266
  %v275 = vpack.c.b16 %v269, %v268
  %v276 = vpack.c.b16 %v271, %v270
  %v277 = vpack.c.b16 %v273, %v272
  %v283 = vsel %vm133, %v257, 0
  %285 = vmatprep.subr.bf16.mxu0 0
  %286 = vmatpush1.bf16.msra.mxu0 %v274
  %287 = vmatprep.subr.bf16.mxu0 0
  %288 = vmatpush1.bf16.msra.mxu0 %v275
  %289 = vmatprep.subr.bf16.mxu0 0
  %290 = vmatpush1.bf16.msra.mxu0 %v276
  %291 = vmatprep.subr.bf16.mxu0 0
  %292 = vmatpush1.bf16.msra.mxu0 %v277
  %293 = vmatprep.subr.bf16.mxu0 0
  %294 = vmatpush1.bf16.msra.mxu0 0
  %295 = vmatprep.subr.bf16.mxu0 0
  %296 = vmatpush1.bf16.msra.mxu0 0
  %297 = vmatprep.subr.bf16.mxu0 0
  %298 = vmatpush1.bf16.msra.mxu0 0
  %299 = vmatprep.subr.bf16.mxu0 0
  %300 = vmatpush1.bf16.msra.mxu0 0
  %301 = vmatprep.subr.bf16.mxu0 0
  %302 = vmatpush1.bf16.msra.mxu0 0
  %303 = vmatprep.subr.bf16.mxu0 0
  %304 = vmatpush1.bf16.msra.mxu0 0
  %305 = vmatprep.subr.bf16.mxu0 0
  %306 = vmatpush1.bf16.msra.mxu0 0
  %307 = vmatprep.subr.bf16.mxu0 0
  %308 = vmatpush1.bf16.msra.mxu0 0
  %309 = vmatprep.subr.bf16.mxu0 0
  %310 = vmatpush1.bf16.msra.mxu0 0
  %311 = vmatprep.subr.bf16.mxu0 0
  %312 = vmatpush1.bf16.msra.mxu0 0
  %313 = vmatprep.subr.bf16.mxu0 0
  %314 = vmatpush1.bf16.msra.mxu0 0
  %315 = vmatprep.subr.bf16.mxu0 0
  %316 = vmatpush1.bf16.msra.mxu0 0
  %317 = vmatprep.mubr.bf16.mxu0 0
  %318 = vmatmul.mubr.bf16.gmra.mrb[0].mxu0 %v283
  %v319 = vpop.f32.mrb[0].mxu0
  %v320 = vadd.f32 0.0, %v319
  %v321 = vpop.f32.mrb[0].mxu0
  %v322 = vpop.f32.mrb[0].mxu0
  %v323 = vpop.f32.mrb[0].mxu0
  %324 = vdwg.mxu0
  %v325 = vadd.f32 %v239, %v320
  %v326 = vrot.slane %v325, 4
  %v327 = vadd.f32 %v325, %v326
  %v328 = vrot.slane %v327, 2
  %v329 = vadd.f32 %v327, %v328
  %v330 = vrot.slane %v329, 1
  %v331 = vadd.f32 %v329, %v330
  %v332 = vmul.f32 %v325, %v325
  %v333 = vrot.slane %v332, 4
  %v334 = vadd.f32 %v332, %v333
  %v335 = vrot.slane %v334, 2
  %v336 = vadd.f32 %v334, %v335
  %v337 = vrot.slane %v336, 1
  %v338 = vadd.f32 %v336, %v337
  %vm339 = vcmask 1040384
  %v340 = vsel %vm339, %v331, %v338
  %v341 = vld [vmem:[%s4] sm:$0xff]
  %v342 = vld [vmem:[%s4 + $0x8] sm:$0xff]
  %v343 = vld [vmem:[%s4 + $0x10] sm:$0xff]
  %v344 = vld [vmem:[%s4 + $0x18] sm:$0xff]
  %v345 = vld [vmem:[%s4 + $0x20] sm:$0xff]
  %v346 = vld [vmem:[%s4 + $0x28] sm:$0xff]
  %v347 = vld [vmem:[%s4 + $0x30] sm:$0xff]
  %v348 = vld [vmem:[%s4 + $0x38] sm:$0xff]
  %v349 = vld [vmem:[%s4 + $0x40] sm:$0xff]
  %v350 = vld [vmem:[%s4 + $0x48] sm:$0xff]
  %v351 = vld [vmem:[%s4 + $0x50] sm:$0xff]
  %v352 = vld [vmem:[%s4 + $0x58] sm:$0xff]
  %v353 = vld [vmem:[%s4 + $0x60] sm:$0xff]
  %v354 = vld [vmem:[%s4 + $0x68] sm:$0xff]
  %v355 = vld [vmem:[%s4 + $0x70] sm:$0xff]
  %v356 = vld [vmem:[%s4 + $0x78] sm:$0xff]
  %357 = vmatprep.subr.mxu0 0.0
  %v358 = vand.u32 %v341, 4294901760
  %359 = vmatpush1.msra.mxu0 %v358
  %360 = vmatprep.subr.mxu0 0.0
  %v361 = vand.u32 %v342, 4294901760
  %362 = vmatpush1.msra.mxu0 %v361
  %363 = vmatprep.subr.mxu0 0.0
  %v364 = vand.u32 %v343, 4294901760
  %365 = vmatpush1.msra.mxu0 %v364
  %366 = vmatprep.subr.mxu0 0.0
  %v367 = vand.u32 %v344, 4294901760
  %368 = vmatpush1.msra.mxu0 %v367
  %369 = vmatprep.subr.mxu0 0.0
  %v370 = vand.u32 %v345, 4294901760
  %371 = vmatpush1.msra.mxu0 %v370
  %372 = vmatprep.subr.mxu0 0.0
  %v373 = vand.u32 %v346, 4294901760
  %374 = vmatpush1.msra.mxu0 %v373
  %375 = vmatprep.subr.mxu0 0.0
  %v376 = vand.u32 %v347, 4294901760
  %377 = vmatpush1.msra.mxu0 %v376
  %378 = vmatprep.subr.mxu0 0.0
  %v379 = vand.u32 %v348, 4294901760
  %380 = vmatpush1.msra.mxu0 %v379
  %381 = vmatprep.subr.mxu0 0.0
  %v382 = vand.u32 %v349, 4294901760
  %383 = vmatpush1.msra.mxu0 %v382
  %384 = vmatprep.subr.mxu0 0.0
  %v385 = vand.u32 %v350, 4294901760
  %386 = vmatpush1.msra.mxu0 %v385
  %387 = vmatprep.subr.mxu0 0.0
  %v388 = vand.u32 %v351, 4294901760
  %389 = vmatpush1.msra.mxu0 %v388
  %390 = vmatprep.subr.mxu0 0.0
  %v391 = vand.u32 %v352, 4294901760
  %392 = vmatpush1.msra.mxu0 %v391
  %393 = vmatprep.subr.mxu0 0.0
  %v394 = vand.u32 %v353, 4294901760
  %395 = vmatpush1.msra.mxu0 %v394
  %396 = vmatprep.subr.mxu0 0.0
  %v397 = vand.u32 %v354, 4294901760
  %398 = vmatpush1.msra.mxu0 %v397
  %399 = vmatprep.subr.mxu0 0.0
  %v400 = vand.u32 %v355, 4294901760
  %401 = vmatpush1.msra.mxu0 %v400
  %402 = vmatprep.subr.mxu0 0.0
  %v403 = vand.u32 %v356, 4294901760
  %404 = vmatpush1.msra.mxu0 %v403
  %405 = vmatprep.subr.mxu0 0.0
  %406 = vmatpush1.msra.mxu0 0.0
  %407 = vmatprep.subr.mxu0 0.0
  %408 = vmatpush1.msra.mxu0 0.0
  %409 = vmatprep.subr.mxu0 0.0
  %410 = vmatpush1.msra.mxu0 0.0
  %411 = vmatprep.subr.mxu0 0.0
  %412 = vmatpush1.msra.mxu0 0.0
  %413 = vmatprep.subr.mxu0 0.0
  %414 = vmatpush1.msra.mxu0 0.0
  %415 = vmatprep.subr.mxu0 0.0
  %416 = vmatpush1.msra.mxu0 0.0
  %417 = vmatprep.subr.mxu0 0.0
  %418 = vmatpush1.msra.mxu0 0.0
  %419 = vmatprep.subr.mxu0 0.0
  %420 = vmatpush1.msra.mxu0 0.0
  %421 = vmatprep.subr.mxu0 0.0
  %422 = vmatpush1.msra.mxu0 0.0
  %423 = vmatprep.subr.mxu0 0.0
  %424 = vmatpush1.msra.mxu0 0.0
  %425 = vmatprep.subr.mxu0 0.0
  %426 = vmatpush1.msra.mxu0 0.0
  %427 = vmatprep.subr.mxu0 0.0
  %428 = vmatpush1.msra.mxu0 0.0
  %429 = vmatprep.subr.mxu0 0.0
  %430 = vmatpush1.msra.mxu0 0.0
  %431 = vmatprep.subr.mxu0 0.0
  %432 = vmatpush1.msra.mxu0 0.0
  %433 = vmatprep.subr.mxu0 0.0
  %434 = vmatpush1.msra.mxu0 0.0
  %435 = vmatprep.subr.mxu0 0.0
  %436 = vmatpush1.msra.mxu0 0.0
  %437 = vmatprep.mubr.f32.mxu0 0.0
  %v438 = vand.u32 %v340, 4294901760
  %v439 = vsub.f32 %v340, %v438
  %v440 = vand.u32 %v439, 4294901760
  %v441 = vsub.f32 %v439, %v440
  %v442 = vand.u32 %v441, 4294901760
  %443 = vmatmul.mubr.f32.gmra.mrb[0].mxu0 %v442
  %v444 = vpop.f32.mrb[0].mxu0
  %v445 = vadd.f32 0.0, %v444
  %v446 = vpop.f32.mrb[0].mxu0
  %447 = vdwg.mxu0
  %448 = vmatprep.subr.mxu0 0.0
  %v449 = vand.u32 %v341, 4294901760
  %v450 = vsub.f32 %v341, %v449
  %v451 = vand.u32 %v450, 4294901760
  %v452 = vsub.f32 %v450, %v451
  %v453 = vand.u32 %v452, 4294901760
  %454 = vmatpush1.msra.mxu0 %v453
  %455 = vmatprep.subr.mxu0 0.0
  %v456 = vand.u32 %v342, 4294901760
  %v457 = vsub.f32 %v342, %v456
  %v458 = vand.u32 %v457, 4294901760
  %v459 = vsub.f32 %v457, %v458
  %v460 = vand.u32 %v459, 4294901760
  %461 = vmatpush1.msra.mxu0 %v460
  %462 = vmatprep.subr.mxu0 0.0
  %v463 = vand.u32 %v343, 4294901760
  %v464 = vsub.f32 %v343, %v463
  %v465 = vand.u32 %v464, 4294901760
  %v466 = vsub.f32 %v464, %v465
  %v467 = vand.u32 %v466, 4294901760
  %468 = vmatpush1.msra.mxu0 %v467
  %469 = vmatprep.subr.mxu0 0.0
  %v470 = vand.u32 %v344, 4294901760
  %v471 = vsub.f32 %v344, %v470
  %v472 = vand.u32 %v471, 4294901760
  %v473 = vsub.f32 %v471, %v472
  %v474 = vand.u32 %v473, 4294901760
  %475 = vmatpush1.msra.mxu0 %v474
  %476 = vmatprep.subr.mxu0 0.0
  %v477 = vand.u32 %v345, 4294901760
  %v478 = vsub.f32 %v345, %v477
  %v479 = vand.u32 %v478, 4294901760
  %v480 = vsub.f32 %v478, %v479
  %v481 = vand.u32 %v480, 4294901760
  %482 = vmatpush1.msra.mxu0 %v481
  %483 = vmatprep.subr.mxu0 0.0
  %v484 = vand.u32 %v346, 4294901760
  %v485 = vsub.f32 %v346, %v484
  %v486 = vand.u32 %v485, 4294901760
  %v487 = vsub.f32 %v485, %v486
  %v488 = vand.u32 %v487, 4294901760
  %489 = vmatpush1.msra.mxu0 %v488
  %490 = vmatprep.subr.mxu0 0.0
  %v491 = vand.u32 %v347, 4294901760
  %v492 = vsub.f32 %v347, %v491
  %v493 = vand.u32 %v492, 4294901760
  %v494 = vsub.f32 %v492, %v493
  %v495 = vand.u32 %v494, 4294901760
  %496 = vmatpush1.msra.mxu0 %v495
  %497 = vmatprep.subr.mxu0 0.0
  %v498 = vand.u32 %v348, 4294901760
  %v499 = vsub.f32 %v348, %v498
  %v500 = vand.u32 %v499, 4294901760
  %v501 = vsub.f32 %v499, %v500
  %v502 = vand.u32 %v501, 4294901760
  %503 = vmatpush1.msra.mxu0 %v502
  %504 = vmatprep.subr.mxu0 0.0
  %v505 = vand.u32 %v349, 4294901760
  %v506 = vsub.f32 %v349, %v505
  %v507 = vand.u32 %v506, 4294901760
  %v508 = vsub.f32 %v506, %v507
  %v509 = vand.u32 %v508, 4294901760
  %510 = vmatpush1.msra.mxu0 %v509
  %511 = vmatprep.subr.mxu0 0.0
  %v512 = vand.u32 %v350, 4294901760
  %v513 = vsub.f32 %v350, %v512
  %v514 = vand.u32 %v513, 4294901760
  %v515 = vsub.f32 %v513, %v514
  %v516 = vand.u32 %v515, 4294901760
  %517 = vmatpush1.msra.mxu0 %v516
  %518 = vmatprep.subr.mxu0 0.0
  %v519 = vand.u32 %v351, 4294901760
  %v520 = vsub.f32 %v351, %v519
  %v521 = vand.u32 %v520, 4294901760
  %v522 = vsub.f32 %v520, %v521
  %v523 = vand.u32 %v522, 4294901760
  %524 = vmatpush1.msra.mxu0 %v523
  %525 = vmatprep.subr.mxu0 0.0
  %v526 = vand.u32 %v352, 4294901760
  %v527 = vsub.f32 %v352, %v526
  %v528 = vand.u32 %v527, 4294901760
  %v529 = vsub.f32 %v527, %v528
  %v530 = vand.u32 %v529, 4294901760
  %531 = vmatpush1.msra.mxu0 %v530
  %532 = vmatprep.subr.mxu0 0.0
  %v533 = vand.u32 %v353, 4294901760
  %v534 = vsub.f32 %v353, %v533
  %v535 = vand.u32 %v534, 4294901760
  %v536 = vsub.f32 %v534, %v535
  %v537 = vand.u32 %v536, 4294901760
  %538 = vmatpush1.msra.mxu0 %v537
  %539 = vmatprep.subr.mxu0 0.0
  %v540 = vand.u32 %v354, 4294901760
  %v541 = vsub.f32 %v354, %v540
  %v542 = vand.u32 %v541, 4294901760
  %v543 = vsub.f32 %v541, %v542
  %v544 = vand.u32 %v543, 4294901760
  %545 = vmatpush1.msra.mxu0 %v544
  %546 = vmatprep.subr.mxu0 0.0
  %v547 = vand.u32 %v355, 4294901760
  %v548 = vsub.f32 %v355, %v547
  %v549 = vand.u32 %v548, 4294901760
  %v550 = vsub.f32 %v548, %v549
  %v551 = vand.u32 %v550, 4294901760
  %552 = vmatpush1.msra.mxu0 %v551
  %553 = vmatprep.subr.mxu0 0.0
  %v554 = vand.u32 %v356, 4294901760
  %v555 = vsub.f32 %v356, %v554
  %v556 = vand.u32 %v555, 4294901760
  %v557 = vsub.f32 %v555, %v556
  %v558 = vand.u32 %v557, 4294901760
  %559 = vmatpush1.msra.mxu0 %v558
  %560 = vmatprep.subr.mxu0 0.0
  %561 = vmatpush1.msra.mxu0 0.0
  %562 = vmatprep.subr.mxu0 0.0
  %563 = vmatpush1.msra.mxu0 0.0
  %564 = vmatprep.subr.mxu0 0.0
  %565 = vmatpush1.msra.mxu0 0.0
  %566 = vmatprep.subr.mxu0 0.0
  %567 = vmatpush1.msra.mxu0 0.0
  %568 = vmatprep.subr.mxu0 0.0
  %569 = vmatpush1.msra.mxu0 0.0
  %570 = vmatprep.subr.mxu0 0.0
  %571 = vmatpush1.msra.mxu0 0.0
  %572 = vmatprep.subr.mxu0 0.0
  %573 = vmatpush1.msra.mxu0 0.0
  %574 = vmatprep.subr.mxu0 0.0
  %575 = vmatpush1.msra.mxu0 0.0
  %576 = vmatprep.subr.mxu0 0.0
  %577 = vmatpush1.msra.mxu0 0.0
  %578 = vmatprep.subr.mxu0 0.0
  %579 = vmatpush1.msra.mxu0 0.0
  %580 = vmatprep.subr.mxu0 0.0
  %581 = vmatpush1.msra.mxu0 0.0
  %582 = vmatprep.subr.mxu0 0.0
  %583 = vmatpush1.msra.mxu0 0.0
  %584 = vmatprep.subr.mxu0 0.0
  %585 = vmatpush1.msra.mxu0 0.0
  %586 = vmatprep.subr.mxu0 0.0
  %587 = vmatpush1.msra.mxu0 0.0
  %588 = vmatprep.subr.mxu0 0.0
  %589 = vmatpush1.msra.mxu0 0.0
  %590 = vmatprep.subr.mxu0 0.0
  %591 = vmatpush1.msra.mxu0 0.0
  %592 = vmatprep.mubr.f32.mxu0 0.0
  %v593 = vand.u32 %v340, 4294901760
  %594 = vmatmul.mubr.f32.gmra.mrb[0].mxu0 %v593
  %v595 = vpop.f32.mrb[0].mxu0
  %v596 = vadd.f32 %v445, %v595
  %v597 = vpop.f32.mrb[0].mxu0
  %598 = vdwg.mxu0
  %599 = vmatprep.subr.mxu0 0.0
  %v600 = vand.u32 %v341, 4294901760
  %v601 = vsub.f32 %v341, %v600
  %602 = vmatpush1.msra.mxu0 %v601
  %603 = vmatprep.subr.mxu0 0.0
  %v604 = vand.u32 %v342, 4294901760
  %v605 = vsub.f32 %v342, %v604
  %606 = vmatpush1.msra.mxu0 %v605
  %607 = vmatprep.subr.mxu0 0.0
  %v608 = vand.u32 %v343, 4294901760
  %v609 = vsub.f32 %v343, %v608
  %610 = vmatpush1.msra.mxu0 %v609
  %611 = vmatprep.subr.mxu0 0.0
  %v612 = vand.u32 %v344, 4294901760
  %v613 = vsub.f32 %v344, %v612
  %614 = vmatpush1.msra.mxu0 %v613
  %615 = vmatprep.subr.mxu0 0.0
  %v616 = vand.u32 %v345, 4294901760
  %v617 = vsub.f32 %v345, %v616
  %618 = vmatpush1.msra.mxu0 %v617
  %619 = vmatprep.subr.mxu0 0.0
  %v620 = vand.u32 %v346, 4294901760
  %v621 = vsub.f32 %v346, %v620
  %622 = vmatpush1.msra.mxu0 %v621
  %623 = vmatprep.subr.mxu0 0.0
  %v624 = vand.u32 %v347, 4294901760
  %v625 = vsub.f32 %v347, %v624
  %626 = vmatpush1.msra.mxu0 %v625
  %627 = vmatprep.subr.mxu0 0.0
  %v628 = vand.u32 %v348, 4294901760
  %v629 = vsub.f32 %v348, %v628
  %630 = vmatpush1.msra.mxu0 %v629
  %631 = vmatprep.subr.mxu0 0.0
  %v632 = vand.u32 %v349, 4294901760
  %v633 = vsub.f32 %v349, %v632
  %634 = vmatpush1.msra.mxu0 %v633
  %635 = vmatprep.subr.mxu0 0.0
  %v636 = vand.u32 %v350, 4294901760
  %v637 = vsub.f32 %v350, %v636
  %638 = vmatpush1.msra.mxu0 %v637
  %639 = vmatprep.subr.mxu0 0.0
  %v640 = vand.u32 %v351, 4294901760
  %v641 = vsub.f32 %v351, %v640
  %642 = vmatpush1.msra.mxu0 %v641
  %643 = vmatprep.subr.mxu0 0.0
  %v644 = vand.u32 %v352, 4294901760
  %v645 = vsub.f32 %v352, %v644
  %646 = vmatpush1.msra.mxu0 %v645
  %647 = vmatprep.subr.mxu0 0.0
  %v648 = vand.u32 %v353, 4294901760
  %v649 = vsub.f32 %v353, %v648
  %650 = vmatpush1.msra.mxu0 %v649
  %651 = vmatprep.subr.mxu0 0.0
  %v652 = vand.u32 %v354, 4294901760
  %v653 = vsub.f32 %v354, %v652
  %654 = vmatpush1.msra.mxu0 %v653
  %655 = vmatprep.subr.mxu0 0.0
  %v656 = vand.u32 %v355, 4294901760
  %v657 = vsub.f32 %v355, %v656
  %658 = vmatpush1.msra.mxu0 %v657
  %659 = vmatprep.subr.mxu0 0.0
  %v660 = vand.u32 %v356, 4294901760
  %v661 = vsub.f32 %v356, %v660
  %662 = vmatpush1.msra.mxu0 %v661
  %663 = vmatprep.subr.mxu0 0.0
  %664 = vmatpush1.msra.mxu0 0.0
  %665 = vmatprep.subr.mxu0 0.0
  %666 = vmatpush1.msra.mxu0 0.0
  %667 = vmatprep.subr.mxu0 0.0
  %668 = vmatpush1.msra.mxu0 0.0
  %669 = vmatprep.subr.mxu0 0.0
  %670 = vmatpush1.msra.mxu0 0.0
  %671 = vmatprep.subr.mxu0 0.0
  %672 = vmatpush1.msra.mxu0 0.0
  %673 = vmatprep.subr.mxu0 0.0
  %674 = vmatpush1.msra.mxu0 0.0
  %675 = vmatprep.subr.mxu0 0.0
  %676 = vmatpush1.msra.mxu0 0.0
  %677 = vmatprep.subr.mxu0 0.0
  %678 = vmatpush1.msra.mxu0 0.0
  %679 = vmatprep.subr.mxu0 0.0
  %680 = vmatpush1.msra.mxu0 0.0
  %681 = vmatprep.subr.mxu0 0.0
  %682 = vmatpush1.msra.mxu0 0.0
  %683 = vmatprep.subr.mxu0 0.0
  %684 = vmatpush1.msra.mxu0 0.0
  %685 = vmatprep.subr.mxu0 0.0
  %686 = vmatpush1.msra.mxu0 0.0
  %687 = vmatprep.subr.mxu0 0.0
  %688 = vmatpush1.msra.mxu0 0.0
  %689 = vmatprep.subr.mxu0 0.0
  %690 = vmatpush1.msra.mxu0 0.0
  %691 = vmatprep.subr.mxu0 0.0
  %692 = vmatpush1.msra.mxu0 0.0
  %693 = vmatprep.subr.mxu0 0.0
  %694 = vmatpush1.msra.mxu0 0.0
  %695 = vmatprep.mubr.f32.mxu0 0.0
  %v696 = vand.u32 %v340, 4294901760
  %v697 = vsub.f32 %v340, %v696
  %698 = vmatmul.mubr.f32.gmra.mrb[0].mxu0 %v697
  %v699 = vpop.f32.mrb[0].mxu0
  %v700 = vadd.f32 %v596, %v699
  %v701 = vpop.f32.mrb[0].mxu0
  %702 = vdwg.mxu0
  %703 = vmatprep.subr.mxu0 0.0
  %v704 = vand.u32 %v341, 4294901760
  %705 = vmatpush1.msra.mxu0 %v704
  %706 = vmatprep.subr.mxu0 0.0
  %v707 = vand.u32 %v342, 4294901760
  %708 = vmatpush1.msra.mxu0 %v707
  %709 = vmatprep.subr.mxu0 0.0
  %v710 = vand.u32 %v343, 4294901760
  %711 = vmatpush1.msra.mxu0 %v710
  %712 = vmatprep.subr.mxu0 0.0
  %v713 = vand.u32 %v344, 4294901760
  %714 = vmatpush1.msra.mxu0 %v713
  %715 = vmatprep.subr.mxu0 0.0
  %v716 = vand.u32 %v345, 4294901760
  %717 = vmatpush1.msra.mxu0 %v716
  %718 = vmatprep.subr.mxu0 0.0
  %v719 = vand.u32 %v346, 4294901760
  %720 = vmatpush1.msra.mxu0 %v719
  %721 = vmatprep.subr.mxu0 0.0
  %v722 = vand.u32 %v347, 4294901760
  %723 = vmatpush1.msra.mxu0 %v722
  %724 = vmatprep.subr.mxu0 0.0
  %v725 = vand.u32 %v348, 4294901760
  %726 = vmatpush1.msra.mxu0 %v725
  %727 = vmatprep.subr.mxu0 0.0
  %v728 = vand.u32 %v349, 4294901760
  %729 = vmatpush1.msra.mxu0 %v728
  %730 = vmatprep.subr.mxu0 0.0
  %v731 = vand.u32 %v350, 4294901760
  %732 = vmatpush1.msra.mxu0 %v731
  %733 = vmatprep.subr.mxu0 0.0
  %v734 = vand.u32 %v351, 4294901760
  %735 = vmatpush1.msra.mxu0 %v734
  %736 = vmatprep.subr.mxu0 0.0
  %v737 = vand.u32 %v352, 4294901760
  %738 = vmatpush1.msra.mxu0 %v737
  %739 = vmatprep.subr.mxu0 0.0
  %v740 = vand.u32 %v353, 4294901760
  %741 = vmatpush1.msra.mxu0 %v740
  %742 = vmatprep.subr.mxu0 0.0
  %v743 = vand.u32 %v354, 4294901760
  %744 = vmatpush1.msra.mxu0 %v743
  %745 = vmatprep.subr.mxu0 0.0
  %v746 = vand.u32 %v355, 4294901760
  %747 = vmatpush1.msra.mxu0 %v746
  %748 = vmatprep.subr.mxu0 0.0
  %v749 = vand.u32 %v356, 4294901760
  %750 = vmatpush1.msra.mxu0 %v749
  %751 = vmatprep.subr.mxu0 0.0
  %752 = vmatpush1.msra.mxu0 0.0
  %753 = vmatprep.subr.mxu0 0.0
  %754 = vmatpush1.msra.mxu0 0.0
  %755 = vmatprep.subr.mxu0 0.0
  %756 = vmatpush1.msra.mxu0 0.0
  %757 = vmatprep.subr.mxu0 0.0
  %758 = vmatpush1.msra.mxu0 0.0
  %759 = vmatprep.subr.mxu0 0.0
  %760 = vmatpush1.msra.mxu0 0.0
  %761 = vmatprep.subr.mxu0 0.0
  %762 = vmatpush1.msra.mxu0 0.0
  %763 = vmatprep.subr.mxu0 0.0
  %764 = vmatpush1.msra.mxu0 0.0
  %765 = vmatprep.subr.mxu0 0.0
  %766 = vmatpush1.msra.mxu0 0.0
  %767 = vmatprep.subr.mxu0 0.0
  %768 = vmatpush1.msra.mxu0 0.0
  %769 = vmatprep.subr.mxu0 0.0
  %770 = vmatpush1.msra.mxu0 0.0
  %771 = vmatprep.subr.mxu0 0.0
  %772 = vmatpush1.msra.mxu0 0.0
  %773 = vmatprep.subr.mxu0 0.0
  %774 = vmatpush1.msra.mxu0 0.0
  %775 = vmatprep.subr.mxu0 0.0
  %776 = vmatpush1.msra.mxu0 0.0
  %777 = vmatprep.subr.mxu0 0.0
  %778 = vmatpush1.msra.mxu0 0.0
  %779 = vmatprep.subr.mxu0 0.0
  %780 = vmatpush1.msra.mxu0 0.0
  %781 = vmatprep.subr.mxu0 0.0
  %782 = vmatpush1.msra.mxu0 0.0
  %783 = vmatprep.mubr.f32.mxu0 0.0
  %v784 = vand.u32 %v340, 4294901760
  %v785 = vsub.f32 %v340, %v784
  %v786 = vand.u32 %v785, 4294901760
  %787 = vmatmul.mubr.f32.gmra.mrb[0].mxu0 %v786
  %v788 = vpop.f32.mrb[0].mxu0
  %v789 = vadd.f32 %v700, %v788
  %v790 = vpop.f32.mrb[0].mxu0
  %791 = vdwg.mxu0
  %792 = vmatprep.subr.mxu0 0.0
  %v793 = vand.u32 %v341, 4294901760
  %v794 = vsub.f32 %v341, %v793
  %v795 = vand.u32 %v794, 4294901760
  %796 = vmatpush1.msra.mxu0 %v795
  %797 = vmatprep.subr.mxu0 0.0
  %v798 = vand.u32 %v342, 4294901760
  %v799 = vsub.f32 %v342, %v798
  %v800 = vand.u32 %v799, 4294901760
  %801 = vmatpush1.msra.mxu0 %v800
  %802 = vmatprep.subr.mxu0 0.0
  %v803 = vand.u32 %v343, 4294901760
  %v804 = vsub.f32 %v343, %v803
  %v805 = vand.u32 %v804, 4294901760
  %806 = vmatpush1.msra.mxu0 %v805
  %807 = vmatprep.subr.mxu0 0.0
  %v808 = vand.u32 %v344, 4294901760
  %v809 = vsub.f32 %v344, %v808
  %v810 = vand.u32 %v809, 4294901760
  %811 = vmatpush1.msra.mxu0 %v810
  %812 = vmatprep.subr.mxu0 0.0
  %v813 = vand.u32 %v345, 4294901760
  %v814 = vsub.f32 %v345, %v813
  %v815 = vand.u32 %v814, 4294901760
  %816 = vmatpush1.msra.mxu0 %v815
  %817 = vmatprep.subr.mxu0 0.0
  %v818 = vand.u32 %v346, 4294901760
  %v819 = vsub.f32 %v346, %v818
  %v820 = vand.u32 %v819, 4294901760
  %821 = vmatpush1.msra.mxu0 %v820
  %822 = vmatprep.subr.mxu0 0.0
  %v823 = vand.u32 %v347, 4294901760
  %v824 = vsub.f32 %v347, %v823
  %v825 = vand.u32 %v824, 4294901760
  %826 = vmatpush1.msra.mxu0 %v825
  %827 = vmatprep.subr.mxu0 0.0
  %v828 = vand.u32 %v348, 4294901760
  %v829 = vsub.f32 %v348, %v828
  %v830 = vand.u32 %v829, 4294901760
  %831 = vmatpush1.msra.mxu0 %v830
  %832 = vmatprep.subr.mxu0 0.0
  %v833 = vand.u32 %v349, 4294901760
  %v834 = vsub.f32 %v349, %v833
  %v835 = vand.u32 %v834, 4294901760
  %836 = vmatpush1.msra.mxu0 %v835
  %837 = vmatprep.subr.mxu0 0.0
  %v838 = vand.u32 %v350, 4294901760
  %v839 = vsub.f32 %v350, %v838
  %v840 = vand.u32 %v839, 4294901760
  %841 = vmatpush1.msra.mxu0 %v840
  %842 = vmatprep.subr.mxu0 0.0
  %v843 = vand.u32 %v351, 4294901760
  %v844 = vsub.f32 %v351, %v843
  %v845 = vand.u32 %v844, 4294901760
  %846 = vmatpush1.msra.mxu0 %v845
  %847 = vmatprep.subr.mxu0 0.0
  %v848 = vand.u32 %v352, 4294901760
  %v849 = vsub.f32 %v352, %v848
  %v850 = vand.u32 %v849, 4294901760
  %851 = vmatpush1.msra.mxu0 %v850
  %852 = vmatprep.subr.mxu0 0.0
  %v853 = vand.u32 %v353, 4294901760
  %v854 = vsub.f32 %v353, %v853
  %v855 = vand.u32 %v854, 4294901760
  %856 = vmatpush1.msra.mxu0 %v855
  %857 = vmatprep.subr.mxu0 0.0
  %v858 = vand.u32 %v354, 4294901760
  %v859 = vsub.f32 %v354, %v858
  %v860 = vand.u32 %v859, 4294901760
  %861 = vmatpush1.msra.mxu0 %v860
  %862 = vmatprep.subr.mxu0 0.0
  %v863 = vand.u32 %v355, 4294901760
  %v864 = vsub.f32 %v355, %v863
  %v865 = vand.u32 %v864, 4294901760
  %866 = vmatpush1.msra.mxu0 %v865
  %867 = vmatprep.subr.mxu0 0.0
  %v868 = vand.u32 %v356, 4294901760
  %v869 = vsub.f32 %v356, %v868
  %v870 = vand.u32 %v869, 4294901760
  %871 = vmatpush1.msra.mxu0 %v870
  %872 = vmatprep.subr.mxu0 0.0
  %873 = vmatpush1.msra.mxu0 0.0
  %874 = vmatprep.subr.mxu0 0.0
  %875 = vmatpush1.msra.mxu0 0.0
  %876 = vmatprep.subr.mxu0 0.0
  %877 = vmatpush1.msra.mxu0 0.0
  %878 = vmatprep.subr.mxu0 0.0
  %879 = vmatpush1.msra.mxu0 0.0
  %880 = vmatprep.subr.mxu0 0.0
  %881 = vmatpush1.msra.mxu0 0.0
  %882 = vmatprep.subr.mxu0 0.0
  %883 = vmatpush1.msra.mxu0 0.0
  %884 = vmatprep.subr.mxu0 0.0
  %885 = vmatpush1.msra.mxu0 0.0
  %886 = vmatprep.subr.mxu0 0.0
  %887 = vmatpush1.msra.mxu0 0.0
  %888 = vmatprep.subr.mxu0 0.0
  %889 = vmatpush1.msra.mxu0 0.0
  %890 = vmatprep.subr.mxu0 0.0
  %891 = vmatpush1.msra.mxu0 0.0
  %892 = vmatprep.subr.mxu0 0.0
  %893 = vmatpush1.msra.mxu0 0.0
  %894 = vmatprep.subr.mxu0 0.0
  %895 = vmatpush1.msra.mxu0 0.0
  %896 = vmatprep.subr.mxu0 0.0
  %897 = vmatpush1.msra.mxu0 0.0
  %898 = vmatprep.subr.mxu0 0.0
  %899 = vmatpush1.msra.mxu0 0.0
  %900 = vmatprep.subr.mxu0 0.0
  %901 = vmatpush1.msra.mxu0 0.0
  %902 = vmatprep.subr.mxu0 0.0
  %903 = vmatpush1.msra.mxu0 0.0
  %904 = vmatprep.mubr.f32.mxu0 0.0
  %v905 = vand.u32 %v340, 4294901760
  %906 = vmatmul.mubr.f32.gmra.mrb[0].mxu0 %v905
  %v907 = vpop.f32.mrb[0].mxu0
  %v908 = vadd.f32 %v789, %v907
  %v909 = vpop.f32.mrb[0].mxu0
  %910 = vdwg.mxu0
  %911 = vmatprep.subr.mxu0 0.0
  %v912 = vand.u32 %v341, 4294901760
  %913 = vmatpush1.msra.mxu0 %v912
  %914 = vmatprep.subr.mxu0 0.0
  %v915 = vand.u32 %v342, 4294901760
  %916 = vmatpush1.msra.mxu0 %v915
  %917 = vmatprep.subr.mxu0 0.0
  %v918 = vand.u32 %v343, 4294901760
  %919 = vmatpush1.msra.mxu0 %v918
  %920 = vmatprep.subr.mxu0 0.0
  %v921 = vand.u32 %v344, 4294901760
  %922 = vmatpush1.msra.mxu0 %v921
  %923 = vmatprep.subr.mxu0 0.0
  %v924 = vand.u32 %v345, 4294901760
  %925 = vmatpush1.msra.mxu0 %v924
  %926 = vmatprep.subr.mxu0 0.0
  %v927 = vand.u32 %v346, 4294901760
  %928 = vmatpush1.msra.mxu0 %v927
  %929 = vmatprep.subr.mxu0 0.0
  %v930 = vand.u32 %v347, 4294901760
  %931 = vmatpush1.msra.mxu0 %v930
  %932 = vmatprep.subr.mxu0 0.0
  %v933 = vand.u32 %v348, 4294901760
  %934 = vmatpush1.msra.mxu0 %v933
  %935 = vmatprep.subr.mxu0 0.0
  %v936 = vand.u32 %v349, 4294901760
  %937 = vmatpush1.msra.mxu0 %v936
  %938 = vmatprep.subr.mxu0 0.0
  %v939 = vand.u32 %v350, 4294901760
  %940 = vmatpush1.msra.mxu0 %v939
  %941 = vmatprep.subr.mxu0 0.0
  %v942 = vand.u32 %v351, 4294901760
  %943 = vmatpush1.msra.mxu0 %v942
  %944 = vmatprep.subr.mxu0 0.0
  %v945 = vand.u32 %v352, 4294901760
  %946 = vmatpush1.msra.mxu0 %v945
  %947 = vmatprep.subr.mxu0 0.0
  %v948 = vand.u32 %v353, 4294901760
  %949 = vmatpush1.msra.mxu0 %v948
  %950 = vmatprep.subr.mxu0 0.0
  %v951 = vand.u32 %v354, 4294901760
  %952 = vmatpush1.msra.mxu0 %v951
  %953 = vmatprep.subr.mxu0 0.0
  %v954 = vand.u32 %v355, 4294901760
  %955 = vmatpush1.msra.mxu0 %v954
  %956 = vmatprep.subr.mxu0 0.0
  %v957 = vand.u32 %v356, 4294901760
  %958 = vmatpush1.msra.mxu0 %v957
  %959 = vmatprep.subr.mxu0 0.0
  %960 = vmatpush1.msra.mxu0 0.0
  %961 = vmatprep.subr.mxu0 0.0
  %962 = vmatpush1.msra.mxu0 0.0
  %963 = vmatprep.subr.mxu0 0.0
  %964 = vmatpush1.msra.mxu0 0.0
  %965 = vmatprep.subr.mxu0 0.0
  %966 = vmatpush1.msra.mxu0 0.0
  %967 = vmatprep.subr.mxu0 0.0
  %968 = vmatpush1.msra.mxu0 0.0
  %969 = vmatprep.subr.mxu0 0.0
  %970 = vmatpush1.msra.mxu0 0.0
  %971 = vmatprep.subr.mxu0 0.0
  %972 = vmatpush1.msra.mxu0 0.0
  %973 = vmatprep.subr.mxu0 0.0
  %974 = vmatpush1.msra.mxu0 0.0
  %975 = vmatprep.subr.mxu0 0.0
  %976 = vmatpush1.msra.mxu0 0.0
  %977 = vmatprep.subr.mxu0 0.0
  %978 = vmatpush1.msra.mxu0 0.0
  %979 = vmatprep.subr.mxu0 0.0
  %980 = vmatpush1.msra.mxu0 0.0
  %981 = vmatprep.subr.mxu0 0.0
  %982 = vmatpush1.msra.mxu0 0.0
  %983 = vmatprep.subr.mxu0 0.0
  %984 = vmatpush1.msra.mxu0 0.0
  %985 = vmatprep.subr.mxu0 0.0
  %986 = vmatpush1.msra.mxu0 0.0
  %987 = vmatprep.subr.mxu0 0.0
  %988 = vmatpush1.msra.mxu0 0.0
  %989 = vmatprep.subr.mxu0 0.0
  %990 = vmatpush1.msra.mxu0 0.0
  %991 = vmatprep.mubr.f32.mxu0 0.0
  %v992 = vand.u32 %v340, 4294901760
  %993 = vmatmul.mubr.f32.gmra.mrb[0].mxu0 %v992
  %v994 = vpop.f32.mrb[0].mxu0
  %v995 = vadd.f32 %v908, %v994
  %v996 = vpop.f32.mrb[0].mxu0
  %997 = vdwg.mxu0
  %v998 = vmul.f32 %v995, 0.0078125
  %v999 = vmul.f32 %v998, %v998
  %v1001 = vrot.slane %v999, 7
  %v1003 = vsub.f32 %v998, %v1001
  %v1004 = vld [vmem:[%s2] sm:$0x1]
  %v1005 = vadd.f32 %v1003, 1e-05
  %v1006 = vrsqrt.pop %v1005
  %v1009 = vunpack.c.l.s4 1966171168
  %v1010 = vunpack.c.0.s8 %v1009
  %v1011 = vlaneseq
  %v1012 = vshrl.u32 %v1011, 7
  %v1013 = vsub.s32 %v1010, %v1012
  %v1014 = vrot.slane %v1006, %v1013
  %v1015 = vcombine.high %v1014, %v1014
  %v1017 = vunpack.c.l.s4 1966171168
  %v1018 = vunpack.c.0.s8 %v1017
  %v1019 = vlaneseq
  %v1020 = vshrl.u32 %v1019, 7
  %v1021 = vsub.s32 %v1018, %v1020
  %v1022 = vrot.slane %v1015, %v1021
  %v1024 = vmul.f32 %v1004, %v1022
  %v1025 = vld [vmem:[%s3] sm:$0x1]
  %v1026 = vmul.f32 %v998, %v1024
  %v1027 = vsub.f32 %v1025, %v1026
  %v1029 = vlaneseq
  %v1030 = vshrl.u32 %v1029, 7
  %v1031 = vsub.s32 0, %v1030
  %v1032 = vrot.slane %v1027, %v1031
  %v1034 = vsel %vm339, %v1024, %v1032
  %v1035 = vld [vmem:[%s5] sm:$0xff]
  %vm1036 = vcmask 64512
  %v1038 = vsel %vm1036, %v1034, 0
  %1040 = vmatprep.subr.mxu0 0.0
  %v1041 = vand.u32 %v1035, 4294901760
  %1042 = vmatpush1.msra.mxu0 %v1041
  %1043 = vmatprep.subr.mxu0 0.0
  %1044 = vmatpush1.msra.mxu0 0.0
  %1045 = vmatprep.subr.mxu0 0.0
  %1046 = vmatpush1.msra.mxu0 0.0
  %1047 = vmatprep.subr.mxu0 0.0
  %1048 = vmatpush1.msra.mxu0 0.0
  %1049 = vmatprep.subr.mxu0 0.0
  %1050 = vmatpush1.msra.mxu0 0.0
  %1051 = vmatprep.subr.mxu0 0.0
  %1052 = vmatpush1.msra.mxu0 0.0
  %1053 = vmatprep.subr.mxu0 0.0
  %1054 = vmatpush1.msra.mxu0 0.0
  %1055 = vmatprep.subr.mxu0 0.0
  %1056 = vmatpush1.msra.mxu0 0.0
  %1057 = vmatprep.subr.mxu0 0.0
  %1058 = vmatpush1.msra.mxu0 0.0
  %1059 = vmatprep.subr.mxu0 0.0
  %1060 = vmatpush1.msra.mxu0 0.0
  %1061 = vmatprep.subr.mxu0 0.0
  %1062 = vmatpush1.msra.mxu0 0.0
  %1063 = vmatprep.subr.mxu0 0.0
  %1064 = vmatpush1.msra.mxu0 0.0
  %1065 = vmatprep.subr.mxu0 0.0
  %1066 = vmatpush1.msra.mxu0 0.0
  %1067 = vmatprep.subr.mxu0 0.0
  %1068 = vmatpush1.msra.mxu0 0.0
  %1069 = vmatprep.subr.mxu0 0.0
  %1070 = vmatpush1.msra.mxu0 0.0
  %1071 = vmatprep.subr.mxu0 0.0
  %1072 = vmatpush1.msra.mxu0 0.0
  %1073 = vmatprep.subr.mxu0 0.0
  %1074 = vmatpush1.msra.mxu0 0.0
  %1075 = vmatprep.subr.mxu0 0.0
  %1076 = vmatpush1.msra.mxu0 0.0
  %1077 = vmatprep.subr.mxu0 0.0
  %1078 = vmatpush1.msra.mxu0 0.0
  %1079 = vmatprep.subr.mxu0 0.0
  %1080 = vmatpush1.msra.mxu0 0.0
  %1081 = vmatprep.subr.mxu0 0.0
  %1082 = vmatpush1.msra.mxu0 0.0
  %1083 = vmatprep.subr.mxu0 0.0
  %1084 = vmatpush1.msra.mxu0 0.0
  %1085 = vmatprep.subr.mxu0 0.0
  %1086 = vmatpush1.msra.mxu0 0.0
  %1087 = vmatprep.subr.mxu0 0.0
  %1088 = vmatpush1.msra.mxu0 0.0
  %1089 = vmatprep.subr.mxu0 0.0
  %1090 = vmatpush1.msra.mxu0 0.0
  %1091 = vmatprep.subr.mxu0 0.0
  %1092 = vmatpush1.msra.mxu0 0.0
  %1093 = vmatprep.subr.mxu0 0.0
  %1094 = vmatpush1.msra.mxu0 0.0
  %1095 = vmatprep.subr.mxu0 0.0
  %1096 = vmatpush1.msra.mxu0 0.0
  %1097 = vmatprep.subr.mxu0 0.0
  %1098 = vmatpush1.msra.mxu0 0.0
  %1099 = vmatprep.subr.mxu0 0.0
  %1100 = vmatpush1.msra.mxu0 0.0
  %1101 = vmatprep.subr.mxu0 0.0
  %1102 = vmatpush1.msra.mxu0 0.0
  %1103 = vmatprep.subr.mxu0 0.0
  %1104 = vmatpush1.msra.mxu0 0.0
  %1105 = vmatprep.mubr.f32.mxu0 0.0
  %v1106 = vand.u32 %v1038, 4294901760
  %v1107 = vsub.f32 %v1038, %v1106
  %v1108 = vand.u32 %v1107, 4294901760
  %v1109 = vsub.f32 %v1107, %v1108
  %v1110 = vand.u32 %v1109, 4294901760
  %1111 = vmatmul.mubr.f32.gmra.mrb[0].mxu0 %v1110
  %v1112 = vpop.f32.mrb[0].mxu0
  %v1113 = vadd.f32 0.0, %v1112
  %v1114 = vpop.f32.mrb[0].mxu0
  %1115 = vdwg.mxu0
  %1116 = vmatprep.subr.mxu0 0.0
  %v1117 = vand.u32 %v1035, 4294901760
  %v1118 = vsub.f32 %v1035, %v1117
  %v1119 = vand.u32 %v1118, 4294901760
  %v1120 = vsub.f32 %v1118, %v1119
  %v1121 = vand.u32 %v1120, 4294901760
  %1122 = vmatpush1.msra.mxu0 %v1121
  %1123 = vmatprep.subr.mxu0 0.0
  %1124 = vmatpush1.msra.mxu0 0.0
  %1125 = vmatprep.subr.mxu0 0.0
  %1126 = vmatpush1.msra.mxu0 0.0
  %1127 = vmatprep.subr.mxu0 0.0
  %1128 = vmatpush1.msra.mxu0 0.0
  %1129 = vmatprep.subr.mxu0 0.0
  %1130 = vmatpush1.msra.mxu0 0.0
  %1131 = vmatprep.subr.mxu0 0.0
  %1132 = vmatpush1.msra.mxu0 0.0
  %1133 = vmatprep.subr.mxu0 0.0
  %1134 = vmatpush1.msra.mxu0 0.0
  %1135 = vmatprep.subr.mxu0 0.0
  %1136 = vmatpush1.msra.mxu0 0.0
  %1137 = vmatprep.subr.mxu0 0.0
  %1138 = vmatpush1.msra.mxu0 0.0
  %1139 = vmatprep.subr.mxu0 0.0
  %1140 = vmatpush1.msra.mxu0 0.0
  %1141 = vmatprep.subr.mxu0 0.0
  %1142 = vmatpush1.msra.mxu0 0.0
  %1143 = vmatprep.subr.mxu0 0.0
  %1144 = vmatpush1.msra.mxu0 0.0
  %1145 = vmatprep.subr.mxu0 0.0
  %1146 = vmatpush1.msra.mxu0 0.0
  %1147 = vmatprep.subr.mxu0 0.0
  %1148 = vmatpush1.msra.mxu0 0.0
  %1149 = vmatprep.subr.mxu0 0.0
  %1150 = vmatpush1.msra.mxu0 0.0
  %1151 = vmatprep.subr.mxu0 0.0
  %1152 = vmatpush1.msra.mxu0 0.0
  %1153 = vmatprep.subr.mxu0 0.0
  %1154 = vmatpush1.msra.mxu0 0.0
  %1155 = vmatprep.subr.mxu0 0.0
  %1156 = vmatpush1.msra.mxu0 0.0
  %1157 = vmatprep.subr.mxu0 0.0
  %1158 = vmatpush1.msra.mxu0 0.0
  %1159 = vmatprep.subr.mxu0 0.0
  %1160 = vmatpush1.msra.mxu0 0.0
  %1161 = vmatprep.subr.mxu0 0.0
  %1162 = vmatpush1.msra.mxu0 0.0
  %1163 = vmatprep.subr.mxu0 0.0
  %1164 = vmatpush1.msra.mxu0 0.0
  %1165 = vmatprep.subr.mxu0 0.0
  %1166 = vmatpush1.msra.mxu0 0.0
  %1167 = vmatprep.subr.mxu0 0.0
  %1168 = vmatpush1.msra.mxu0 0.0
  %1169 = vmatprep.subr.mxu0 0.0
  %1170 = vmatpush1.msra.mxu0 0.0
  %1171 = vmatprep.subr.mxu0 0.0
  %1172 = vmatpush1.msra.mxu0 0.0
  %1173 = vmatprep.subr.mxu0 0.0
  %1174 = vmatpush1.msra.mxu0 0.0
  %1175 = vmatprep.subr.mxu0 0.0
  %1176 = vmatpush1.msra.mxu0 0.0
  %1177 = vmatprep.subr.mxu0 0.0
  %1178 = vmatpush1.msra.mxu0 0.0
  %1179 = vmatprep.subr.mxu0 0.0
  %1180 = vmatpush1.msra.mxu0 0.0
  %1181 = vmatprep.subr.mxu0 0.0
  %1182 = vmatpush1.msra.mxu0 0.0
  %1183 = vmatprep.subr.mxu0 0.0
  %1184 = vmatpush1.msra.mxu0 0.0
  %1185 = vmatprep.mubr.f32.mxu0 0.0
  %v1186 = vand.u32 %v1038, 4294901760
  %1187 = vmatmul.mubr.f32.gmra.mrb[0].mxu0 %v1186
  %v1188 = vpop.f32.mrb[0].mxu0
  %v1189 = vadd.f32 %v1113, %v1188
  %v1190 = vpop.f32.mrb[0].mxu0
  %1191 = vdwg.mxu0
  %1192 = vmatprep.subr.mxu0 0.0
  %v1193 = vand.u32 %v1035, 4294901760
  %v1194 = vsub.f32 %v1035, %v1193
  %1195 = vmatpush1.msra.mxu0 %v1194
  %1196 = vmatprep.subr.mxu0 0.0
  %1197 = vmatpush1.msra.mxu0 0.0
  %1198 = vmatprep.subr.mxu0 0.0
  %1199 = vmatpush1.msra.mxu0 0.0
  %1200 = vmatprep.subr.mxu0 0.0
  %1201 = vmatpush1.msra.mxu0 0.0
  %1202 = vmatprep.subr.mxu0 0.0
  %1203 = vmatpush1.msra.mxu0 0.0
  %1204 = vmatprep.subr.mxu0 0.0
  %1205 = vmatpush1.msra.mxu0 0.0
  %1206 = vmatprep.subr.mxu0 0.0
  %1207 = vmatpush1.msra.mxu0 0.0
  %1208 = vmatprep.subr.mxu0 0.0
  %1209 = vmatpush1.msra.mxu0 0.0
  %1210 = vmatprep.subr.mxu0 0.0
  %1211 = vmatpush1.msra.mxu0 0.0
  %1212 = vmatprep.subr.mxu0 0.0
  %1213 = vmatpush1.msra.mxu0 0.0
  %1214 = vmatprep.subr.mxu0 0.0
  %1215 = vmatpush1.msra.mxu0 0.0
  %1216 = vmatprep.subr.mxu0 0.0
  %1217 = vmatpush1.msra.mxu0 0.0
  %1218 = vmatprep.subr.mxu0 0.0
  %1219 = vmatpush1.msra.mxu0 0.0
  %1220 = vmatprep.subr.mxu0 0.0
  %1221 = vmatpush1.msra.mxu0 0.0
  %1222 = vmatprep.subr.mxu0 0.0
  %1223 = vmatpush1.msra.mxu0 0.0
  %1224 = vmatprep.subr.mxu0 0.0
  %1225 = vmatpush1.msra.mxu0 0.0
  %1226 = vmatprep.subr.mxu0 0.0
  %1227 = vmatpush1.msra.mxu0 0.0
  %1228 = vmatprep.subr.mxu0 0.0
  %1229 = vmatpush1.msra.mxu0 0.0
  %1230 = vmatprep.subr.mxu0 0.0
  %1231 = vmatpush1.msra.mxu0 0.0
  %1232 = vmatprep.subr.mxu0 0.0
  %1233 = vmatpush1.msra.mxu0 0.0
  %1234 = vmatprep.subr.mxu0 0.0
  %1235 = vmatpush1.msra.mxu0 0.0
  %1236 = vmatprep.subr.mxu0 0.0
  %1237 = vmatpush1.msra.mxu0 0.0
  %1238 = vmatprep.subr.mxu0 0.0
  %1239 = vmatpush1.msra.mxu0 0.0
  %1240 = vmatprep.subr.mxu0 0.0
  %1241 = vmatpush1.msra.mxu0 0.0
  %1242 = vmatprep.subr.mxu0 0.0
  %1243 = vmatpush1.msra.mxu0 0.0
  %1244 = vmatprep.subr.mxu0 0.0
  %1245 = vmatpush1.msra.mxu0 0.0
  %1246 = vmatprep.subr.mxu0 0.0
  %1247 = vmatpush1.msra.mxu0 0.0
  %1248 = vmatprep.subr.mxu0 0.0
  %1249 = vmatpush1.msra.mxu0 0.0
  %1250 = vmatprep.subr.mxu0 0.0
  %1251 = vmatpush1.msra.mxu0 0.0
  %1252 = vmatprep.subr.mxu0 0.0
  %1253 = vmatpush1.msra.mxu0 0.0
  %1254 = vmatprep.subr.mxu0 0.0
  %1255 = vmatpush1.msra.mxu0 0.0
  %1256 = vmatprep.subr.mxu0 0.0
  %1257 = vmatpush1.msra.mxu0 0.0
  %1258 = vmatprep.mubr.f32.mxu0 0.0
  %v1259 = vand.u32 %v1038, 4294901760
  %v1260 = vsub.f32 %v1038, %v1259
  %1261 = vmatmul.mubr.f32.gmra.mrb[0].mxu0 %v1260
  %v1262 = vpop.f32.mrb[0].mxu0
  %v1263 = vadd.f32 %v1189, %v1262
  %v1264 = vpop.f32.mrb[0].mxu0
  %1265 = vdwg.mxu0
  %1266 = vmatprep.subr.mxu0 0.0
  %v1267 = vand.u32 %v1035, 4294901760
  %1268 = vmatpush1.msra.mxu0 %v1267
  %1269 = vmatprep.subr.mxu0 0.0
  %1270 = vmatpush1.msra.mxu0 0.0
  %1271 = vmatprep.subr.mxu0 0.0
  %1272 = vmatpush1.msra.mxu0 0.0
  %1273 = vmatprep.subr.mxu0 0.0
  %1274 = vmatpush1.msra.mxu0 0.0
  %1275 = vmatprep.subr.mxu0 0.0
  %1276 = vmatpush1.msra.mxu0 0.0
  %1277 = vmatprep.subr.mxu0 0.0
  %1278 = vmatpush1.msra.mxu0 0.0
  %1279 = vmatprep.subr.mxu0 0.0
  %1280 = vmatpush1.msra.mxu0 0.0
  %1281 = vmatprep.subr.mxu0 0.0
  %1282 = vmatpush1.msra.mxu0 0.0
  %1283 = vmatprep.subr.mxu0 0.0
  %1284 = vmatpush1.msra.mxu0 0.0
  %1285 = vmatprep.subr.mxu0 0.0
  %1286 = vmatpush1.msra.mxu0 0.0
  %1287 = vmatprep.subr.mxu0 0.0
  %1288 = vmatpush1.msra.mxu0 0.0
  %1289 = vmatprep.subr.mxu0 0.0
  %1290 = vmatpush1.msra.mxu0 0.0
  %1291 = vmatprep.subr.mxu0 0.0
  %1292 = vmatpush1.msra.mxu0 0.0
  %1293 = vmatprep.subr.mxu0 0.0
  %1294 = vmatpush1.msra.mxu0 0.0
  %1295 = vmatprep.subr.mxu0 0.0
  %1296 = vmatpush1.msra.mxu0 0.0
  %1297 = vmatprep.subr.mxu0 0.0
  %1298 = vmatpush1.msra.mxu0 0.0
  %1299 = vmatprep.subr.mxu0 0.0
  %1300 = vmatpush1.msra.mxu0 0.0
  %1301 = vmatprep.subr.mxu0 0.0
  %1302 = vmatpush1.msra.mxu0 0.0
  %1303 = vmatprep.subr.mxu0 0.0
  %1304 = vmatpush1.msra.mxu0 0.0
  %1305 = vmatprep.subr.mxu0 0.0
  %1306 = vmatpush1.msra.mxu0 0.0
  %1307 = vmatprep.subr.mxu0 0.0
  %1308 = vmatpush1.msra.mxu0 0.0
  %1309 = vmatprep.subr.mxu0 0.0
  %1310 = vmatpush1.msra.mxu0 0.0
  %1311 = vmatprep.subr.mxu0 0.0
  %1312 = vmatpush1.msra.mxu0 0.0
  %1313 = vmatprep.subr.mxu0 0.0
  %1314 = vmatpush1.msra.mxu0 0.0
  %1315 = vmatprep.subr.mxu0 0.0
  %1316 = vmatpush1.msra.mxu0 0.0
  %1317 = vmatprep.subr.mxu0 0.0
  %1318 = vmatpush1.msra.mxu0 0.0
  %1319 = vmatprep.subr.mxu0 0.0
  %1320 = vmatpush1.msra.mxu0 0.0
  %1321 = vmatprep.subr.mxu0 0.0
  %1322 = vmatpush1.msra.mxu0 0.0
  %1323 = vmatprep.subr.mxu0 0.0
  %1324 = vmatpush1.msra.mxu0 0.0
  %1325 = vmatprep.subr.mxu0 0.0
  %1326 = vmatpush1.msra.mxu0 0.0
  %1327 = vmatprep.subr.mxu0 0.0
  %1328 = vmatpush1.msra.mxu0 0.0
  %1329 = vmatprep.subr.mxu0 0.0
  %1330 = vmatpush1.msra.mxu0 0.0
  %1331 = vmatprep.mubr.f32.mxu0 0.0
  %v1332 = vand.u32 %v1038, 4294901760
  %v1333 = vsub.f32 %v1038, %v1332
  %v1334 = vand.u32 %v1333, 4294901760
  %1335 = vmatmul.mubr.f32.gmra.mrb[0].mxu0 %v1334
  %v1336 = vpop.f32.mrb[0].mxu0
  %v1337 = vadd.f32 %v1263, %v1336
  %v1338 = vpop.f32.mrb[0].mxu0
  %1339 = vdwg.mxu0
  %1340 = vmatprep.subr.mxu0 0.0
  %v1341 = vand.u32 %v1035, 4294901760
  %v1342 = vsub.f32 %v1035, %v1341
  %v1343 = vand.u32 %v1342, 4294901760
  %1344 = vmatpush1.msra.mxu0 %v1343
  %1345 = vmatprep.subr.mxu0 0.0
  %1346 = vmatpush1.msra.mxu0 0.0
  %1347 = vmatprep.subr.mxu0 0.0
  %1348 = vmatpush1.msra.mxu0 0.0
  %1349 = vmatprep.subr.mxu0 0.0
  %1350 = vmatpush1.msra.mxu0 0.0
  %1351 = vmatprep.subr.mxu0 0.0
  %1352 = vmatpush1.msra.mxu0 0.0
  %1353 = vmatprep.subr.mxu0 0.0
  %1354 = vmatpush1.msra.mxu0 0.0
  %1355 = vmatprep.subr.mxu0 0.0
  %1356 = vmatpush1.msra.mxu0 0.0
  %1357 = vmatprep.subr.mxu0 0.0
  %1358 = vmatpush1.msra.mxu0 0.0
  %1359 = vmatprep.subr.mxu0 0.0
  %1360 = vmatpush1.msra.mxu0 0.0
  %1361 = vmatprep.subr.mxu0 0.0
  %1362 = vmatpush1.msra.mxu0 0.0
  %1363 = vmatprep.subr.mxu0 0.0
  %1364 = vmatpush1.msra.mxu0 0.0
  %1365 = vmatprep.subr.mxu0 0.0
  %1366 = vmatpush1.msra.mxu0 0.0
  %1367 = vmatprep.subr.mxu0 0.0
  %1368 = vmatpush1.msra.mxu0 0.0
  %1369 = vmatprep.subr.mxu0 0.0
  %1370 = vmatpush1.msra.mxu0 0.0
  %1371 = vmatprep.subr.mxu0 0.0
  %1372 = vmatpush1.msra.mxu0 0.0
  %1373 = vmatprep.subr.mxu0 0.0
  %1374 = vmatpush1.msra.mxu0 0.0
  %1375 = vmatprep.subr.mxu0 0.0
  %1376 = vmatpush1.msra.mxu0 0.0
  %1377 = vmatprep.subr.mxu0 0.0
  %1378 = vmatpush1.msra.mxu0 0.0
  %1379 = vmatprep.subr.mxu0 0.0
  %1380 = vmatpush1.msra.mxu0 0.0
  %1381 = vmatprep.subr.mxu0 0.0
  %1382 = vmatpush1.msra.mxu0 0.0
  %1383 = vmatprep.subr.mxu0 0.0
  %1384 = vmatpush1.msra.mxu0 0.0
  %1385 = vmatprep.subr.mxu0 0.0
  %1386 = vmatpush1.msra.mxu0 0.0
  %1387 = vmatprep.subr.mxu0 0.0
  %1388 = vmatpush1.msra.mxu0 0.0
  %1389 = vmatprep.subr.mxu0 0.0
  %1390 = vmatpush1.msra.mxu0 0.0
  %1391 = vmatprep.subr.mxu0 0.0
  %1392 = vmatpush1.msra.mxu0 0.0
  %1393 = vmatprep.subr.mxu0 0.0
  %1394 = vmatpush1.msra.mxu0 0.0
  %1395 = vmatprep.subr.mxu0 0.0
  %1396 = vmatpush1.msra.mxu0 0.0
  %1397 = vmatprep.subr.mxu0 0.0
  %1398 = vmatpush1.msra.mxu0 0.0
  %1399 = vmatprep.subr.mxu0 0.0
  %1400 = vmatpush1.msra.mxu0 0.0
  %1401 = vmatprep.subr.mxu0 0.0
  %1402 = vmatpush1.msra.mxu0 0.0
  %1403 = vmatprep.subr.mxu0 0.0
  %1404 = vmatpush1.msra.mxu0 0.0
  %1405 = vmatprep.subr.mxu0 0.0
  %1406 = vmatpush1.msra.mxu0 0.0
  %1407 = vmatprep.mubr.f32.mxu0 0.0
  %v1408 = vand.u32 %v1038, 4294901760
  %1409 = vmatmul.mubr.f32.gmra.mrb[0].mxu0 %v1408
  %v1410 = vpop.f32.mrb[0].mxu0
  %v1411 = vadd.f32 %v1337, %v1410
  %v1412 = vpop.f32.mrb[0].mxu0
  %1413 = vdwg.mxu0
  %1414 = vmatprep.subr.mxu0 0.0
  %v1415 = vand.u32 %v1035, 4294901760
  %1416 = vmatpush1.msra.mxu0 %v1415
  %1417 = vmatprep.subr.mxu0 0.0
  %1418 = vmatpush1.msra.mxu0 0.0
  %1419 = vmatprep.subr.mxu0 0.0
  %1420 = vmatpush1.msra.mxu0 0.0
  %1421 = vmatprep.subr.mxu0 0.0
  %1422 = vmatpush1.msra.mxu0 0.0
  %1423 = vmatprep.subr.mxu0 0.0
  %1424 = vmatpush1.msra.mxu0 0.0
  %1425 = vmatprep.subr.mxu0 0.0
  %1426 = vmatpush1.msra.mxu0 0.0
  %1427 = vmatprep.subr.mxu0 0.0
  %1428 = vmatpush1.msra.mxu0 0.0
  %1429 = vmatprep.subr.mxu0 0.0
  %1430 = vmatpush1.msra.mxu0 0.0
  %1431 = vmatprep.subr.mxu0 0.0
  %1432 = vmatpush1.msra.mxu0 0.0
  %1433 = vmatprep.subr.mxu0 0.0
  %1434 = vmatpush1.msra.mxu0 0.0
  %1435 = vmatprep.subr.mxu0 0.0
  %1436 = vmatpush1.msra.mxu0 0.0
  %1437 = vmatprep.subr.mxu0 0.0
  %1438 = vmatpush1.msra.mxu0 0.0
  %1439 = vmatprep.subr.mxu0 0.0
  %1440 = vmatpush1.msra.mxu0 0.0
  %1441 = vmatprep.subr.mxu0 0.0
  %1442 = vmatpush1.msra.mxu0 0.0
  %1443 = vmatprep.subr.mxu0 0.0
  %1444 = vmatpush1.msra.mxu0 0.0
  %1445 = vmatprep.subr.mxu0 0.0
  %1446 = vmatpush1.msra.mxu0 0.0
  %1447 = vmatprep.subr.mxu0 0.0
  %1448 = vmatpush1.msra.mxu0 0.0
  %1449 = vmatprep.subr.mxu0 0.0
  %1450 = vmatpush1.msra.mxu0 0.0
  %1451 = vmatprep.subr.mxu0 0.0
  %1452 = vmatpush1.msra.mxu0 0.0
  %1453 = vmatprep.subr.mxu0 0.0
  %1454 = vmatpush1.msra.mxu0 0.0
  %1455 = vmatprep.subr.mxu0 0.0
  %1456 = vmatpush1.msra.mxu0 0.0
  %1457 = vmatprep.subr.mxu0 0.0
  %1458 = vmatpush1.msra.mxu0 0.0
  %1459 = vmatprep.subr.mxu0 0.0
  %1460 = vmatpush1.msra.mxu0 0.0
  %1461 = vmatprep.subr.mxu0 0.0
  %1462 = vmatpush1.msra.mxu0 0.0
  %1463 = vmatprep.subr.mxu0 0.0
  %1464 = vmatpush1.msra.mxu0 0.0
  %1465 = vmatprep.subr.mxu0 0.0
  %1466 = vmatpush1.msra.mxu0 0.0
  %1467 = vmatprep.subr.mxu0 0.0
  %1468 = vmatpush1.msra.mxu0 0.0
  %1469 = vmatprep.subr.mxu0 0.0
  %1470 = vmatpush1.msra.mxu0 0.0
  %1471 = vmatprep.subr.mxu0 0.0
  %1472 = vmatpush1.msra.mxu0 0.0
  %1473 = vmatprep.subr.mxu0 0.0
  %1474 = vmatpush1.msra.mxu0 0.0
  %1475 = vmatprep.subr.mxu0 0.0
  %1476 = vmatpush1.msra.mxu0 0.0
  %1477 = vmatprep.subr.mxu0 0.0
  %1478 = vmatpush1.msra.mxu0 0.0
  %1479 = vmatprep.mubr.f32.mxu0 0.0
  %v1480 = vand.u32 %v1038, 4294901760
  %1481 = vmatmul.mubr.f32.gmra.mrb[0].mxu0 %v1480
  %v1482 = vpop.f32.mrb[0].mxu0
  %v1483 = vadd.f32 %v1411, %v1482
  %v1484 = vpop.f32.mrb[0].mxu0
  %1485 = vdwg.mxu0
  %v1486 = vlaneseq
  %v1487 = vshrl.u32 %v1486, 7
  %v1488 = vsub.s32 0, %v1487
  %v1489 = vrot.slane %v1483, %v1488
  %v1490 = vmul.f32 %v325, %v1489
  %v1491 = vlaneseq
  %v1492 = vshrl.u32 %v1491, 7
  %v1493 = vsub.s32 1, %v1492
  %v1494 = vrot.slane %v1483, %v1493
  %v1495 = vadd.f32 %v1490, %v1494
  %v1496 = vmax.f32 %v1495, 0.0
  %vm1497 = vcmask 1040384
  %vm1498 = vmand %vm1497, %vm50
  %v1499 = vld [vmem:[#allocation3] sm:$0x1]
  %v1500 = vsel %vm1498, 0, %v1499
  %1501 = vst [vmem:[#allocation3] sm:$0x1] %v1500
  %vm1502 = vmand %vm1497, %vm55
  %v1503 = vld [vmem:[#allocation3 + $0x4] sm:$0x1]
  %v1504 = vsel %vm1502, 0, %v1503
  %1505 = vst [vmem:[#allocation3 + $0x4] sm:$0x1] %v1504
  %v1506 = vpack.c.bf16 %v1496, %v1496
  %v1508 = vunpack.c.l.b16 %v1506
  %v1509 = vpack.c.b16 %v1508, %v1508
  %v1511 = vshrl.u32 %v1509, 16
  %v1513 = vrot.slane %v1511, 7
  %v1514 = vshll.u32 %v1509, 16
  %v1516 = vor.u32 %v1513, %v1514
  %v1517 = vrot.slane %v1513, 4
  %vm1520 = vcmask 1043456
  %vm1521 = vmand %vm1520, %vm55
  %v1522 = vld [vmem:[#allocation3] sm:$0xf]
  %v1523 = vsel %vm1521, %v1516, %v1522
  %1524 = vst [vmem:[#allocation3] sm:$0xf] %v1523
  %v1525 = vld [vmem:[#allocation3 + $0x4] sm:$0x1]
  %v1526 = vsel %vm1498, %v1517, %v1525
  %1527 = vst [vmem:[#allocation3 + $0x4] sm:$0x1] %v1526
  %v1528 = vld [vmem:[#allocation3] sm:$0xf]
  %v1529 = vld [vmem:[%s6] sm:$0xf]
  %v1530 = vld [vmem:[%s6 + $0x4] sm:$0xf]
  %v1531 = vld [vmem:[%s6 + $0x8] sm:$0xf]
  %v1532 = vld [vmem:[%s6 + $0xc] sm:$0xf]
  %v1533 = vld [vmem:[%s6 + $0x10] sm:$0xf]
  %v1534 = vld [vmem:[%s6 + $0x14] sm:$0xf]
  %v1535 = vld [vmem:[%s6 + $0x18] sm:$0xf]
  %v1536 = vld [vmem:[%s6 + $0x1c] sm:$0xf]
  %v1537 = vld [vmem:[%s6 + $0x20] sm:$0xf]
  %v1538 = vld [vmem:[%s6 + $0x24] sm:$0xf]
  %v1539 = vld [vmem:[%s6 + $0x28] sm:$0xf]
  %v1540 = vld [vmem:[%s6 + $0x2c] sm:$0xf]
  %v1541 = vld [vmem:[%s6 + $0x30] sm:$0xf]
  %v1542 = vld [vmem:[%s6 + $0x34] sm:$0xf]
  %v1543 = vld [vmem:[%s6 + $0x38] sm:$0xf]
  %v1544 = vld [vmem:[%s6 + $0x3c] sm:$0xf]
  %v1545 = vld [vmem:[#allocation3 + $0x4] sm:$0x1]
  %s1546 = scalar_lea.vmem %s6, 64
  %v1547 = vld [vmem:[%s1546] sm:$0xf]
  %v1548 = vld [vmem:[%s1546 + $0x4] sm:$0xf]
  %v1549 = vld [vmem:[%s1546 + $0x8] sm:$0xf]
  %v1550 = vld [vmem:[%s1546 + $0xc] sm:$0xf]
  %v1551 = vld [vmem:[%s1546 + $0x10] sm:$0xf]
  %v1552 = vld [vmem:[%s1546 + $0x14] sm:$0xf]
  %v1553 = vld [vmem:[%s1546 + $0x18] sm:$0xf]
  %v1554 = vld [vmem:[%s1546 + $0x1c] sm:$0xf]
  %v1555 = vld [vmem:[%s1546 + $0x20] sm:$0xf]
  %v1556 = vld [vmem:[%s1546 + $0x24] sm:$0xf]
  %v1557 = vld [vmem:[%s1546 + $0x28] sm:$0xf]
  %v1558 = vld [vmem:[%s1546 + $0x2c] sm:$0xf]
  %v1559 = vld [vmem:[%s1546 + $0x30] sm:$0xf]
  %v1560 = vld [vmem:[%s1546 + $0x34] sm:$0xf]
  %v1561 = vld [vmem:[%s1546 + $0x38] sm:$0xf]
  %v1562 = vld [vmem:[%s1546 + $0x3c] sm:$0xf]
  %v1565 = vunpack.c.l.b16 %v1528
  %v1566 = vunpack.c.l.b16 %v1545
  %v1567 = vpack.c.b16 %v1566, %v1565
  %v1569 = vshrl.u32 %v1567, 16
  %v1571 = vshll.u32 %v1567, 16
  %v1573 = vrot.slane %v1571, 1
  %v1574 = vor.u32 %v1569, %v1573
  %v1592 = vunpack.c.l.b16 %v1547
  %v1593 = vunpack.c.l.b16 %v1548
  %v1594 = vunpack.c.l.b16 %v1549
  %v1595 = vunpack.c.l.b16 %v1550
  %v1596 = vunpack.c.l.b16 %v1551
  %v1597 = vunpack.c.l.b16 %v1552
  %v1598 = vunpack.c.l.b16 %v1553
  %v1599 = vunpack.c.l.b16 %v1554
  %v1600 = vunpack.c.l.b16 %v1555
  %v1601 = vunpack.c.l.b16 %v1556
  %v1602 = vunpack.c.l.b16 %v1557
  %v1603 = vunpack.c.l.b16 %v1558
  %v1604 = vunpack.c.l.b16 %v1559
  %v1605 = vunpack.c.l.b16 %v1560
  %v1606 = vunpack.c.l.b16 %v1561
  %v1607 = vunpack.c.l.b16 %v1562
  %v1608 = vpack.c.b16 %v1593, %v1592
  %v1609 = vpack.c.b16 %v1595, %v1594
  %v1610 = vpack.c.b16 %v1597, %v1596
  %v1611 = vpack.c.b16 %v1599, %v1598
  %v1612 = vpack.c.b16 %v1601, %v1600
  %v1613 = vpack.c.b16 %v1603, %v1602
  %v1614 = vpack.c.b16 %v1605, %v1604
  %v1615 = vpack.c.b16 %v1607, %v1606
  %1624 = vmatprep.subr.bf16.mxu0 0
  %1625 = vmatpush1.bf16.msra.mxu0 %v1608
  %1626 = vmatprep.subr.bf16.mxu0 0
  %1627 = vmatpush1.bf16.msra.mxu0 %v1609
  %1628 = vmatprep.subr.bf16.mxu0 0
  %1629 = vmatpush1.bf16.msra.mxu0 %v1610
  %1630 = vmatprep.subr.bf16.mxu0 0
  %1631 = vmatpush1.bf16.msra.mxu0 %v1611
  %1632 = vmatprep.subr.bf16.mxu0 0
  %1633 = vmatpush1.bf16.msra.mxu0 %v1612
  %1634 = vmatprep.subr.bf16.mxu0 0
  %1635 = vmatpush1.bf16.msra.mxu0 %v1613
  %1636 = vmatprep.subr.bf16.mxu0 0
  %1637 = vmatpush1.bf16.msra.mxu0 %v1614
  %1638 = vmatprep.subr.bf16.mxu0 0
  %1639 = vmatpush1.bf16.msra.mxu0 %v1615
  %1640 = vmatprep.subr.bf16.mxu0 0
  %1641 = vmatpush1.bf16.msra.mxu0 0
  %1642 = vmatprep.subr.bf16.mxu0 0
  %1643 = vmatpush1.bf16.msra.mxu0 0
  %1644 = vmatprep.subr.bf16.mxu0 0
  %1645 = vmatpush1.bf16.msra.mxu0 0
  %1646 = vmatprep.subr.bf16.mxu0 0
  %1647 = vmatpush1.bf16.msra.mxu0 0
  %1648 = vmatprep.subr.bf16.mxu0 0
  %1649 = vmatpush1.bf16.msra.mxu0 0
  %1650 = vmatprep.subr.bf16.mxu0 0
  %1651 = vmatpush1.bf16.msra.mxu0 0
  %1652 = vmatprep.subr.bf16.mxu0 0
  %1653 = vmatpush1.bf16.msra.mxu0 0
  %1654 = vmatprep.subr.bf16.mxu0 0
  %1655 = vmatpush1.bf16.msra.mxu0 0
  %1656 = vmatprep.mubr.bf16.mxu0 0
  %1657 = vmatmul.mubr.bf16.gmra.mrb[0].mxu0 %v1574
  %v1658 = vpop.f32.mrb[0].mxu0
  %v1659 = vadd.f32 0.0, %v1658
  %v1660 = vpop.f32.mrb[0].mxu0
  %v1661 = vpop.f32.mrb[0].mxu0
  %v1662 = vpop.f32.mrb[0].mxu0
  %1663 = vdwg.mxu0
  %v1680 = vunpack.c.l.b16 %v1529
  %v1681 = vunpack.c.l.b16 %v1530
  %v1682 = vunpack.c.l.b16 %v1531
  %v1683 = vunpack.c.l.b16 %v1532
  %v1684 = vunpack.c.l.b16 %v1533
  %v1685 = vunpack.c.l.b16 %v1534
  %v1686 = vunpack.c.l.b16 %v1535
  %v1687 = vunpack.c.l.b16 %v1536
  %v1688 = vunpack.c.l.b16 %v1537
  %v1689 = vunpack.c.l.b16 %v1538
  %v1690 = vunpack.c.l.b16 %v1539
  %v1691 = vunpack.c.l.b16 %v1540
  %v1692 = vunpack.c.l.b16 %v1541
  %v1693 = vunpack.c.l.b16 %v1542
  %v1694 = vunpack.c.l.b16 %v1543
  %v1695 = vunpack.c.l.b16 %v1544
  %v1696 = vpack.c.b16 %v1681, %v1680
  %v1697 = vpack.c.b16 %v1683, %v1682
  %v1698 = vpack.c.b16 %v1685, %v1684
  %v1699 = vpack.c.b16 %v1687, %v1686
  %v1700 = vpack.c.b16 %v1689, %v1688
  %v1701 = vpack.c.b16 %v1691, %v1690
  %v1702 = vpack.c.b16 %v1693, %v1692
  %v1703 = vpack.c.b16 %v1695, %v1694
  %1712 = vmatprep.subr.bf16.mxu0 0
  %1713 = vmatpush1.bf16.msra.mxu0 %v1696
  %1714 = vmatprep.subr.bf16.mxu0 0
  %1715 = vmatpush1.bf16.msra.mxu0 %v1697
  %1716 = vmatprep.subr.bf16.mxu0 0
  %1717 = vmatpush1.bf16.msra.mxu0 %v1698
  %1718 = vmatprep.subr.bf16.mxu0 0
  %1719 = vmatpush1.bf16.msra.mxu0 %v1699
  %1720 = vmatprep.subr.bf16.mxu0 0
  %1721 = vmatpush1.bf16.msra.mxu0 %v1700
  %1722 = vmatprep.subr.bf16.mxu0 0
  %1723 = vmatpush1.bf16.msra.mxu0 %v1701
  %1724 = vmatprep.subr.bf16.mxu0 0
  %1725 = vmatpush1.bf16.msra.mxu0 %v1702
  %1726 = vmatprep.subr.bf16.mxu0 0
  %1727 = vmatpush1.bf16.msra.mxu0 %v1703
  %1728 = vmatprep.subr.bf16.mxu0 0
  %1729 = vmatpush1.bf16.msra.mxu0 0
  %1730 = vmatprep.subr.bf16.mxu0 0
  %1731 = vmatpush1.bf16.msra.mxu0 0
  %1732 = vmatprep.subr.bf16.mxu0 0
  %1733 = vmatpush1.bf16.msra.mxu0 0
  %1734 = vmatprep.subr.bf16.mxu0 0
  %1735 = vmatpush1.bf16.msra.mxu0 0
  %1736 = vmatprep.subr.bf16.mxu0 0
  %1737 = vmatpush1.bf16.msra.mxu0 0
  %1738 = vmatprep.subr.bf16.mxu0 0
  %1739 = vmatpush1.bf16.msra.mxu0 0
  %1740 = vmatprep.subr.bf16.mxu0 0
  %1741 = vmatpush1.bf16.msra.mxu0 0
  %1742 = vmatprep.subr.bf16.mxu0 0
  %1743 = vmatpush1.bf16.msra.mxu0 0
  %1744 = vmatprep.mubr.bf16.mxu0 0
  %1745 = vmatmul.mubr.bf16.gmra.mrb[0].mxu0 %v1528
  %v1746 = vpop.f32.mrb[0].mxu0
  %v1747 = vadd.f32 %v1659, %v1746
  %v1748 = vpop.f32.mrb[0].mxu0
  %v1749 = vpop.f32.mrb[0].mxu0
  %v1750 = vpop.f32.mrb[0].mxu0
  %1751 = vdwg.mxu0
  %v1752 = vld [vmem:[#allocation3] sm:$0xe]
  %s1753 = scalar_lea.vmem %s6, 128
  %v1754 = vld [vmem:[%s1753] sm:$0xf]
  %v1755 = vld [vmem:[%s1753 + $0x4] sm:$0xf]
  %v1756 = vld [vmem:[%s1753 + $0x8] sm:$0xf]
  %v1757 = vld [vmem:[%s1753 + $0xc] sm:$0xf]
  %v1758 = vld [vmem:[%s1753 + $0x10] sm:$0xf]
  %v1759 = vld [vmem:[%s1753 + $0x14] sm:$0xf]
  %v1760 = vld [vmem:[%s1753 + $0x18] sm:$0xf]
  %v1761 = vld [vmem:[%s1753 + $0x1c] sm:$0xf]
  %v1762 = vld [vmem:[%s1753 + $0x20] sm:$0xf]
  %v1763 = vld [vmem:[%s1753 + $0x24] sm:$0xf]
  %v1764 = vld [vmem:[%s1753 + $0x28] sm:$0xf]
  %v1765 = vld [vmem:[%s1753 + $0x2c] sm:$0xf]
  %v1766 = vld [vmem:[%s1753 + $0x30] sm:$0xf]
  %v1767 = vld [vmem:[%s1753 + $0x34] sm:$0xf]
  %v1768 = vld [vmem:[%s1753 + $0x38] sm:$0xf]
  %v1769 = vld [vmem:[%s1753 + $0x3c] sm:$0xf]
  %v1771 = vunpack.c.l.b16 %v1752
  %v1772 = vpack.c.b16 %v1566, %v1771
  %v1773 = vrot.slane %v1772, 1
  %v1791 = vunpack.c.l.b16 %v1754
  %v1792 = vunpack.c.l.b16 %v1755
  %v1793 = vunpack.c.l.b16 %v1756
  %v1794 = vunpack.c.l.b16 %v1757
  %v1795 = vunpack.c.l.b16 %v1758
  %v1796 = vunpack.c.l.b16 %v1759
  %v1797 = vunpack.c.l.b16 %v1760
  %v1798 = vunpack.c.l.b16 %v1761
  %v1799 = vunpack.c.l.b16 %v1762
  %v1800 = vunpack.c.l.b16 %v1763
  %v1801 = vunpack.c.l.b16 %v1764
  %v1802 = vunpack.c.l.b16 %v1765
  %v1803 = vunpack.c.l.b16 %v1766
  %v1804 = vunpack.c.l.b16 %v1767
  %v1805 = vunpack.c.l.b16 %v1768
  %v1806 = vunpack.c.l.b16 %v1769
  %v1807 = vpack.c.b16 %v1792, %v1791
  %v1808 = vpack.c.b16 %v1794, %v1793
  %v1809 = vpack.c.b16 %v1796, %v1795
  %v1810 = vpack.c.b16 %v1798, %v1797
  %v1811 = vpack.c.b16 %v1800, %v1799
  %v1812 = vpack.c.b16 %v1802, %v1801
  %v1813 = vpack.c.b16 %v1804, %v1803
  %v1814 = vpack.c.b16 %v1806, %v1805
  %1823 = vmatprep.subr.bf16.mxu0 0
  %1824 = vmatpush1.bf16.msra.mxu0 %v1807
  %1825 = vmatprep.subr.bf16.mxu0 0
  %1826 = vmatpush1.bf16.msra.mxu0 %v1808
  %1827 = vmatprep.subr.bf16.mxu0 0
  %1828 = vmatpush1.bf16.msra.mxu0 %v1809
  %1829 = vmatprep.subr.bf16.mxu0 0
  %1830 = vmatpush1.bf16.msra.mxu0 %v1810
  %1831 = vmatprep.subr.bf16.mxu0 0
  %1832 = vmatpush1.bf16.msra.mxu0 %v1811
  %1833 = vmatprep.subr.bf16.mxu0 0
  %1834 = vmatpush1.bf16.msra.mxu0 %v1812
  %1835 = vmatprep.subr.bf16.mxu0 0
  %1836 = vmatpush1.bf16.msra.mxu0 %v1813
  %1837 = vmatprep.subr.bf16.mxu0 0
  %1838 = vmatpush1.bf16.msra.mxu0 %v1814
  %1839 = vmatprep.subr.bf16.mxu0 0
  %1840 = vmatpush1.bf16.msra.mxu0 0
  %1841 = vmatprep.subr.bf16.mxu0 0
  %1842 = vmatpush1.bf16.msra.mxu0 0
  %1843 = vmatprep.subr.bf16.mxu0 0
  %1844 = vmatpush1.bf16.msra.mxu0 0
  %1845 = vmatprep.subr.bf16.mxu0 0
  %1846 = vmatpush1.bf16.msra.mxu0 0
  %1847 = vmatprep.subr.bf16.mxu0 0
  %1848 = vmatpush1.bf16.msra.mxu0 0
  %1849 = vmatprep.subr.bf16.mxu0 0
  %1850 = vmatpush1.bf16.msra.mxu0 0
  %1851 = vmatprep.subr.bf16.mxu0 0
  %1852 = vmatpush1.bf16.msra.mxu0 0
  %1853 = vmatprep.subr.bf16.mxu0 0
  %1854 = vmatpush1.bf16.msra.mxu0 0
  %1855 = vmatprep.mubr.bf16.mxu0 0
  %1856 = vmatmul.mubr.bf16.gmra.mrb[0].mxu0 %v1773
  %v1857 = vpop.f32.mrb[0].mxu0
  %v1858 = vadd.f32 0.0, %v1857
  %v1859 = vpop.f32.mrb[0].mxu0
  %v1860 = vpop.f32.mrb[0].mxu0
  %v1861 = vpop.f32.mrb[0].mxu0
  %1862 = vdwg.mxu0
  %v1863 = vadd.f32 %v1747, %v1858
  %v1864 = vrot.slane %v1863, 4
  %v1865 = vadd.f32 %v1863, %v1864
  %v1866 = vrot.slane %v1865, 2
  %v1867 = vadd.f32 %v1865, %v1866
  %v1868 = vrot.slane %v1867, 1
  %v1869 = vadd.f32 %v1867, %v1868
  %v1870 = vmul.f32 %v1863, %v1863
  %v1871 = vrot.slane %v1870, 4
  %v1872 = vadd.f32 %v1870, %v1871
  %v1873 = vrot.slane %v1872, 2
  %v1874 = vadd.f32 %v1872, %v1873
  %v1875 = vrot.slane %v1874, 1
  %v1876 = vadd.f32 %v1874, %v1875
  %v1877 = vsel %vm339, %v1869, %v1876
  %v1878 = vld [vmem:[%s9] sm:$0xff]
  %v1879 = vld [vmem:[%s9 + $0x8] sm:$0xff]
  %v1880 = vld [vmem:[%s9 + $0x10] sm:$0xff]
  %v1881 = vld [vmem:[%s9 + $0x18] sm:$0xff]
  %v1882 = vld [vmem:[%s9 + $0x20] sm:$0xff]
  %v1883 = vld [vmem:[%s9 + $0x28] sm:$0xff]
  %v1884 = vld [vmem:[%s9 + $0x30] sm:$0xff]
  %v1885 = vld [vmem:[%s9 + $0x38] sm:$0xff]
  %v1886 = vld [vmem:[%s9 + $0x40] sm:$0xff]
  %v1887 = vld [vmem:[%s9 + $0x48] sm:$0xff]
  %v1888 = vld [vmem:[%s9 + $0x50] sm:$0xff]
  %v1889 = vld [vmem:[%s9 + $0x58] sm:$0xff]
  %v1890 = vld [vmem:[%s9 + $0x60] sm:$0xff]
  %v1891 = vld [vmem:[%s9 + $0x68] sm:$0xff]
  %v1892 = vld [vmem:[%s9 + $0x70] sm:$0xff]
  %v1893 = vld [vmem:[%s9 + $0x78] sm:$0xff]
  %1894 = vmatprep.subr.mxu0 0.0
  %v1895 = vand.u32 %v1878, 4294901760
  %1896 = vmatpush1.msra.mxu0 %v1895
  %1897 = vmatprep.subr.mxu0 0.0
  %v1898 = vand.u32 %v1879, 4294901760
  %1899 = vmatpush1.msra.mxu0 %v1898
  %1900 = vmatprep.subr.mxu0 0.0
  %v1901 = vand.u32 %v1880, 4294901760
  %1902 = vmatpush1.msra.mxu0 %v1901
  %1903 = vmatprep.subr.mxu0 0.0
  %v1904 = vand.u32 %v1881, 4294901760
  %1905 = vmatpush1.msra.mxu0 %v1904
  %1906 = vmatprep.subr.mxu0 0.0
  %v1907 = vand.u32 %v1882, 4294901760
  %1908 = vmatpush1.msra.mxu0 %v1907
  %1909 = vmatprep.subr.mxu0 0.0
  %v1910 = vand.u32 %v1883, 4294901760
  %1911 = vmatpush1.msra.mxu0 %v1910
  %1912 = vmatprep.subr.mxu0 0.0
  %v1913 = vand.u32 %v1884, 4294901760
  %1914 = vmatpush1.msra.mxu0 %v1913
  %1915 = vmatprep.subr.mxu0 0.0
  %v1916 = vand.u32 %v1885, 4294901760
  %1917 = vmatpush1.msra.mxu0 %v1916
  %1918 = vmatprep.subr.mxu0 0.0
  %v1919 = vand.u32 %v1886, 4294901760
  %1920 = vmatpush1.msra.mxu0 %v1919
  %1921 = vmatprep.subr.mxu0 0.0
  %v1922 = vand.u32 %v1887, 4294901760
  %1923 = vmatpush1.msra.mxu0 %v1922
  %1924 = vmatprep.subr.mxu0 0.0
  %v1925 = vand.u32 %v1888, 4294901760
  %1926 = vmatpush1.msra.mxu0 %v1925
  %1927 = vmatprep.subr.mxu0 0.0
  %v1928 = vand.u32 %v1889, 4294901760
  %1929 = vmatpush1.msra.mxu0 %v1928
  %1930 = vmatprep.subr.mxu0 0.0
  %v1931 = vand.u32 %v1890, 4294901760
  %1932 = vmatpush1.msra.mxu0 %v1931
  %1933 = vmatprep.subr.mxu0 0.0
  %v1934 = vand.u32 %v1891, 4294901760
  %1935 = vmatpush1.msra.mxu0 %v1934
  %1936 = vmatprep.subr.mxu0 0.0
  %v1937 = vand.u32 %v1892, 4294901760
  %1938 = vmatpush1.msra.mxu0 %v1937
  %1939 = vmatprep.subr.mxu0 0.0
  %v1940 = vand.u32 %v1893, 4294901760
  %1941 = vmatpush1.msra.mxu0 %v1940
  %1942 = vmatprep.subr.mxu0 0.0
  %1943 = vmatpush1.msra.mxu0 0.0
  %1944 = vmatprep.subr.mxu0 0.0
  %1945 = vmatpush1.msra.mxu0 0.0
  %1946 = vmatprep.subr.mxu0 0.0
  %1947 = vmatpush1.msra.mxu0 0.0
  %1948 = vmatprep.subr.mxu0 0.0
  %1949 = vmatpush1.msra.mxu0 0.0
  %1950 = vmatprep.subr.mxu0 0.0
  %1951 = vmatpush1.msra.mxu0 0.0
  %1952 = vmatprep.subr.mxu0 0.0
  %1953 = vmatpush1.msra.mxu0 0.0
  %1954 = vmatprep.subr.mxu0 0.0
  %1955 = vmatpush1.msra.mxu0 0.0
  %1956 = vmatprep.subr.mxu0 0.0
  %1957 = vmatpush1.msra.mxu0 0.0
  %1958 = vmatprep.subr.mxu0 0.0
  %1959 = vmatpush1.msra.mxu0 0.0
  %1960 = vmatprep.subr.mxu0 0.0
  %1961 = vmatpush1.msra.mxu0 0.0
  %1962 = vmatprep.subr.mxu0 0.0
  %1963 = vmatpush1.msra.mxu0 0.0
  %1964 = vmatprep.subr.mxu0 0.0
  %1965 = vmatpush1.msra.mxu0 0.0
  %1966 = vmatprep.subr.mxu0 0.0
  %1967 = vmatpush1.msra.mxu0 0.0
  %1968 = vmatprep.subr.mxu0 0.0
  %1969 = vmatpush1.msra.mxu0 0.0
  %1970 = vmatprep.subr.mxu0 0.0
  %1971 = vmatpush1.msra.mxu0 0.0
  %1972 = vmatprep.subr.mxu0 0.0
  %1973 = vmatpush1.msra.mxu0 0.0
  %1974 = vmatprep.mubr.f32.mxu0 0.0
  %v1975 = vand.u32 %v1877, 4294901760
  %v1976 = vsub.f32 %v1877, %v1975
  %v1977 = vand.u32 %v1976, 4294901760
  %v1978 = vsub.f32 %v1976, %v1977
  %v1979 = vand.u32 %v1978, 4294901760
  %1980 = vmatmul.mubr.f32.gmra.mrb[0].mxu0 %v1979
  %v1981 = vpop.f32.mrb[0].mxu0
  %v1982 = vadd.f32 0.0, %v1981
  %v1983 = vpop.f32.mrb[0].mxu0
  %1984 = vdwg.mxu0
  %1985 = vmatprep.subr.mxu0 0.0
  %v1986 = vand.u32 %v1878, 4294901760
  %v1987 = vsub.f32 %v1878, %v1986
  %v1988 = vand.u32 %v1987, 4294901760
  %v1989 = vsub.f32 %v1987, %v1988
  %v1990 = vand.u32 %v1989, 4294901760
  %1991 = vmatpush1.msra.mxu0 %v1990
  %1992 = vmatprep.subr.mxu0 0.0
  %v1993 = vand.u32 %v1879, 4294901760
  %v1994 = vsub.f32 %v1879, %v1993
  %v1995 = vand.u32 %v1994, 4294901760
  %v1996 = vsub.f32 %v1994, %v1995
  %v1997 = vand.u32 %v1996, 4294901760
  %1998 = vmatpush1.msra.mxu0 %v1997
  %1999 = vmatprep.subr.mxu0 0.0
  %v2000 = vand.u32 %v1880, 4294901760
  %v2001 = vsub.f32 %v1880, %v2000
  %v2002 = vand.u32 %v2001, 4294901760
  %v2003 = vsub.f32 %v2001, %v2002
  %v2004 = vand.u32 %v2003, 4294901760
  %2005 = vmatpush1.msra.mxu0 %v2004
  %2006 = vmatprep.subr.mxu0 0.0
  %v2007 = vand.u32 %v1881, 4294901760
  %v2008 = vsub.f32 %v1881, %v2007
  %v2009 = vand.u32 %v2008, 4294901760
  %v2010 = vsub.f32 %v2008, %v2009
  %v2011 = vand.u32 %v2010, 4294901760
  %2012 = vmatpush1.msra.mxu0 %v2011
  %2013 = vmatprep.subr.mxu0 0.0
  %v2014 = vand.u32 %v1882, 4294901760
  %v2015 = vsub.f32 %v1882, %v2014
  %v2016 = vand.u32 %v2015, 4294901760
  %v2017 = vsub.f32 %v2015, %v2016
  %v2018 = vand.u32 %v2017, 4294901760
  %2019 = vmatpush1.msra.mxu0 %v2018
  %2020 = vmatprep.subr.mxu0 0.0
  %v2021 = vand.u32 %v1883, 4294901760
  %v2022 = vsub.f32 %v1883, %v2021
  %v2023 = vand.u32 %v2022, 4294901760
  %v2024 = vsub.f32 %v2022, %v2023
  %v2025 = vand.u32 %v2024, 4294901760
  %2026 = vmatpush1.msra.mxu0 %v2025
  %2027 = vmatprep.subr.mxu0 0.0
  %v2028 = vand.u32 %v1884, 4294901760
  %v2029 = vsub.f32 %v1884, %v2028
  %v2030 = vand.u32 %v2029, 4294901760
  %v2031 = vsub.f32 %v2029, %v2030
  %v2032 = vand.u32 %v2031, 4294901760
  %2033 = vmatpush1.msra.mxu0 %v2032
  %2034 = vmatprep.subr.mxu0 0.0
  %v2035 = vand.u32 %v1885, 4294901760
  %v2036 = vsub.f32 %v1885, %v2035
  %v2037 = vand.u32 %v2036, 4294901760
  %v2038 = vsub.f32 %v2036, %v2037
  %v2039 = vand.u32 %v2038, 4294901760
  %2040 = vmatpush1.msra.mxu0 %v2039
  %2041 = vmatprep.subr.mxu0 0.0
  %v2042 = vand.u32 %v1886, 4294901760
  %v2043 = vsub.f32 %v1886, %v2042
  %v2044 = vand.u32 %v2043, 4294901760
  %v2045 = vsub.f32 %v2043, %v2044
  %v2046 = vand.u32 %v2045, 4294901760
  %2047 = vmatpush1.msra.mxu0 %v2046
  %2048 = vmatprep.subr.mxu0 0.0
  %v2049 = vand.u32 %v1887, 4294901760
  %v2050 = vsub.f32 %v1887, %v2049
  %v2051 = vand.u32 %v2050, 4294901760
  %v2052 = vsub.f32 %v2050, %v2051
  %v2053 = vand.u32 %v2052, 4294901760
  %2054 = vmatpush1.msra.mxu0 %v2053
  %2055 = vmatprep.subr.mxu0 0.0
  %v2056 = vand.u32 %v1888, 4294901760
  %v2057 = vsub.f32 %v1888, %v2056
  %v2058 = vand.u32 %v2057, 4294901760
  %v2059 = vsub.f32 %v2057, %v2058
  %v2060 = vand.u32 %v2059, 4294901760
  %2061 = vmatpush1.msra.mxu0 %v2060
  %2062 = vmatprep.subr.mxu0 0.0
  %v2063 = vand.u32 %v1889, 4294901760
  %v2064 = vsub.f32 %v1889, %v2063
  %v2065 = vand.u32 %v2064, 4294901760
  %v2066 = vsub.f32 %v2064, %v2065
  %v2067 = vand.u32 %v2066, 4294901760
  %2068 = vmatpush1.msra.mxu0 %v2067
  %2069 = vmatprep.subr.mxu0 0.0
  %v2070 = vand.u32 %v1890, 4294901760
  %v2071 = vsub.f32 %v1890, %v2070
  %v2072 = vand.u32 %v2071, 4294901760
  %v2073 = vsub.f32 %v2071, %v2072
  %v2074 = vand.u32 %v2073, 4294901760
  %2075 = vmatpush1.msra.mxu0 %v2074
  %2076 = vmatprep.subr.mxu0 0.0
  %v2077 = vand.u32 %v1891, 4294901760
  %v2078 = vsub.f32 %v1891, %v2077
  %v2079 = vand.u32 %v2078, 4294901760
  %v2080 = vsub.f32 %v2078, %v2079
  %v2081 = vand.u32 %v2080, 4294901760
  %2082 = vmatpush1.msra.mxu0 %v2081
  %2083 = vmatprep.subr.mxu0 0.0
  %v2084 = vand.u32 %v1892, 4294901760
  %v2085 = vsub.f32 %v1892, %v2084
  %v2086 = vand.u32 %v2085, 4294901760
  %v2087 = vsub.f32 %v2085, %v2086
  %v2088 = vand.u32 %v2087, 4294901760
  %2089 = vmatpush1.msra.mxu0 %v2088
  %2090 = vmatprep.subr.mxu0 0.0
  %v2091 = vand.u32 %v1893, 4294901760
  %v2092 = vsub.f32 %v1893, %v2091
  %v2093 = vand.u32 %v2092, 4294901760
  %v2094 = vsub.f32 %v2092, %v2093
  %v2095 = vand.u32 %v2094, 4294901760
  %2096 = vmatpush1.msra.mxu0 %v2095
  %2097 = vmatprep.subr.mxu0 0.0
  %2098 = vmatpush1.msra.mxu0 0.0
  %2099 = vmatprep.subr.mxu0 0.0
  %2100 = vmatpush1.msra.mxu0 0.0
  %2101 = vmatprep.subr.mxu0 0.0
  %2102 = vmatpush1.msra.mxu0 0.0
  %2103 = vmatprep.subr.mxu0 0.0
  %2104 = vmatpush1.msra.mxu0 0.0
  %2105 = vmatprep.subr.mxu0 0.0
  %2106 = vmatpush1.msra.mxu0 0.0
  %2107 = vmatprep.subr.mxu0 0.0
  %2108 = vmatpush1.msra.mxu0 0.0
  %2109 = vmatprep.subr.mxu0 0.0
  %2110 = vmatpush1.msra.mxu0 0.0
  %2111 = vmatprep.subr.mxu0 0.0
  %2112 = vmatpush1.msra.mxu0 0.0
  %2113 = vmatprep.subr.mxu0 0.0
  %2114 = vmatpush1.msra.mxu0 0.0
  %2115 = vmatprep.subr.mxu0 0.0
  %2116 = vmatpush1.msra.mxu0 0.0
  %2117 = vmatprep.subr.mxu0 0.0
  %2118 = vmatpush1.msra.mxu0 0.0
  %2119 = vmatprep.subr.mxu0 0.0
  %2120 = vmatpush1.msra.mxu0 0.0
  %2121 = vmatprep.subr.mxu0 0.0
  %2122 = vmatpush1.msra.mxu0 0.0
  %2123 = vmatprep.subr.mxu0 0.0
  %2124 = vmatpush1.msra.mxu0 0.0
  %2125 = vmatprep.subr.mxu0 0.0
  %2126 = vmatpush1.msra.mxu0 0.0
  %2127 = vmatprep.subr.mxu0 0.0
  %2128 = vmatpush1.msra.mxu0 0.0
  %2129 = vmatprep.mubr.f32.mxu0 0.0
  %v2130 = vand.u32 %v1877, 4294901760
  %2131 = vmatmul.mubr.f32.gmra.mrb[0].mxu0 %v2130
  %v2132 = vpop.f32.mrb[0].mxu0
  %v2133 = vadd.f32 %v1982, %v2132
  %v2134 = vpop.f32.mrb[0].mxu0
  %2135 = vdwg.mxu0
  %2136 = vmatprep.subr.mxu0 0.0
  %v2137 = vand.u32 %v1878, 4294901760
  %v2138 = vsub.f32 %v1878, %v2137
  %2139 = vmatpush1.msra.mxu0 %v2138
  %2140 = vmatprep.subr.mxu0 0.0
  %v2141 = vand.u32 %v1879, 4294901760
  %v2142 = vsub.f32 %v1879, %v2141
  %2143 = vmatpush1.msra.mxu0 %v2142
  %2144 = vmatprep.subr.mxu0 0.0
  %v2145 = vand.u32 %v1880, 4294901760
  %v2146 = vsub.f32 %v1880, %v2145
  %2147 = vmatpush1.msra.mxu0 %v2146
  %2148 = vmatprep.subr.mxu0 0.0
  %v2149 = vand.u32 %v1881, 4294901760
  %v2150 = vsub.f32 %v1881, %v2149
  %2151 = vmatpush1.msra.mxu0 %v2150
  %2152 = vmatprep.subr.mxu0 0.0
  %v2153 = vand.u32 %v1882, 4294901760
  %v2154 = vsub.f32 %v1882, %v2153
  %2155 = vmatpush1.msra.mxu0 %v2154
  %2156 = vmatprep.subr.mxu0 0.0
  %v2157 = vand.u32 %v1883, 4294901760
  %v2158 = vsub.f32 %v1883, %v2157
  %2159 = vmatpush1.msra.mxu0 %v2158
  %2160 = vmatprep.subr.mxu0 0.0
  %v2161 = vand.u32 %v1884, 4294901760
  %v2162 = vsub.f32 %v1884, %v2161
  %2163 = vmatpush1.msra.mxu0 %v2162
  %2164 = vmatprep.subr.mxu0 0.0
  %v2165 = vand.u32 %v1885, 4294901760
  %v2166 = vsub.f32 %v1885, %v2165
  %2167 = vmatpush1.msra.mxu0 %v2166
  %2168 = vmatprep.subr.mxu0 0.0
  %v2169 = vand.u32 %v1886, 4294901760
  %v2170 = vsub.f32 %v1886, %v2169
  %2171 = vmatpush1.msra.mxu0 %v2170
  %2172 = vmatprep.subr.mxu0 0.0
  %v2173 = vand.u32 %v1887, 4294901760
  %v2174 = vsub.f32 %v1887, %v2173
  %2175 = vmatpush1.msra.mxu0 %v2174
  %2176 = vmatprep.subr.mxu0 0.0
  %v2177 = vand.u32 %v1888, 4294901760
  %v2178 = vsub.f32 %v1888, %v2177
  %2179 = vmatpush1.msra.mxu0 %v2178
  %2180 = vmatprep.subr.mxu0 0.0
  %v2181 = vand.u32 %v1889, 4294901760
  %v2182 = vsub.f32 %v1889, %v2181
  %2183 = vmatpush1.msra.mxu0 %v2182
  %2184 = vmatprep.subr.mxu0 0.0
  %v2185 = vand.u32 %v1890, 4294901760
  %v2186 = vsub.f32 %v1890, %v2185
  %2187 = vmatpush1.msra.mxu0 %v2186
  %2188 = vmatprep.subr.mxu0 0.0
  %v2189 = vand.u32 %v1891, 4294901760
  %v2190 = vsub.f32 %v1891, %v2189
  %2191 = vmatpush1.msra.mxu0 %v2190
  %2192 = vmatprep.subr.mxu0 0.0
  %v2193 = vand.u32 %v1892, 4294901760
  %v2194 = vsub.f32 %v1892, %v2193
  %2195 = vmatpush1.msra.mxu0 %v2194
  %2196 = vmatprep.subr.mxu0 0.0
  %v2197 = vand.u32 %v1893, 4294901760
  %v2198 = vsub.f32 %v1893, %v2197
  %2199 = vmatpush1.msra.mxu0 %v2198
  %2200 = vmatprep.subr.mxu0 0.0
  %2201 = vmatpush1.msra.mxu0 0.0
  %2202 = vmatprep.subr.mxu0 0.0
  %2203 = vmatpush1.msra.mxu0 0.0
  %2204 = vmatprep.subr.mxu0 0.0
  %2205 = vmatpush1.msra.mxu0 0.0
  %2206 = vmatprep.subr.mxu0 0.0
  %2207 = vmatpush1.msra.mxu0 0.0
  %2208 = vmatprep.subr.mxu0 0.0
  %2209 = vmatpush1.msra.mxu0 0.0
  %2210 = vmatprep.subr.mxu0 0.0
  %2211 = vmatpush1.msra.mxu0 0.0
  %2212 = vmatprep.subr.mxu0 0.0
  %2213 = vmatpush1.msra.mxu0 0.0
  %2214 = vmatprep.subr.mxu0 0.0
  %2215 = vmatpush1.msra.mxu0 0.0
  %2216 = vmatprep.subr.mxu0 0.0
  %2217 = vmatpush1.msra.mxu0 0.0
  %2218 = vmatprep.subr.mxu0 0.0
  %2219 = vmatpush1.msra.mxu0 0.0
  %2220 = vmatprep.subr.mxu0 0.0
  %2221 = vmatpush1.msra.mxu0 0.0
  %2222 = vmatprep.subr.mxu0 0.0
  %2223 = vmatpush1.msra.mxu0 0.0
  %2224 = vmatprep.subr.mxu0 0.0
  %2225 = vmatpush1.msra.mxu0 0.0
  %2226 = vmatprep.subr.mxu0 0.0
  %2227 = vmatpush1.msra.mxu0 0.0
  %2228 = vmatprep.subr.mxu0 0.0
  %2229 = vmatpush1.msra.mxu0 0.0
  %2230 = vmatprep.subr.mxu0 0.0
  %2231 = vmatpush1.msra.mxu0 0.0
  %2232 = vmatprep.mubr.f32.mxu0 0.0
  %v2233 = vand.u32 %v1877, 4294901760
  %v2234 = vsub.f32 %v1877, %v2233
  %2235 = vmatmul.mubr.f32.gmra.mrb[0].mxu0 %v2234
  %v2236 = vpop.f32.mrb[0].mxu0
  %v2237 = vadd.f32 %v2133, %v2236
  %v2238 = vpop.f32.mrb[0].mxu0
  %2239 = vdwg.mxu0
  %2240 = vmatprep.subr.mxu0 0.0
  %v2241 = vand.u32 %v1878, 4294901760
  %2242 = vmatpush1.msra.mxu0 %v2241
  %2243 = vmatprep.subr.mxu0 0.0
  %v2244 = vand.u32 %v1879, 4294901760
  %2245 = vmatpush1.msra.mxu0 %v2244
  %2246 = vmatprep.subr.mxu0 0.0
  %v2247 = vand.u32 %v1880, 4294901760
  %2248 = vmatpush1.msra.mxu0 %v2247
  %2249 = vmatprep.subr.mxu0 0.0
  %v2250 = vand.u32 %v1881, 4294901760
  %2251 = vmatpush1.msra.mxu0 %v2250
  %2252 = vmatprep.subr.mxu0 0.0
  %v2253 = vand.u32 %v1882, 4294901760
  %2254 = vmatpush1.msra.mxu0 %v2253
  %2255 = vmatprep.subr.mxu0 0.0
  %v2256 = vand.u32 %v1883, 4294901760
  %2257 = vmatpush1.msra.mxu0 %v2256
  %2258 = vmatprep.subr.mxu0 0.0
  %v2259 = vand.u32 %v1884, 4294901760
  %2260 = vmatpush1.msra.mxu0 %v2259
  %2261 = vmatprep.subr.mxu0 0.0
  %v2262 = vand.u32 %v1885, 4294901760
  %2263 = vmatpush1.msra.mxu0 %v2262
  %2264 = vmatprep.subr.mxu0 0.0
  %v2265 = vand.u32 %v1886, 4294901760
  %2266 = vmatpush1.msra.mxu0 %v2265
  %2267 = vmatprep.subr.mxu0 0.0
  %v2268 = vand.u32 %v1887, 4294901760
  %2269 = vmatpush1.msra.mxu0 %v2268
  %2270 = vmatprep.subr.mxu0 0.0
  %v2271 = vand.u32 %v1888, 4294901760
  %2272 = vmatpush1.msra.mxu0 %v2271
  %2273 = vmatprep.subr.mxu0 0.0
  %v2274 = vand.u32 %v1889, 4294901760
  %2275 = vmatpush1.msra.mxu0 %v2274
  %2276 = vmatprep.subr.mxu0 0.0
  %v2277 = vand.u32 %v1890, 4294901760
  %2278 = vmatpush1.msra.mxu0 %v2277
  %2279 = vmatprep.subr.mxu0 0.0
  %v2280 = vand.u32 %v1891, 4294901760
  %2281 = vmatpush1.msra.mxu0 %v2280
  %2282 = vmatprep.subr.mxu0 0.0
  %v2283 = vand.u32 %v1892, 4294901760
  %2284 = vmatpush1.msra.mxu0 %v2283
  %2285 = vmatprep.subr.mxu0 0.0
  %v2286 = vand.u32 %v1893, 4294901760
  %2287 = vmatpush1.msra.mxu0 %v2286
  %2288 = vmatprep.subr.mxu0 0.0
  %2289 = vmatpush1.msra.mxu0 0.0
  %2290 = vmatprep.subr.mxu0 0.0
  %2291 = vmatpush1.msra.mxu0 0.0
  %2292 = vmatprep.subr.mxu0 0.0
  %2293 = vmatpush1.msra.mxu0 0.0
  %2294 = vmatprep.subr.mxu0 0.0
  %2295 = vmatpush1.msra.mxu0 0.0
  %2296 = vmatprep.subr.mxu0 0.0
  %2297 = vmatpush1.msra.mxu0 0.0
  %2298 = vmatprep.subr.mxu0 0.0
  %2299 = vmatpush1.msra.mxu0 0.0
  %2300 = vmatprep.subr.mxu0 0.0
  %2301 = vmatpush1.msra.mxu0 0.0
  %2302 = vmatprep.subr.mxu0 0.0
  %2303 = vmatpush1.msra.mxu0 0.0
  %2304 = vmatprep.subr.mxu0 0.0
  %2305 = vmatpush1.msra.mxu0 0.0
  %2306 = vmatprep.subr.mxu0 0.0
  %2307 = vmatpush1.msra.mxu0 0.0
  %2308 = vmatprep.subr.mxu0 0.0
  %2309 = vmatpush1.msra.mxu0 0.0
  %2310 = vmatprep.subr.mxu0 0.0
  %2311 = vmatpush1.msra.mxu0 0.0
  %2312 = vmatprep.subr.mxu0 0.0
  %2313 = vmatpush1.msra.mxu0 0.0
  %2314 = vmatprep.subr.mxu0 0.0
  %2315 = vmatpush1.msra.mxu0 0.0
  %2316 = vmatprep.subr.mxu0 0.0
  %2317 = vmatpush1.msra.mxu0 0.0
  %2318 = vmatprep.subr.mxu0 0.0
  %2319 = vmatpush1.msra.mxu0 0.0
  %2320 = vmatprep.mubr.f32.mxu0 0.0
  %v2321 = vand.u32 %v1877, 4294901760
  %v2322 = vsub.f32 %v1877, %v2321
  %v2323 = vand.u32 %v2322, 4294901760
  %2324 = vmatmul.mubr.f32.gmra.mrb[0].mxu0 %v2323
  %v2325 = vpop.f32.mrb[0].mxu0
  %v2326 = vadd.f32 %v2237, %v2325
  %v2327 = vpop.f32.mrb[0].mxu0
  %2328 = vdwg.mxu0
  %2329 = vmatprep.subr.mxu0 0.0
  %v2330 = vand.u32 %v1878, 4294901760
  %v2331 = vsub.f32 %v1878, %v2330
  %v2332 = vand.u32 %v2331, 4294901760
  %2333 = vmatpush1.msra.mxu0 %v2332
  %2334 = vmatprep.subr.mxu0 0.0
  %v2335 = vand.u32 %v1879, 4294901760
  %v2336 = vsub.f32 %v1879, %v2335
  %v2337 = vand.u32 %v2336, 4294901760
  %2338 = vmatpush1.msra.mxu0 %v2337
  %2339 = vmatprep.subr.mxu0 0.0
  %v2340 = vand.u32 %v1880, 4294901760
  %v2341 = vsub.f32 %v1880, %v2340
  %v2342 = vand.u32 %v2341, 4294901760
  %2343 = vmatpush1.msra.mxu0 %v2342
  %2344 = vmatprep.subr.mxu0 0.0
  %v2345 = vand.u32 %v1881, 4294901760
  %v2346 = vsub.f32 %v1881, %v2345
  %v2347 = vand.u32 %v2346, 4294901760
  %2348 = vmatpush1.msra.mxu0 %v2347
  %2349 = vmatprep.subr.mxu0 0.0
  %v2350 = vand.u32 %v1882, 4294901760
  %v2351 = vsub.f32 %v1882, %v2350
  %v2352 = vand.u32 %v2351, 4294901760
  %2353 = vmatpush1.msra.mxu0 %v2352
  %2354 = vmatprep.subr.mxu0 0.0
  %v2355 = vand.u32 %v1883, 4294901760
  %v2356 = vsub.f32 %v1883, %v2355
  %v2357 = vand.u32 %v2356, 4294901760
  %2358 = vmatpush1.msra.mxu0 %v2357
  %2359 = vmatprep.subr.mxu0 0.0
  %v2360 = vand.u32 %v1884, 4294901760
  %v2361 = vsub.f32 %v1884, %v2360
  %v2362 = vand.u32 %v2361, 4294901760
  %2363 = vmatpush1.msra.mxu0 %v2362
  %2364 = vmatprep.subr.mxu0 0.0
  %v2365 = vand.u32 %v1885, 4294901760
  %v2366 = vsub.f32 %v1885, %v2365
  %v2367 = vand.u32 %v2366, 4294901760
  %2368 = vmatpush1.msra.mxu0 %v2367
  %2369 = vmatprep.subr.mxu0 0.0
  %v2370 = vand.u32 %v1886, 4294901760
  %v2371 = vsub.f32 %v1886, %v2370
  %v2372 = vand.u32 %v2371, 4294901760
  %2373 = vmatpush1.msra.mxu0 %v2372
  %2374 = vmatprep.subr.mxu0 0.0
  %v2375 = vand.u32 %v1887, 4294901760
  %v2376 = vsub.f32 %v1887, %v2375
  %v2377 = vand.u32 %v2376, 4294901760
  %2378 = vmatpush1.msra.mxu0 %v2377
  %2379 = vmatprep.subr.mxu0 0.0
  %v2380 = vand.u32 %v1888, 4294901760
  %v2381 = vsub.f32 %v1888, %v2380
  %v2382 = vand.u32 %v2381, 4294901760
  %2383 = vmatpush1.msra.mxu0 %v2382
  %2384 = vmatprep.subr.mxu0 0.0
  %v2385 = vand.u32 %v1889, 4294901760
  %v2386 = vsub.f32 %v1889, %v2385
  %v2387 = vand.u32 %v2386, 4294901760
  %2388 = vmatpush1.msra.mxu0 %v2387
  %2389 = vmatprep.subr.mxu0 0.0
  %v2390 = vand.u32 %v1890, 4294901760
  %v2391 = vsub.f32 %v1890, %v2390
  %v2392 = vand.u32 %v2391, 4294901760
  %2393 = vmatpush1.msra.mxu0 %v2392
  %2394 = vmatprep.subr.mxu0 0.0
  %v2395 = vand.u32 %v1891, 4294901760
  %v2396 = vsub.f32 %v1891, %v2395
  %v2397 = vand.u32 %v2396, 4294901760
  %2398 = vmatpush1.msra.mxu0 %v2397
  %2399 = vmatprep.subr.mxu0 0.0
  %v2400 = vand.u32 %v1892, 4294901760
  %v2401 = vsub.f32 %v1892, %v2400
  %v2402 = vand.u32 %v2401, 4294901760
  %2403 = vmatpush1.msra.mxu0 %v2402
  %2404 = vmatprep.subr.mxu0 0.0
  %v2405 = vand.u32 %v1893, 4294901760
  %v2406 = vsub.f32 %v1893, %v2405
  %v2407 = vand.u32 %v2406, 4294901760
  %2408 = vmatpush1.msra.mxu0 %v2407
  %2409 = vmatprep.subr.mxu0 0.0
  %2410 = vmatpush1.msra.mxu0 0.0
  %2411 = vmatprep.subr.mxu0 0.0
  %2412 = vmatpush1.msra.mxu0 0.0
  %2413 = vmatprep.subr.mxu0 0.0
  %2414 = vmatpush1.msra.mxu0 0.0
  %2415 = vmatprep.subr.mxu0 0.0
  %2416 = vmatpush1.msra.mxu0 0.0
  %2417 = vmatprep.subr.mxu0 0.0
  %2418 = vmatpush1.msra.mxu0 0.0
  %2419 = vmatprep.subr.mxu0 0.0
  %2420 = vmatpush1.msra.mxu0 0.0
  %2421 = vmatprep.subr.mxu0 0.0
  %2422 = vmatpush1.msra.mxu0 0.0
  %2423 = vmatprep.subr.mxu0 0.0
  %2424 = vmatpush1.msra.mxu0 0.0
  %2425 = vmatprep.subr.mxu0 0.0
  %2426 = vmatpush1.msra.mxu0 0.0
  %2427 = vmatprep.subr.mxu0 0.0
  %2428 = vmatpush1.msra.mxu0 0.0
  %2429 = vmatprep.subr.mxu0 0.0
  %2430 = vmatpush1.msra.mxu0 0.0
  %2431 = vmatprep.subr.mxu0 0.0
  %2432 = vmatpush1.msra.mxu0 0.0
  %2433 = vmatprep.subr.mxu0 0.0
  %2434 = vmatpush1.msra.mxu0 0.0
  %2435 = vmatprep.subr.mxu0 0.0
  %2436 = vmatpush1.msra.mxu0 0.0
  %2437 = vmatprep.subr.mxu0 0.0
  %2438 = vmatpush1.msra.mxu0 0.0
  %2439 = vmatprep.subr.mxu0 0.0
  %2440 = vmatpush1.msra.mxu0 0.0
  %2441 = vmatprep.mubr.f32.mxu0 0.0
  %v2442 = vand.u32 %v1877, 4294901760
  %2443 = vmatmul.mubr.f32.gmra.mrb[0].mxu0 %v2442
  %v2444 = vpop.f32.mrb[0].mxu0
  %v2445 = vadd.f32 %v2326, %v2444
  %v2446 = vpop.f32.mrb[0].mxu0
  %2447 = vdwg.mxu0
  %2448 = vmatprep.subr.mxu0 0.0
  %v2449 = vand.u32 %v1878, 4294901760
  %2450 = vmatpush1.msra.mxu0 %v2449
  %2451 = vmatprep.subr.mxu0 0.0
  %v2452 = vand.u32 %v1879, 4294901760
  %2453 = vmatpush1.msra.mxu0 %v2452
  %2454 = vmatprep.subr.mxu0 0.0
  %v2455 = vand.u32 %v1880, 4294901760
  %2456 = vmatpush1.msra.mxu0 %v2455
  %2457 = vmatprep.subr.mxu0 0.0
  %v2458 = vand.u32 %v1881, 4294901760
  %2459 = vmatpush1.msra.mxu0 %v2458
  %2460 = vmatprep.subr.mxu0 0.0
  %v2461 = vand.u32 %v1882, 4294901760
  %2462 = vmatpush1.msra.mxu0 %v2461
  %2463 = vmatprep.subr.mxu0 0.0
  %v2464 = vand.u32 %v1883, 4294901760
  %2465 = vmatpush1.msra.mxu0 %v2464
  %2466 = vmatprep.subr.mxu0 0.0
  %v2467 = vand.u32 %v1884, 4294901760
  %2468 = vmatpush1.msra.mxu0 %v2467
  %2469 = vmatprep.subr.mxu0 0.0
  %v2470 = vand.u32 %v1885, 4294901760
  %2471 = vmatpush1.msra.mxu0 %v2470
  %2472 = vmatprep.subr.mxu0 0.0
  %v2473 = vand.u32 %v1886, 4294901760
  %2474 = vmatpush1.msra.mxu0 %v2473
  %2475 = vmatprep.subr.mxu0 0.0
  %v2476 = vand.u32 %v1887, 4294901760
  %2477 = vmatpush1.msra.mxu0 %v2476
  %2478 = vmatprep.subr.mxu0 0.0
  %v2479 = vand.u32 %v1888, 4294901760
  %2480 = vmatpush1.msra.mxu0 %v2479
  %2481 = vmatprep.subr.mxu0 0.0
  %v2482 = vand.u32 %v1889, 4294901760
  %2483 = vmatpush1.msra.mxu0 %v2482
  %2484 = vmatprep.subr.mxu0 0.0
  %v2485 = vand.u32 %v1890, 4294901760
  %2486 = vmatpush1.msra.mxu0 %v2485
  %2487 = vmatprep.subr.mxu0 0.0
  %v2488 = vand.u32 %v1891, 4294901760
  %2489 = vmatpush1.msra.mxu0 %v2488
  %2490 = vmatprep.subr.mxu0 0.0
  %v2491 = vand.u32 %v1892, 4294901760
  %2492 = vmatpush1.msra.mxu0 %v2491
  %2493 = vmatprep.subr.mxu0 0.0
  %v2494 = vand.u32 %v1893, 4294901760
  %2495 = vmatpush1.msra.mxu0 %v2494
  %2496 = vmatprep.subr.mxu0 0.0
  %2497 = vmatpush1.msra.mxu0 0.0
  %2498 = vmatprep.subr.mxu0 0.0
  %2499 = vmatpush1.msra.mxu0 0.0
  %2500 = vmatprep.subr.mxu0 0.0
  %2501 = vmatpush1.msra.mxu0 0.0
  %2502 = vmatprep.subr.mxu0 0.0
  %2503 = vmatpush1.msra.mxu0 0.0
  %2504 = vmatprep.subr.mxu0 0.0
  %2505 = vmatpush1.msra.mxu0 0.0
  %2506 = vmatprep.subr.mxu0 0.0
  %2507 = vmatpush1.msra.mxu0 0.0
  %2508 = vmatprep.subr.mxu0 0.0
  %2509 = vmatpush1.msra.mxu0 0.0
  %2510 = vmatprep.subr.mxu0 0.0
  %2511 = vmatpush1.msra.mxu0 0.0
  %2512 = vmatprep.subr.mxu0 0.0
  %2513 = vmatpush1.msra.mxu0 0.0
  %2514 = vmatprep.subr.mxu0 0.0
  %2515 = vmatpush1.msra.mxu0 0.0
  %2516 = vmatprep.subr.mxu0 0.0
  %2517 = vmatpush1.msra.mxu0 0.0
  %2518 = vmatprep.subr.mxu0 0.0
  %2519 = vmatpush1.msra.mxu0 0.0
  %2520 = vmatprep.subr.mxu0 0.0
  %2521 = vmatpush1.msra.mxu0 0.0
  %2522 = vmatprep.subr.mxu0 0.0
  %2523 = vmatpush1.msra.mxu0 0.0
  %2524 = vmatprep.subr.mxu0 0.0
  %2525 = vmatpush1.msra.mxu0 0.0
  %2526 = vmatprep.subr.mxu0 0.0
  %2527 = vmatpush1.msra.mxu0 0.0
  %2528 = vmatprep.mubr.f32.mxu0 0.0
  %v2529 = vand.u32 %v1877, 4294901760
  %2530 = vmatmul.mubr.f32.gmra.mrb[0].mxu0 %v2529
  %v2531 = vpop.f32.mrb[0].mxu0
  %v2532 = vadd.f32 %v2445, %v2531
  %v2533 = vpop.f32.mrb[0].mxu0
  %2534 = vdwg.mxu0
  %v2535 = vmul.f32 %v2532, 0.0078125
  %v2536 = vmul.f32 %v2535, %v2535
  %v2538 = vrot.slane %v2536, 7
  %v2540 = vsub.f32 %v2535, %v2538
  %v2541 = vld [vmem:[%s7] sm:$0x1]
  %v2542 = vadd.f32 %v2540, 1e-05
  %v2543 = vrsqrt.pop %v2542
  %v2546 = vunpack.c.l.s4 1966171168
  %v2547 = vunpack.c.0.s8 %v2546
  %v2548 = vlaneseq
  %v2549 = vshrl.u32 %v2548, 7
  %v2550 = vsub.s32 %v2547, %v2549
  %v2551 = vrot.slane %v2543, %v2550
  %v2552 = vcombine.high %v2551, %v2551
  %v2554 = vunpack.c.l.s4 1966171168
  %v2555 = vunpack.c.0.s8 %v2554
  %v2556 = vlaneseq
  %v2557 = vshrl.u32 %v2556, 7
  %v2558 = vsub.s32 %v2555, %v2557
  %v2559 = vrot.slane %v2552, %v2558
  %v2561 = vmul.f32 %v2541, %v2559
  %v2562 = vld [vmem:[%s8] sm:$0x1]
  %v2563 = vmul.f32 %v2535, %v2561
  %v2564 = vsub.f32 %v2562, %v2563
  %v2566 = vlaneseq
  %v2567 = vshrl.u32 %v2566, 7
  %v2568 = vsub.s32 0, %v2567
  %v2569 = vrot.slane %v2564, %v2568
  %v2571 = vsel %vm339, %v2561, %v2569
  %v2572 = vld [vmem:[%s10] sm:$0xff]
  %v2574 = vsel %vm1036, %v2571, 0
  %2576 = vmatprep.subr.mxu0 0.0
  %v2577 = vand.u32 %v2572, 4294901760
  %2578 = vmatpush1.msra.mxu0 %v2577
  %2579 = vmatprep.subr.mxu0 0.0
  %2580 = vmatpush1.msra.mxu0 0.0
  %2581 = vmatprep.subr.mxu0 0.0
  %2582 = vmatpush1.msra.mxu0 0.0
  %2583 = vmatprep.subr.mxu0 0.0
  %2584 = vmatpush1.msra.mxu0 0.0
  %2585 = vmatprep.subr.mxu0 0.0
  %2586 = vmatpush1.msra.mxu0 0.0
  %2587 = vmatprep.subr.mxu0 0.0
  %2588 = vmatpush1.msra.mxu0 0.0
  %2589 = vmatprep.subr.mxu0 0.0
  %2590 = vmatpush1.msra.mxu0 0.0
  %2591 = vmatprep.subr.mxu0 0.0
  %2592 = vmatpush1.msra.mxu0 0.0
  %2593 = vmatprep.subr.mxu0 0.0
  %2594 = vmatpush1.msra.mxu0 0.0
  %2595 = vmatprep.subr.mxu0 0.0
  %2596 = vmatpush1.msra.mxu0 0.0
  %2597 = vmatprep.subr.mxu0 0.0
  %2598 = vmatpush1.msra.mxu0 0.0
  %2599 = vmatprep.subr.mxu0 0.0
  %2600 = vmatpush1.msra.mxu0 0.0
  %2601 = vmatprep.subr.mxu0 0.0
  %2602 = vmatpush1.msra.mxu0 0.0
  %2603 = vmatprep.subr.mxu0 0.0
  %2604 = vmatpush1.msra.mxu0 0.0
  %2605 = vmatprep.subr.mxu0 0.0
  %2606 = vmatpush1.msra.mxu0 0.0
  %2607 = vmatprep.subr.mxu0 0.0
  %2608 = vmatpush1.msra.mxu0 0.0
  %2609 = vmatprep.subr.mxu0 0.0
  %2610 = vmatpush1.msra.mxu0 0.0
  %2611 = vmatprep.subr.mxu0 0.0
  %2612 = vmatpush1.msra.mxu0 0.0
  %2613 = vmatprep.subr.mxu0 0.0
  %2614 = vmatpush1.msra.mxu0 0.0
  %2615 = vmatprep.subr.mxu0 0.0
  %2616 = vmatpush1.msra.mxu0 0.0
  %2617 = vmatprep.subr.mxu0 0.0
  %2618 = vmatpush1.msra.mxu0 0.0
  %2619 = vmatprep.subr.mxu0 0.0
  %2620 = vmatpush1.msra.mxu0 0.0
  %2621 = vmatprep.subr.mxu0 0.0
  %2622 = vmatpush1.msra.mxu0 0.0
  %2623 = vmatprep.subr.mxu0 0.0
  %2624 = vmatpush1.msra.mxu0 0.0
  %2625 = vmatprep.subr.mxu0 0.0
  %2626 = vmatpush1.msra.mxu0 0.0
  %2627 = vmatprep.subr.mxu0 0.0
  %2628 = vmatpush1.msra.mxu0 0.0
  %2629 = vmatprep.subr.mxu0 0.0
  %2630 = vmatpush1.msra.mxu0 0.0
  %2631 = vmatprep.subr.mxu0 0.0
  %2632 = vmatpush1.msra.mxu0 0.0
  %2633 = vmatprep.subr.mxu0 0.0
  %2634 = vmatpush1.msra.mxu0 0.0
  %2635 = vmatprep.subr.mxu0 0.0
  %2636 = vmatpush1.msra.mxu0 0.0
  %2637 = vmatprep.subr.mxu0 0.0
  %2638 = vmatpush1.msra.mxu0 0.0
  %2639 = vmatprep.subr.mxu0 0.0
  %2640 = vmatpush1.msra.mxu0 0.0
  %2641 = vmatprep.mubr.f32.mxu0 0.0
  %v2642 = vand.u32 %v2574, 4294901760
  %v2643 = vsub.f32 %v2574, %v2642
  %v2644 = vand.u32 %v2643, 4294901760
  %v2645 = vsub.f32 %v2643, %v2644
  %v2646 = vand.u32 %v2645, 4294901760
  %2647 = vmatmul.mubr.f32.gmra.mrb[0].mxu0 %v2646
  %v2648 = vpop.f32.mrb[0].mxu0
  %v2649 = vadd.f32 0.0, %v2648
  %v2650 = vpop.f32.mrb[0].mxu0
  %2651 = vdwg.mxu0
  %2652 = vmatprep.subr.mxu0 0.0
  %v2653 = vand.u32 %v2572, 4294901760
  %v2654 = vsub.f32 %v2572, %v2653
  %v2655 = vand.u32 %v2654, 4294901760
  %v2656 = vsub.f32 %v2654, %v2655
  %v2657 = vand.u32 %v2656, 4294901760
  %2658 = vmatpush1.msra.mxu0 %v2657
  %2659 = vmatprep.subr.mxu0 0.0
  %2660 = vmatpush1.msra.mxu0 0.0
  %2661 = vmatprep.subr.mxu0 0.0
  %2662 = vmatpush1.msra.mxu0 0.0
  %2663 = vmatprep.subr.mxu0 0.0
  %2664 = vmatpush1.msra.mxu0 0.0
  %2665 = vmatprep.subr.mxu0 0.0
  %2666 = vmatpush1.msra.mxu0 0.0
  %2667 = vmatprep.subr.mxu0 0.0
  %2668 = vmatpush1.msra.mxu0 0.0
  %2669 = vmatprep.subr.mxu0 0.0
  %2670 = vmatpush1.msra.mxu0 0.0
  %2671 = vmatprep.subr.mxu0 0.0
  %2672 = vmatpush1.msra.mxu0 0.0
  %2673 = vmatprep.subr.mxu0 0.0
  %2674 = vmatpush1.msra.mxu0 0.0
  %2675 = vmatprep.subr.mxu0 0.0
  %2676 = vmatpush1.msra.mxu0 0.0
  %2677 = vmatprep.subr.mxu0 0.0
  %2678 = vmatpush1.msra.mxu0 0.0
  %2679 = vmatprep.subr.mxu0 0.0
  %2680 = vmatpush1.msra.mxu0 0.0
  %2681 = vmatprep.subr.mxu0 0.0
  %2682 = vmatpush1.msra.mxu0 0.0
  %2683 = vmatprep.subr.mxu0 0.0
  %2684 = vmatpush1.msra.mxu0 0.0
  %2685 = vmatprep.subr.mxu0 0.0
  %2686 = vmatpush1.msra.mxu0 0.0
  %2687 = vmatprep.subr.mxu0 0.0
  %2688 = vmatpush1.msra.mxu0 0.0
  %2689 = vmatprep.subr.mxu0 0.0
  %2690 = vmatpush1.msra.mxu0 0.0
  %2691 = vmatprep.subr.mxu0 0.0
  %2692 = vmatpush1.msra.mxu0 0.0
  %2693 = vmatprep.subr.mxu0 0.0
  %2694 = vmatpush1.msra.mxu0 0.0
  %2695 = vmatprep.subr.mxu0 0.0
  %2696 = vmatpush1.msra.mxu0 0.0
  %2697 = vmatprep.subr.mxu0 0.0
  %2698 = vmatpush1.msra.mxu0 0.0
  %2699 = vmatprep.subr.mxu0 0.0
  %2700 = vmatpush1.msra.mxu0 0.0
  %2701 = vmatprep.subr.mxu0 0.0
  %2702 = vmatpush1.msra.mxu0 0.0
  %2703 = vmatprep.subr.mxu0 0.0
  %2704 = vmatpush1.msra.mxu0 0.0
  %2705 = vmatprep.subr.mxu0 0.0
  %2706 = vmatpush1.msra.mxu0 0.0
  %2707 = vmatprep.subr.mxu0 0.0
  %2708 = vmatpush1.msra.mxu0 0.0
  %2709 = vmatprep.subr.mxu0 0.0
  %2710 = vmatpush1.msra.mxu0 0.0
  %2711 = vmatprep.subr.mxu0 0.0
  %2712 = vmatpush1.msra.mxu0 0.0
  %2713 = vmatprep.subr.mxu0 0.0
  %2714 = vmatpush1.msra.mxu0 0.0
  %2715 = vmatprep.subr.mxu0 0.0
  %2716 = vmatpush1.msra.mxu0 0.0
  %2717 = vmatprep.subr.mxu0 0.0
  %2718 = vmatpush1.msra.mxu0 0.0
  %2719 = vmatprep.subr.mxu0 0.0
  %2720 = vmatpush1.msra.mxu0 0.0
  %2721 = vmatprep.mubr.f32.mxu0 0.0
  %v2722 = vand.u32 %v2574, 4294901760
  %2723 = vmatmul.mubr.f32.gmra.mrb[0].mxu0 %v2722
  %v2724 = vpop.f32.mrb[0].mxu0
  %v2725 = vadd.f32 %v2649, %v2724
  %v2726 = vpop.f32.mrb[0].mxu0
  %2727 = vdwg.mxu0
  %2728 = vmatprep.subr.mxu0 0.0
  %v2729 = vand.u32 %v2572, 4294901760
  %v2730 = vsub.f32 %v2572, %v2729
  %2731 = vmatpush1.msra.mxu0 %v2730
  %2732 = vmatprep.subr.mxu0 0.0
  %2733 = vmatpush1.msra.mxu0 0.0
  %2734 = vmatprep.subr.mxu0 0.0
  %2735 = vmatpush1.msra.mxu0 0.0
  %2736 = vmatprep.subr.mxu0 0.0
  %2737 = vmatpush1.msra.mxu0 0.0
  %2738 = vmatprep.subr.mxu0 0.0
  %2739 = vmatpush1.msra.mxu0 0.0
  %2740 = vmatprep.subr.mxu0 0.0
  %2741 = vmatpush1.msra.mxu0 0.0
  %2742 = vmatprep.subr.mxu0 0.0
  %2743 = vmatpush1.msra.mxu0 0.0
  %2744 = vmatprep.subr.mxu0 0.0
  %2745 = vmatpush1.msra.mxu0 0.0
  %2746 = vmatprep.subr.mxu0 0.0
  %2747 = vmatpush1.msra.mxu0 0.0
  %2748 = vmatprep.subr.mxu0 0.0
  %2749 = vmatpush1.msra.mxu0 0.0
  %2750 = vmatprep.subr.mxu0 0.0
  %2751 = vmatpush1.msra.mxu0 0.0
  %2752 = vmatprep.subr.mxu0 0.0
  %2753 = vmatpush1.msra.mxu0 0.0
  %2754 = vmatprep.subr.mxu0 0.0
  %2755 = vmatpush1.msra.mxu0 0.0
  %2756 = vmatprep.subr.mxu0 0.0
  %2757 = vmatpush1.msra.mxu0 0.0
  %2758 = vmatprep.subr.mxu0 0.0
  %2759 = vmatpush1.msra.mxu0 0.0
  %2760 = vmatprep.subr.mxu0 0.0
  %2761 = vmatpush1.msra.mxu0 0.0
  %2762 = vmatprep.subr.mxu0 0.0
  %2763 = vmatpush1.msra.mxu0 0.0
  %2764 = vmatprep.subr.mxu0 0.0
  %2765 = vmatpush1.msra.mxu0 0.0
  %2766 = vmatprep.subr.mxu0 0.0
  %2767 = vmatpush1.msra.mxu0 0.0
  %2768 = vmatprep.subr.mxu0 0.0
  %2769 = vmatpush1.msra.mxu0 0.0
  %2770 = vmatprep.subr.mxu0 0.0
  %2771 = vmatpush1.msra.mxu0 0.0
  %2772 = vmatprep.subr.mxu0 0.0
  %2773 = vmatpush1.msra.mxu0 0.0
  %2774 = vmatprep.subr.mxu0 0.0
  %2775 = vmatpush1.msra.mxu0 0.0
  %2776 = vmatprep.subr.mxu0 0.0
  %2777 = vmatpush1.msra.mxu0 0.0
  %2778 = vmatprep.subr.mxu0 0.0
  %2779 = vmatpush1.msra.mxu0 0.0
  %2780 = vmatprep.subr.mxu0 0.0
  %2781 = vmatpush1.msra.mxu0 0.0
  %2782 = vmatprep.subr.mxu0 0.0
  %2783 = vmatpush1.msra.mxu0 0.0
  %2784 = vmatprep.subr.mxu0 0.0
  %2785 = vmatpush1.msra.mxu0 0.0
  %2786 = vmatprep.subr.mxu0 0.0
  %2787 = vmatpush1.msra.mxu0 0.0
  %2788 = vmatprep.subr.mxu0 0.0
  %2789 = vmatpush1.msra.mxu0 0.0
  %2790 = vmatprep.subr.mxu0 0.0
  %2791 = vmatpush1.msra.mxu0 0.0
  %2792 = vmatprep.subr.mxu0 0.0
  %2793 = vmatpush1.msra.mxu0 0.0
  %2794 = vmatprep.mubr.f32.mxu0 0.0
  %v2795 = vand.u32 %v2574, 4294901760
  %v2796 = vsub.f32 %v2574, %v2795
  %2797 = vmatmul.mubr.f32.gmra.mrb[0].mxu0 %v2796
  %v2798 = vpop.f32.mrb[0].mxu0
  %v2799 = vadd.f32 %v2725, %v2798
  %v2800 = vpop.f32.mrb[0].mxu0
  %2801 = vdwg.mxu0
  %2802 = vmatprep.subr.mxu0 0.0
  %v2803 = vand.u32 %v2572, 4294901760
  %2804 = vmatpush1.msra.mxu0 %v2803
  %2805 = vmatprep.subr.mxu0 0.0
  %2806 = vmatpush1.msra.mxu0 0.0
  %2807 = vmatprep.subr.mxu0 0.0
  %2808 = vmatpush1.msra.mxu0 0.0
  %2809 = vmatprep.subr.mxu0 0.0
  %2810 = vmatpush1.msra.mxu0 0.0
  %2811 = vmatprep.subr.mxu0 0.0
  %2812 = vmatpush1.msra.mxu0 0.0
  %2813 = vmatprep.subr.mxu0 0.0
  %2814 = vmatpush1.msra.mxu0 0.0
  %2815 = vmatprep.subr.mxu0 0.0
  %2816 = vmatpush1.msra.mxu0 0.0
  %2817 = vmatprep.subr.mxu0 0.0
  %2818 = vmatpush1.msra.mxu0 0.0
  %2819 = vmatprep.subr.mxu0 0.0
  %2820 = vmatpush1.msra.mxu0 0.0
  %2821 = vmatprep.subr.mxu0 0.0
  %2822 = vmatpush1.msra.mxu0 0.0
  %2823 = vmatprep.subr.mxu0 0.0
  %2824 = vmatpush1.msra.mxu0 0.0
  %2825 = vmatprep.subr.mxu0 0.0
  %2826 = vmatpush1.msra.mxu0 0.0
  %2827 = vmatprep.subr.mxu0 0.0
  %2828 = vmatpush1.msra.mxu0 0.0
  %2829 = vmatprep.subr.mxu0 0.0
  %2830 = vmatpush1.msra.mxu0 0.0
  %2831 = vmatprep.subr.mxu0 0.0
  %2832 = vmatpush1.msra.mxu0 0.0
  %2833 = vmatprep.subr.mxu0 0.0
  %2834 = vmatpush1.msra.mxu0 0.0
  %2835 = vmatprep.subr.mxu0 0.0
  %2836 = vmatpush1.msra.mxu0 0.0
  %2837 = vmatprep.subr.mxu0 0.0
  %2838 = vmatpush1.msra.mxu0 0.0
  %2839 = vmatprep.subr.mxu0 0.0
  %2840 = vmatpush1.msra.mxu0 0.0
  %2841 = vmatprep.subr.mxu0 0.0
  %2842 = vmatpush1.msra.mxu0 0.0
  %2843 = vmatprep.subr.mxu0 0.0
  %2844 = vmatpush1.msra.mxu0 0.0
  %2845 = vmatprep.subr.mxu0 0.0
  %2846 = vmatpush1.msra.mxu0 0.0
  %2847 = vmatprep.subr.mxu0 0.0
  %2848 = vmatpush1.msra.mxu0 0.0
  %2849 = vmatprep.subr.mxu0 0.0
  %2850 = vmatpush1.msra.mxu0 0.0
  %2851 = vmatprep.subr.mxu0 0.0
  %2852 = vmatpush1.msra.mxu0 0.0
  %2853 = vmatprep.subr.mxu0 0.0
  %2854 = vmatpush1.msra.mxu0 0.0
  %2855 = vmatprep.subr.mxu0 0.0
  %2856 = vmatpush1.msra.mxu0 0.0
  %2857 = vmatprep.subr.mxu0 0.0
  %2858 = vmatpush1.msra.mxu0 0.0
  %2859 = vmatprep.subr.mxu0 0.0
  %2860 = vmatpush1.msra.mxu0 0.0
  %2861 = vmatprep.subr.mxu0 0.0
  %2862 = vmatpush1.msra.mxu0 0.0
  %2863 = vmatprep.subr.mxu0 0.0
  %2864 = vmatpush1.msra.mxu0 0.0
  %2865 = vmatprep.subr.mxu0 0.0
  %2866 = vmatpush1.msra.mxu0 0.0
  %2867 = vmatprep.mubr.f32.mxu0 0.0
  %v2868 = vand.u32 %v2574, 4294901760
  %v2869 = vsub.f32 %v2574, %v2868
  %v2870 = vand.u32 %v2869, 4294901760
  %2871 = vmatmul.mubr.f32.gmra.mrb[0].mxu0 %v2870
  %v2872 = vpop.f32.mrb[0].mxu0
  %v2873 = vadd.f32 %v2799, %v2872
  %v2874 = vpop.f32.mrb[0].mxu0
  %2875 = vdwg.mxu0
  %2876 = vmatprep.subr.mxu0 0.0
  %v2877 = vand.u32 %v2572, 4294901760
  %v2878 = vsub.f32 %v2572, %v2877
  %v2879 = vand.u32 %v2878, 4294901760
  %2880 = vmatpush1.msra.mxu0 %v2879
  %2881 = vmatprep.subr.mxu0 0.0
  %2882 = vmatpush1.msra.mxu0 0.0
  %2883 = vmatprep.subr.mxu0 0.0
  %2884 = vmatpush1.msra.mxu0 0.0
  %2885 = vmatprep.subr.mxu0 0.0
  %2886 = vmatpush1.msra.mxu0 0.0
  %2887 = vmatprep.subr.mxu0 0.0
  %2888 = vmatpush1.msra.mxu0 0.0
  %2889 = vmatprep.subr.mxu0 0.0
  %2890 = vmatpush1.msra.mxu0 0.0
  %2891 = vmatprep.subr.mxu0 0.0
  %2892 = vmatpush1.msra.mxu0 0.0
  %2893 = vmatprep.subr.mxu0 0.0
  %2894 = vmatpush1.msra.mxu0 0.0
  %2895 = vmatprep.subr.mxu0 0.0
  %2896 = vmatpush1.msra.mxu0 0.0
  %2897 = vmatprep.subr.mxu0 0.0
  %2898 = vmatpush1.msra.mxu0 0.0
  %2899 = vmatprep.subr.mxu0 0.0
  %2900 = vmatpush1.msra.mxu0 0.0
  %2901 = vmatprep.subr.mxu0 0.0
  %2902 = vmatpush1.msra.mxu0 0.0
  %2903 = vmatprep.subr.mxu0 0.0
  %2904 = vmatpush1.msra.mxu0 0.0
  %2905 = vmatprep.subr.mxu0 0.0
  %2906 = vmatpush1.msra.mxu0 0.0
  %2907 = vmatprep.subr.mxu0 0.0
  %2908 = vmatpush1.msra.mxu0 0.0
  %2909 = vmatprep.subr.mxu0 0.0
  %2910 = vmatpush1.msra.mxu0 0.0
  %2911 = vmatprep.subr.mxu0 0.0
  %2912 = vmatpush1.msra.mxu0 0.0
  %2913 = vmatprep.subr.mxu0 0.0
  %2914 = vmatpush1.msra.mxu0 0.0
  %2915 = vmatprep.subr.mxu0 0.0
  %2916 = vmatpush1.msra.mxu0 0.0
  %2917 = vmatprep.subr.mxu0 0.0
  %2918 = vmatpush1.msra.mxu0 0.0
  %2919 = vmatprep.subr.mxu0 0.0
  %2920 = vmatpush1.msra.mxu0 0.0
  %2921 = vmatprep.subr.mxu0 0.0
  %2922 = vmatpush1.msra.mxu0 0.0
  %2923 = vmatprep.subr.mxu0 0.0
  %2924 = vmatpush1.msra.mxu0 0.0
  %2925 = vmatprep.subr.mxu0 0.0
  %2926 = vmatpush1.msra.mxu0 0.0
  %2927 = vmatprep.subr.mxu0 0.0
  %2928 = vmatpush1.msra.mxu0 0.0
  %2929 = vmatprep.subr.mxu0 0.0
  %2930 = vmatpush1.msra.mxu0 0.0
  %2931 = vmatprep.subr.mxu0 0.0
  %2932 = vmatpush1.msra.mxu0 0.0
  %2933 = vmatprep.subr.mxu0 0.0
  %2934 = vmatpush1.msra.mxu0 0.0
  %2935 = vmatprep.subr.mxu0 0.0
  %2936 = vmatpush1.msra.mxu0 0.0
  %2937 = vmatprep.subr.mxu0 0.0
  %2938 = vmatpush1.msra.mxu0 0.0
  %2939 = vmatprep.subr.mxu0 0.0
  %2940 = vmatpush1.msra.mxu0 0.0
  %2941 = vmatprep.subr.mxu0 0.0
  %2942 = vmatpush1.msra.mxu0 0.0
  %2943 = vmatprep.mubr.f32.mxu0 0.0
  %v2944 = vand.u32 %v2574, 4294901760
  %2945 = vmatmul.mubr.f32.gmra.mrb[0].mxu0 %v2944
  %v2946 = vpop.f32.mrb[0].mxu0
  %v2947 = vadd.f32 %v2873, %v2946
  %v2948 = vpop.f32.mrb[0].mxu0
  %2949 = vdwg.mxu0
  %2950 = vmatprep.subr.mxu0 0.0
  %v2951 = vand.u32 %v2572, 4294901760
  %2952 = vmatpush1.msra.mxu0 %v2951
  %2953 = vmatprep.subr.mxu0 0.0
  %2954 = vmatpush1.msra.mxu0 0.0
  %2955 = vmatprep.subr.mxu0 0.0
  %2956 = vmatpush1.msra.mxu0 0.0
  %2957 = vmatprep.subr.mxu0 0.0
  %2958 = vmatpush1.msra.mxu0 0.0
  %2959 = vmatprep.subr.mxu0 0.0
  %2960 = vmatpush1.msra.mxu0 0.0
  %2961 = vmatprep.subr.mxu0 0.0
  %2962 = vmatpush1.msra.mxu0 0.0
  %2963 = vmatprep.subr.mxu0 0.0
  %2964 = vmatpush1.msra.mxu0 0.0
  %2965 = vmatprep.subr.mxu0 0.0
  %2966 = vmatpush1.msra.mxu0 0.0
  %2967 = vmatprep.subr.mxu0 0.0
  %2968 = vmatpush1.msra.mxu0 0.0
  %2969 = vmatprep.subr.mxu0 0.0
  %2970 = vmatpush1.msra.mxu0 0.0
  %2971 = vmatprep.subr.mxu0 0.0
  %2972 = vmatpush1.msra.mxu0 0.0
  %2973 = vmatprep.subr.mxu0 0.0
  %2974 = vmatpush1.msra.mxu0 0.0
  %2975 = vmatprep.subr.mxu0 0.0
  %2976 = vmatpush1.msra.mxu0 0.0
  %2977 = vmatprep.subr.mxu0 0.0
  %2978 = vmatpush1.msra.mxu0 0.0
  %2979 = vmatprep.subr.mxu0 0.0
  %2980 = vmatpush1.msra.mxu0 0.0
  %2981 = vmatprep.subr.mxu0 0.0
  %2982 = vmatpush1.msra.mxu0 0.0
  %2983 = vmatprep.subr.mxu0 0.0
  %2984 = vmatpush1.msra.mxu0 0.0
  %2985 = vmatprep.subr.mxu0 0.0
  %2986 = vmatpush1.msra.mxu0 0.0
  %2987 = vmatprep.subr.mxu0 0.0
  %2988 = vmatpush1.msra.mxu0 0.0
  %2989 = vmatprep.subr.mxu0 0.0
  %2990 = vmatpush1.msra.mxu0 0.0
  %2991 = vmatprep.subr.mxu0 0.0
  %2992 = vmatpush1.msra.mxu0 0.0
  %2993 = vmatprep.subr.mxu0 0.0
  %2994 = vmatpush1.msra.mxu0 0.0
  %2995 = vmatprep.subr.mxu0 0.0
  %2996 = vmatpush1.msra.mxu0 0.0
  %2997 = vmatprep.subr.mxu0 0.0
  %2998 = vmatpush1.msra.mxu0 0.0
  %2999 = vmatprep.subr.mxu0 0.0
  %3000 = vmatpush1.msra.mxu0 0.0
  %3001 = vmatprep.subr.mxu0 0.0
  %3002 = vmatpush1.msra.mxu0 0.0
  %3003 = vmatprep.subr.mxu0 0.0
  %3004 = vmatpush1.msra.mxu0 0.0
  %3005 = vmatprep.subr.mxu0 0.0
  %3006 = vmatpush1.msra.mxu0 0.0
  %3007 = vmatprep.subr.mxu0 0.0
  %3008 = vmatpush1.msra.mxu0 0.0
  %3009 = vmatprep.subr.mxu0 0.0
  %3010 = vmatpush1.msra.mxu0 0.0
  %3011 = vmatprep.subr.mxu0 0.0
  %3012 = vmatpush1.msra.mxu0 0.0
  %3013 = vmatprep.subr.mxu0 0.0
  %3014 = vmatpush1.msra.mxu0 0.0
  %3015 = vmatprep.mubr.f32.mxu0 0.0
  %v3016 = vand.u32 %v2574, 4294901760
  %3017 = vmatmul.mubr.f32.gmra.mrb[0].mxu0 %v3016
  %v3018 = vpop.f32.mrb[0].mxu0
  %v3019 = vadd.f32 %v2947, %v3018
  %v3020 = vpop.f32.mrb[0].mxu0
  %3021 = vdwg.mxu0
  %v3022 = vlaneseq
  %v3023 = vshrl.u32 %v3022, 7
  %v3024 = vsub.s32 0, %v3023
  %v3025 = vrot.slane %v3019, %v3024
  %v3026 = vmul.f32 %v1863, %v3025
  %v3027 = vlaneseq
  %v3028 = vshrl.u32 %v3027, 7
  %v3029 = vsub.s32 1, %v3028
  %v3030 = vrot.slane %v3019, %v3029
  %v3031 = vadd.f32 %v3026, %v3030
  %v3032 = vmax.f32 %v3031, 0.0
  %3033 = vst [vmem:[%s11] sm:$0xff] %v3032
  // Predicated region
  $region46: #{down_forward.1} parent=0 // pred_check
    _
  $region47: #{down_forward.1} parent=0 // pred_check_branch
    %3035 = sbr.rel (0) target = $region49
  $region48: #{down_forward.1} parent=0 // pred_region
    _
  $region49: #{down_forward.1} parent=0 // pred_fallthru
    _
  // Predicated region
  $region50: #{down_forward.1} parent=0 // pred_check
    _
  $region51: #{down_forward.1} parent=0 // pred_check_branch
    %3037 = sbr.rel (0) target = $region53
  $region52: #{down_forward.1} parent=0 // pred_region
    _
  $region53: #{down_forward.1} parent=0 // pred_fallthru
    _

</llo_original>
